<compile_context>
chip_gen: v5e
topology: v5e:2x2
jax: 0.10.0
libtpu: 0.0.40
codegen_flags: <defaults>
</compile_context>

<pallas_src>
import jax
import jax.numpy as jnp
from jax.experimental import pallas as pl
from jax.experimental.pallas import tpu as pltpu


_CIN_PAD = 8                      # pad conv1's 3 input channels to an aligned K
_COMPUTE_DTYPE = jnp.bfloat16     # MXU operand dtype (f32 accumulation kept)


# ----------------------------------------------------------------------------
# In-kernel building blocks (operate on VMEM-resident values / refs)
# ----------------------------------------------------------------------------

def _conv3x3_relu(x, w, b):
    """3x3 'same' conv + ReLU on a single image, fully in VMEM.

    x: (H, W, Cin)  bf16 activation.
    w: (9*Cin, Cout) bf16 im2col weight, row k = (dy*3+dx)*Cin + ci.
    b: (1, Cout)    f32 bias.
    Returns (H, W, Cout) bf16.
    """
    H, W, Cin = x.shape
    Cout = w.shape[-1]

    # Zero-pad the spatial dims by 1 (leading-dim / sublane-dim concats).
    zrow = jnp.zeros((1, W, Cin), x.dtype)
    xp = jnp.concatenate([zrow, x, zrow], axis=0)            # (H+2, W, Cin)
    zcol = jnp.zeros((H + 2, 1, Cin), x.dtype)
    xp = jnp.concatenate([zcol, xp, zcol], axis=1)           # (H+2, W+2, Cin)

    # im2col: concatenate the 9 shifted windows along the channel (lane) dim so
    # the whole conv is ONE MXU matmul with K = 9*Cin.
    cols = []
    for dy in range(3):
        for dx in range(3):
            cols.append(xp[dy:dy + H, dx:dx + W, :].reshape(H * W, Cin))
    patches = jnp.concatenate(cols, axis=-1)                 # (H*W, 9*Cin)

    acc = jnp.dot(patches, w, preferred_element_type=jnp.float32)
    y = jnp.maximum(acc + b, 0.0)                            # f32 bias + ReLU
    return y.astype(x.dtype).reshape(H, W, Cout)


def _maxpool2x2(y):
    """MaxPool2d(2, 2) on a single image: leading-dim reshapes + VPU max only."""
    H, W, C = y.shape
    H2, W2 = H // 2, W // 2
    y4 = y.reshape(H2, 2, W, C)                  # last dim unchanged -> free
    yh = jnp.maximum(y4[:, 0], y4[:, 1])         # (H2, W, C)
    y5 = yh.reshape(H2, W2, 2, C)                # last dim unchanged -> free
    return jnp.maximum(y5[:, :, 0, :], y5[:, :, 1, :])       # (H2, W2, C)


def _fused_forward_kernel(x_ref, w1_ref, w234_ref, cb_ref,
                          fc1w_ref, fc1b_ref, fc2w_ref, fc2b_ref,
                          fc3w_ref, fc3b_ref, out_ref):
    x = x_ref[0]                                 # (H, W, _CIN_PAD) bf16

    # --- conv block 1 -------------------------------------------------------
    y = _conv3x3_relu(x, w1_ref[...], cb_ref[0])
    y = _conv3x3_relu(y, w234_ref[0], cb_ref[1])
    y = _maxpool2x2(y)                           # (H/2, W/2, 32)

    # --- conv block 2 -------------------------------------------------------
    y = _conv3x3_relu(y, w234_ref[1], cb_ref[2])
    y = _conv3x3_relu(y, w234_ref[2], cb_ref[3])
    y = _maxpool2x2(y)                           # (H/4, W/4, 32)

    # --- fully connected head ------------------------------------------------
    # Flatten to a single lane-dense (1, H4*W4*C) row with a minor-dim concat;
    # PyTorch's NCHW flatten order is folded into the prep-time fc1 weight
    # layout, so fc1 is ONE matmul with K = H4*W4*C.
    H4, W4, C = y.shape
    y2 = y.reshape(H4 * W4, C)                   # leading-dim collapse (free)
    feat = jnp.concatenate([y2[p:p + 1, :] for p in range(H4 * W4)], axis=-1)

    a1 = jnp.maximum(
        jnp.dot(feat, fc1w_ref[...], preferred_element_type=jnp.float32)
        + fc1b_ref[...], 0.0)
    # TODO(synk): nn.Dropout(0.5) is the identity at inference (eval mode).
    a2 = jnp.maximum(
        jnp.dot(a1.astype(_COMPUTE_DTYPE), fc2w_ref[...],
                preferred_element_type=jnp.float32) + fc2b_ref[...], 0.0)
    logits = (jnp.dot(a2.astype(_COMPUTE_DTYPE), fc3w_ref[...],
                      preferred_element_type=jnp.float32) + fc3b_ref[...])
    out_ref[0] = logits.astype(out_ref.dtype)    # (1, num_classes)


# ----------------------------------------------------------------------------
# One-time parameter preparation (outside the jitted forward)
# ----------------------------------------------------------------------------

def _conv_w_im2col(w_oihw, cin_pad=None):
    """PyTorch (Cout, Cin, 3, 3) -> (9*Cin[padded], Cout), row k=(dy*3+dx)*Cin+ci."""
    cout, cin = int(w_oihw.shape[0]), int(w_oihw.shape[1])
    w9 = jnp.transpose(w_oihw, (2, 3, 1, 0)).reshape(9, cin, cout)
    if cin_pad is not None and cin_pad > cin:
        w9 = jnp.pad(w9, ((0, 0), (0, cin_pad - cin), (0, 0)))
        cin = cin_pad
    return w9.reshape(9 * cin, cout).astype(_COMPUTE_DTYPE)


def prepare_params(params, in_hw):
    """Convert PyTorch-layout params to the fused-kernel layout (run once)."""
    H, W = in_hw
    H4, W4 = H // 4, W // 4
    c = int(params["conv4_w"].shape[0])          # channel count after conv4
    fc1_out = int(params["fc1_w"].shape[0])

    # PyTorch flatten feature index f = c*(H4*W4) + h*W4 + w  ->  feat column
    # p*C + c with p = h*W4 + w (the order produced by the in-kernel concat).
    fc1_w = jnp.reshape(params["fc1_w"], (fc1_out, c, H4, W4))
    fc1_w = jnp.transpose(fc1_w, (2, 3, 1, 0)).reshape(H4 * W4 * c, fc1_out)

    conv_b = jnp.stack([params["conv1_b"], params["conv2_b"],
                        params["conv3_b"], params["conv4_b"]], axis=0)
    w234 = jnp.stack([_conv_w_im2col(params["conv2_w"]),
                      _conv_w_im2col(params["conv3_w"]),
                      _conv_w_im2col(params["conv4_w"])], axis=0)

    return {
        "w1": _conv_w_im2col(params["conv1_w"], _CIN_PAD),      # (72, 32) bf16
        "w234": w234,                                           # (3, 288, 32) bf16
        "conv_b": conv_b.reshape(4, 1, c).astype(jnp.float32),  # (4, 1, 32) f32
        "fc1_w": fc1_w.astype(_COMPUTE_DTYPE),                  # (H4*W4*C, 128)
        "fc1_b": params["fc1_b"].reshape(1, -1).astype(jnp.float32),
        "fc2_w": jnp.transpose(params["fc2_w"]).astype(_COMPUTE_DTYPE),
        "fc2_b": params["fc2_b"].reshape(1, -1).astype(jnp.float32),
        "fc3_w": jnp.transpose(params["fc3_w"]).astype(_COMPUTE_DTYPE),
        "fc3_b": params["fc3_b"].reshape(1, -1).astype(jnp.float32),
    }


# ----------------------------------------------------------------------------
# Forward pass (one pallas_call, grid over the batch)
# ----------------------------------------------------------------------------

_ARG_ORDER = ("w1", "w234", "conv_b", "fc1_w", "fc1_b",
              "fc2_w", "fc2_b", "fc3_w", "fc3_b")


def _resident_spec(arr):
    nd = arr.ndim
    return pl.BlockSpec(tuple(arr.shape), lambda n, _nd=nd: (0,) * _nd)


def alzheimer_cnn_forward(prepped, x_nchw):
    """Forward pass matching AlzheimerCNN.forward (eval mode)."""
    N, cin, H, W = x_nchw.shape
    num_classes = prepped["fc3_b"].shape[-1]

    # NCHW -> NHWC, pad input channels to the aligned im2col K used by conv1,
    # cast to the bf16 MXU operand dtype.
    # TODO(synk): at real MRI sizes fold this transpose/pad into the kernel's
    # first im2col gather to avoid an extra HBM round trip of the image.
    x = jnp.transpose(x_nchw, (0, 2, 3, 1)).astype(_COMPUTE_DTYPE)
    x = jnp.pad(x, ((0, 0), (0, 0), (0, 0), (0, _CIN_PAD - cin)))

    args = [x] + [prepped[k] for k in _ARG_ORDER]
    in_specs = [pl.BlockSpec((1, H, W, _CIN_PAD), lambda n: (n, 0, 0, 0))]
    in_specs += [_resident_spec(a) for a in args[1:]]

    out = pl.pallas_call(
        _fused_forward_kernel,
        out_shape=jax.ShapeDtypeStruct((N, 1, num_classes), jnp.float32),
        grid=(N,),
        in_specs=in_specs,
        out_specs=pl.BlockSpec((1, 1, num_classes), lambda n: (n, 0, 0)),
        compiler_params=pltpu.CompilerParams(
            dimension_semantics=("parallel",),
            vmem_limit_bytes=32 * 1024 * 1024),
    )(*args)
    return out[:, 0, :]


# ----------------------------------------------------------------------------
# Synthetic parameters (PyTorch layout conventions) and driver
# ----------------------------------------------------------------------------

def init_params(key, in_hw, num_classes=3):
    H, W = in_hw
    flattened_size = 32 * (H // 4) * (W // 4)
    shapes = {
        "conv1_w": (32, 3, 3, 3),   "conv1_b": (32,),
        "conv2_w": (32, 32, 3, 3),  "conv2_b": (32,),
        "conv3_w": (32, 32, 3, 3),  "conv3_b": (32,),
        "conv4_w": (32, 32, 3, 3),  "conv4_b": (32,),
        "fc1_w": (128, flattened_size), "fc1_b": (128,),
        "fc2_w": (64, 128),             "fc2_b": (64,),
        "fc3_w": (num_classes, 64),     "fc3_b": (num_classes,),
    }
    params = {}
    for name, shape in shapes.items():
        key, sub = jax.random.split(key)
        scale = 0.05 if name.endswith("_w") else 0.01
        params[name] = scale * jax.random.normal(sub, shape, dtype=jnp.float32)
    return params, flattened_size


if __name__ == "__main__":
    batch, H, W, num_classes = 2, 16, 16, 3

    key = jax.random.PRNGKey(0)
    k_x, k_p = jax.random.split(key)
    x = jax.random.normal(k_x, (batch, 3, H, W), dtype=jnp.float32)   # NCHW

    params, _ = init_params(k_p, (H, W), num_classes=num_classes)
    prepped = prepare_params(params, (H, W))                          # one-time prep

    fwd = jax.jit(alzheimer_cnn_forward)
    logits = fwd(prepped, x)
    jax.block_until_ready(logits)

    assert logits.shape == (batch, num_classes), logits.shape
    assert logits.dtype == jnp.float32
    print("KERNEL_OK")
</pallas_src>

<mosaic_0001>
module attributes {stable_mosaic.version = 11 : i64} {
  func.func @_fused_forward_kernel(%arg0: i32, %arg1: memref<1x16x16x8xbf16, #tpu.memory_space<vmem>>, %arg2: memref<72x32xbf16, #tpu.memory_space<vmem>>, %arg3: memref<3x288x32xbf16, #tpu.memory_space<vmem>>, %arg4: memref<4x1x32xf32, #tpu.memory_space<vmem>>, %arg5: memref<512x128xbf16, #tpu.memory_space<vmem>>, %arg6: memref<1x128xf32, #tpu.memory_space<vmem>>, %arg7: memref<128x64xbf16, #tpu.memory_space<vmem>>, %arg8: memref<1x64xf32, #tpu.memory_space<vmem>>, %arg9: memref<64x3xbf16, #tpu.memory_space<vmem>>, %arg10: memref<1x3xf32, #tpu.memory_space<vmem>>, %arg11: memref<1x1x3xf32, #tpu.memory_space<vmem>>) attributes {dimension_semantics = [#tpu.dimension_semantics<parallel>], iteration_bounds = array<i64: 2>, scalar_prefetch = 0 : i64, scratch_operands = 0 : i64, tpu.core_type = #tpu.core_type<tc>, window_params = [{transform_indices = @transform_0, window_bounds = array<i64: 1, 16, 16, 8>}, {pipeline_mode = #tpu.pipeline_mode<synchronous>, transform_indices = @transform_1, window_bounds = array<i64: 72, 32>}, {pipeline_mode = #tpu.pipeline_mode<synchronous>, transform_indices = @transform_2, window_bounds = array<i64: 3, 288, 32>}, {pipeline_mode = #tpu.pipeline_mode<synchronous>, transform_indices = @transform_3, window_bounds = array<i64: 4, 1, 32>}, {pipeline_mode = #tpu.pipeline_mode<synchronous>, transform_indices = @transform_4, window_bounds = array<i64: 512, 128>}, {pipeline_mode = #tpu.pipeline_mode<synchronous>, transform_indices = @transform_5, window_bounds = array<i64: 1, 128>}, {pipeline_mode = #tpu.pipeline_mode<synchronous>, transform_indices = @transform_6, window_bounds = array<i64: 128, 64>}, {pipeline_mode = #tpu.pipeline_mode<synchronous>, transform_indices = @transform_7, window_bounds = array<i64: 1, 64>}, {pipeline_mode = #tpu.pipeline_mode<synchronous>, transform_indices = @transform_8, window_bounds = array<i64: 64, 3>}, {pipeline_mode = #tpu.pipeline_mode<synchronous>, transform_indices = @transform_9, window_bounds = array<i64: 1, 3>}, {transform_indices = @transform_10, window_bounds = array<i64: 1, 1, 3>}]} {
    %c0 = arith.constant 0 : index
    %c0_0 = arith.constant 0 : index
    %c0_1 = arith.constant 0 : index
    %c0_2 = arith.constant 0 : index
    %0 = vector.load %arg1[%c0, %c0_0, %c0_1, %c0_2] : memref<1x16x16x8xbf16, #tpu.memory_space<vmem>>, vector<1x16x16x8xbf16>
    %1 = vector.shape_cast %0 : vector<1x16x16x8xbf16> to vector<16x16x8xbf16>
    %c0_3 = arith.constant 0 : index
    %c0_4 = arith.constant 0 : index
    %2 = vector.load %arg2[%c0_3, %c0_4] : memref<72x32xbf16, #tpu.memory_space<vmem>>, vector<72x32xbf16>
    %c0_5 = arith.constant 0 : index
    %c0_6 = arith.constant 0 : index
    %c0_7 = arith.constant 0 : index
    %3 = vector.load %arg4[%c0_5, %c0_6, %c0_7] : memref<4x1x32xf32, #tpu.memory_space<vmem>>, vector<1x1x32xf32>
    %4 = vector.shape_cast %3 : vector<1x1x32xf32> to vector<1x32xf32>
    %cst = arith.constant 0.000000e+00 : bf16
    %5 = vector.broadcast %cst : bf16 to vector<1x16x8xbf16>
    %6 = tpu.concatenate %5, %1, %5 in 0 : vector<1x16x8xbf16>, vector<16x16x8xbf16>, vector<1x16x8xbf16> -> vector<18x16x8xbf16>
    %cst_8 = arith.constant 0.000000e+00 : bf16
    %7 = vector.broadcast %cst_8 : bf16 to vector<18x1x8xbf16>
    %8 = tpu.concatenate %7, %6, %7 in 1 : vector<18x1x8xbf16>, vector<18x16x8xbf16>, vector<18x1x8xbf16> -> vector<18x18x8xbf16>
    %9 = vector.extract_strided_slice %8 {offsets = [0, 0, 0], sizes = [16, 16, 8], strides = [1, 1, 1]} : vector<18x18x8xbf16> to vector<16x16x8xbf16>
    %10 = vector.shape_cast %9 : vector<16x16x8xbf16> to vector<256x8xbf16>
    %11 = vector.extract_strided_slice %8 {offsets = [0, 1, 0], sizes = [16, 16, 8], strides = [1, 1, 1]} : vector<18x18x8xbf16> to vector<16x16x8xbf16>
    %12 = vector.shape_cast %11 : vector<16x16x8xbf16> to vector<256x8xbf16>
    %13 = vector.extract_strided_slice %8 {offsets = [0, 2, 0], sizes = [16, 16, 8], strides = [1, 1, 1]} : vector<18x18x8xbf16> to vector<16x16x8xbf16>
    %14 = vector.shape_cast %13 : vector<16x16x8xbf16> to vector<256x8xbf16>
    %15 = vector.extract_strided_slice %8 {offsets = [1, 0, 0], sizes = [16, 16, 8], strides = [1, 1, 1]} : vector<18x18x8xbf16> to vector<16x16x8xbf16>
    %16 = vector.shape_cast %15 : vector<16x16x8xbf16> to vector<256x8xbf16>
    %17 = vector.extract_strided_slice %8 {offsets = [1, 1, 0], sizes = [16, 16, 8], strides = [1, 1, 1]} : vector<18x18x8xbf16> to vector<16x16x8xbf16>
    %18 = vector.shape_cast %17 : vector<16x16x8xbf16> to vector<256x8xbf16>
    %19 = vector.extract_strided_slice %8 {offsets = [1, 2, 0], sizes = [16, 16, 8], strides = [1, 1, 1]} : vector<18x18x8xbf16> to vector<16x16x8xbf16>
    %20 = vector.shape_cast %19 : vector<16x16x8xbf16> to vector<256x8xbf16>
    %21 = vector.extract_strided_slice %8 {offsets = [2, 0, 0], sizes = [16, 16, 8], strides = [1, 1, 1]} : vector<18x18x8xbf16> to vector<16x16x8xbf16>
    %22 = vector.shape_cast %21 : vector<16x16x8xbf16> to vector<256x8xbf16>
    %23 = vector.extract_strided_slice %8 {offsets = [2, 1, 0], sizes = [16, 16, 8], strides = [1, 1, 1]} : vector<18x18x8xbf16> to vector<16x16x8xbf16>
    %24 = vector.shape_cast %23 : vector<16x16x8xbf16> to vector<256x8xbf16>
    %25 = vector.extract_strided_slice %8 {offsets = [2, 2, 0], sizes = [16, 16, 8], strides = [1, 1, 1]} : vector<18x18x8xbf16> to vector<16x16x8xbf16>
    %26 = vector.shape_cast %25 : vector<16x16x8xbf16> to vector<256x8xbf16>
    %27 = tpu.concatenate %10, %12, %14, %16, %18, %20, %22, %24, %26 in 1 : vector<256x8xbf16>, vector<256x8xbf16>, vector<256x8xbf16>, vector<256x8xbf16>, vector<256x8xbf16>, vector<256x8xbf16>, vector<256x8xbf16>, vector<256x8xbf16>, vector<256x8xbf16> -> vector<256x72xbf16>
    %cst_9 = arith.constant dense<0.000000e+00> : vector<256x32xf32>
    %28 = tpu.matmul %27, %2, %cst_9 {dimension_numbers = #tpu.dot_dimension_numbers<[1], [0], [0], [1], [0, 0, 1, 1], [], []>} : vector<256x72xbf16>, vector<72x32xbf16>, vector<256x32xf32> -> vector<256x32xf32>
    %29 = vector.broadcast %4 : vector<1x32xf32> to vector<256x32xf32>
    %30 = arith.addf %28, %29 : vector<256x32xf32>
    %cst_10 = arith.constant 0.000000e+00 : f32
    %31 = vector.broadcast %cst_10 : f32 to vector<256x32xf32>
    %32 = arith.maximumf %30, %31 : vector<256x32xf32>
    %33 = arith.truncf %32 : vector<256x32xf32> to vector<256x32xbf16>
    %34 = vector.shape_cast %33 : vector<256x32xbf16> to vector<16x16x32xbf16>
    %c0_11 = arith.constant 0 : index
    %c0_12 = arith.constant 0 : index
    %c0_13 = arith.constant 0 : index
    %35 = vector.load %arg3[%c0_11, %c0_12, %c0_13] : memref<3x288x32xbf16, #tpu.memory_space<vmem>>, vector<1x288x32xbf16>
    %36 = vector.shape_cast %35 : vector<1x288x32xbf16> to vector<288x32xbf16>
    %c1 = arith.constant 1 : index
    %c0_14 = arith.constant 0 : index
    %c0_15 = arith.constant 0 : index
    %37 = vector.load %arg4[%c1, %c0_14, %c0_15] : memref<4x1x32xf32, #tpu.memory_space<vmem>>, vector<1x1x32xf32>
    %38 = vector.shape_cast %37 : vector<1x1x32xf32> to vector<1x32xf32>
    %cst_16 = arith.constant 0.000000e+00 : bf16
    %39 = vector.broadcast %cst_16 : bf16 to vector<1x16x32xbf16>
    %40 = tpu.concatenate %39, %34, %39 in 0 : vector<1x16x32xbf16>, vector<16x16x32xbf16>, vector<1x16x32xbf16> -> vector<18x16x32xbf16>
    %cst_17 = arith.constant 0.000000e+00 : bf16
    %41 = vector.broadcast %cst_17 : bf16 to vector<18x1x32xbf16>
    %42 = tpu.concatenate %41, %40, %41 in 1 : vector<18x1x32xbf16>, vector<18x16x32xbf16>, vector<18x1x32xbf16> -> vector<18x18x32xbf16>
    %43 = vector.extract_strided_slice %42 {offsets = [0, 0, 0], sizes = [16, 16, 32], strides = [1, 1, 1]} : vector<18x18x32xbf16> to vector<16x16x32xbf16>
    %44 = vector.shape_cast %43 : vector<16x16x32xbf16> to vector<256x32xbf16>
    %45 = vector.extract_strided_slice %42 {offsets = [0, 1, 0], sizes = [16, 16, 32], strides = [1, 1, 1]} : vector<18x18x32xbf16> to vector<16x16x32xbf16>
    %46 = vector.shape_cast %45 : vector<16x16x32xbf16> to vector<256x32xbf16>
    %47 = vector.extract_strided_slice %42 {offsets = [0, 2, 0], sizes = [16, 16, 32], strides = [1, 1, 1]} : vector<18x18x32xbf16> to vector<16x16x32xbf16>
    %48 = vector.shape_cast %47 : vector<16x16x32xbf16> to vector<256x32xbf16>
    %49 = vector.extract_strided_slice %42 {offsets = [1, 0, 0], sizes = [16, 16, 32], strides = [1, 1, 1]} : vector<18x18x32xbf16> to vector<16x16x32xbf16>
    %50 = vector.shape_cast %49 : vector<16x16x32xbf16> to vector<256x32xbf16>
    %51 = vector.extract_strided_slice %42 {offsets = [1, 1, 0], sizes = [16, 16, 32], strides = [1, 1, 1]} : vector<18x18x32xbf16> to vector<16x16x32xbf16>
    %52 = vector.shape_cast %51 : vector<16x16x32xbf16> to vector<256x32xbf16>
    %53 = vector.extract_strided_slice %42 {offsets = [1, 2, 0], sizes = [16, 16, 32], strides = [1, 1, 1]} : vector<18x18x32xbf16> to vector<16x16x32xbf16>
    %54 = vector.shape_cast %53 : vector<16x16x32xbf16> to vector<256x32xbf16>
    %55 = vector.extract_strided_slice %42 {offsets = [2, 0, 0], sizes = [16, 16, 32], strides = [1, 1, 1]} : vector<18x18x32xbf16> to vector<16x16x32xbf16>
    %56 = vector.shape_cast %55 : vector<16x16x32xbf16> to vector<256x32xbf16>
    %57 = vector.extract_strided_slice %42 {offsets = [2, 1, 0], sizes = [16, 16, 32], strides = [1, 1, 1]} : vector<18x18x32xbf16> to vector<16x16x32xbf16>
    %58 = vector.shape_cast %57 : vector<16x16x32xbf16> to vector<256x32xbf16>
    %59 = vector.extract_strided_slice %42 {offsets = [2, 2, 0], sizes = [16, 16, 32], strides = [1, 1, 1]} : vector<18x18x32xbf16> to vector<16x16x32xbf16>
    %60 = vector.shape_cast %59 : vector<16x16x32xbf16> to vector<256x32xbf16>
    %61 = tpu.concatenate %44, %46, %48, %50, %52, %54, %56, %58, %60 in 1 : vector<256x32xbf16>, vector<256x32xbf16>, vector<256x32xbf16>, vector<256x32xbf16>, vector<256x32xbf16>, vector<256x32xbf16>, vector<256x32xbf16>, vector<256x32xbf16>, vector<256x32xbf16> -> vector<256x288xbf16>
    %cst_18 = arith.constant dense<0.000000e+00> : vector<256x32xf32>
    %62 = tpu.matmul %61, %36, %cst_18 {dimension_numbers = #tpu.dot_dimension_numbers<[1], [0], [0], [1], [0, 0, 1, 1], [], []>} : vector<256x288xbf16>, vector<288x32xbf16>, vector<256x32xf32> -> vector<256x32xf32>
    %63 = vector.broadcast %38 : vector<1x32xf32> to vector<256x32xf32>
    %64 = arith.addf %62, %63 : vector<256x32xf32>
    %cst_19 = arith.constant 0.000000e+00 : f32
    %65 = vector.broadcast %cst_19 : f32 to vector<256x32xf32>
    %66 = arith.maximumf %64, %65 : vector<256x32xf32>
    %67 = arith.truncf %66 : vector<256x32xf32> to vector<256x32xbf16>
    %68 = vector.shape_cast %67 : vector<256x32xbf16> to vector<16x16x32xbf16>
    %69 = vector.shape_cast %68 : vector<16x16x32xbf16> to vector<8x2x16x32xbf16>
    %70 = vector.extract_strided_slice %69 {offsets = [0, 0, 0, 0], sizes = [8, 1, 16, 32], strides = [1, 1, 1, 1]} : vector<8x2x16x32xbf16> to vector<8x1x16x32xbf16>
    %71 = vector.shape_cast %70 : vector<8x1x16x32xbf16> to vector<8x16x32xbf16>
    %72 = vector.extract_strided_slice %69 {offsets = [0, 1, 0, 0], sizes = [8, 1, 16, 32], strides = [1, 1, 1, 1]} : vector<8x2x16x32xbf16> to vector<8x1x16x32xbf16>
    %73 = vector.shape_cast %72 : vector<8x1x16x32xbf16> to vector<8x16x32xbf16>
    %74 = arith.maximumf %71, %73 : vector<8x16x32xbf16>
    %75 = vector.shape_cast %74 : vector<8x16x32xbf16> to vector<8x8x2x32xbf16>
    %76 = vector.extract_strided_slice %75 {offsets = [0, 0, 0, 0], sizes = [8, 8, 1, 32], strides = [1, 1, 1, 1]} : vector<8x8x2x32xbf16> to vector<8x8x1x32xbf16>
    %77 = vector.shape_cast %76 : vector<8x8x1x32xbf16> to vector<8x8x32xbf16>
    %78 = vector.extract_strided_slice %75 {offsets = [0, 0, 1, 0], sizes = [8, 8, 1, 32], strides = [1, 1, 1, 1]} : vector<8x8x2x32xbf16> to vector<8x8x1x32xbf16>
    %79 = vector.shape_cast %78 : vector<8x8x1x32xbf16> to vector<8x8x32xbf16>
    %80 = arith.maximumf %77, %79 : vector<8x8x32xbf16>
    %c1_20 = arith.constant 1 : index
    %c0_21 = arith.constant 0 : index
    %c0_22 = arith.constant 0 : index
    %81 = vector.load %arg3[%c1_20, %c0_21, %c0_22] : memref<3x288x32xbf16, #tpu.memory_space<vmem>>, vector<1x288x32xbf16>
    %82 = vector.shape_cast %81 : vector<1x288x32xbf16> to vector<288x32xbf16>
    %c2 = arith.constant 2 : index
    %c0_23 = arith.constant 0 : index
    %c0_24 = arith.constant 0 : index
    %83 = vector.load %arg4[%c2, %c0_23, %c0_24] : memref<4x1x32xf32, #tpu.memory_space<vmem>>, vector<1x1x32xf32>
    %84 = vector.shape_cast %83 : vector<1x1x32xf32> to vector<1x32xf32>
    %cst_25 = arith.constant 0.000000e+00 : bf16
    %85 = vector.broadcast %cst_25 : bf16 to vector<1x8x32xbf16>
    %86 = tpu.concatenate %85, %80, %85 in 0 : vector<1x8x32xbf16>, vector<8x8x32xbf16>, vector<1x8x32xbf16> -> vector<10x8x32xbf16>
    %cst_26 = arith.constant 0.000000e+00 : bf16
    %87 = vector.broadcast %cst_26 : bf16 to vector<10x1x32xbf16>
    %88 = tpu.concatenate %87, %86, %87 in 1 : vector<10x1x32xbf16>, vector<10x8x32xbf16>, vector<10x1x32xbf16> -> vector<10x10x32xbf16>
    %89 = vector.extract_strided_slice %88 {offsets = [0, 0, 0], sizes = [8, 8, 32], strides = [1, 1, 1]} : vector<10x10x32xbf16> to vector<8x8x32xbf16>
    %90 = vector.shape_cast %89 : vector<8x8x32xbf16> to vector<64x32xbf16>
    %91 = vector.extract_strided_slice %88 {offsets = [0, 1, 0], sizes = [8, 8, 32], strides = [1, 1, 1]} : vector<10x10x32xbf16> to vector<8x8x32xbf16>
    %92 = vector.shape_cast %91 : vector<8x8x32xbf16> to vector<64x32xbf16>
    %93 = vector.extract_strided_slice %88 {offsets = [0, 2, 0], sizes = [8, 8, 32], strides = [1, 1, 1]} : vector<10x10x32xbf16> to vector<8x8x32xbf16>
    %94 = vector.shape_cast %93 : vector<8x8x32xbf16> to vector<64x32xbf16>
    %95 = vector.extract_strided_slice %88 {offsets = [1, 0, 0], sizes = [8, 8, 32], strides = [1, 1, 1]} : vector<10x10x32xbf16> to vector<8x8x32xbf16>
    %96 = vector.shape_cast %95 : vector<8x8x32xbf16> to vector<64x32xbf16>
    %97 = vector.extract_strided_slice %88 {offsets = [1, 1, 0], sizes = [8, 8, 32], strides = [1, 1, 1]} : vector<10x10x32xbf16> to vector<8x8x32xbf16>
    %98 = vector.shape_cast %97 : vector<8x8x32xbf16> to vector<64x32xbf16>
    %99 = vector.extract_strided_slice %88 {offsets = [1, 2, 0], sizes = [8, 8, 32], strides = [1, 1, 1]} : vector<10x10x32xbf16> to vector<8x8x32xbf16>
    %100 = vector.shape_cast %99 : vector<8x8x32xbf16> to vector<64x32xbf16>
    %101 = vector.extract_strided_slice %88 {offsets = [2, 0, 0], sizes = [8, 8, 32], strides = [1, 1, 1]} : vector<10x10x32xbf16> to vector<8x8x32xbf16>
    %102 = vector.shape_cast %101 : vector<8x8x32xbf16> to vector<64x32xbf16>
    %103 = vector.extract_strided_slice %88 {offsets = [2, 1, 0], sizes = [8, 8, 32], strides = [1, 1, 1]} : vector<10x10x32xbf16> to vector<8x8x32xbf16>
    %104 = vector.shape_cast %103 : vector<8x8x32xbf16> to vector<64x32xbf16>
    %105 = vector.extract_strided_slice %88 {offsets = [2, 2, 0], sizes = [8, 8, 32], strides = [1, 1, 1]} : vector<10x10x32xbf16> to vector<8x8x32xbf16>
    %106 = vector.shape_cast %105 : vector<8x8x32xbf16> to vector<64x32xbf16>
    %107 = tpu.concatenate %90, %92, %94, %96, %98, %100, %102, %104, %106 in 1 : vector<64x32xbf16>, vector<64x32xbf16>, vector<64x32xbf16>, vector<64x32xbf16>, vector<64x32xbf16>, vector<64x32xbf16>, vector<64x32xbf16>, vector<64x32xbf16>, vector<64x32xbf16> -> vector<64x288xbf16>
    %cst_27 = arith.constant dense<0.000000e+00> : vector<64x32xf32>
    %108 = tpu.matmul %107, %82, %cst_27 {dimension_numbers = #tpu.dot_dimension_numbers<[1], [0], [0], [1], [0, 0, 1, 1], [], []>} : vector<64x288xbf16>, vector<288x32xbf16>, vector<64x32xf32> -> vector<64x32xf32>
    %109 = vector.broadcast %84 : vector<1x32xf32> to vector<64x32xf32>
    %110 = arith.addf %108, %109 : vector<64x32xf32>
    %cst_28 = arith.constant 0.000000e+00 : f32
    %111 = vector.broadcast %cst_28 : f32 to vector<64x32xf32>
    %112 = arith.maximumf %110, %111 : vector<64x32xf32>
    %113 = arith.truncf %112 : vector<64x32xf32> to vector<64x32xbf16>
    %114 = vector.shape_cast %113 : vector<64x32xbf16> to vector<8x8x32xbf16>
    %c2_29 = arith.constant 2 : index
    %c0_30 = arith.constant 0 : index
    %c0_31 = arith.constant 0 : index
    %115 = vector.load %arg3[%c2_29, %c0_30, %c0_31] : memref<3x288x32xbf16, #tpu.memory_space<vmem>>, vector<1x288x32xbf16>
    %116 = vector.shape_cast %115 : vector<1x288x32xbf16> to vector<288x32xbf16>
    %c3 = arith.constant 3 : index
    %c0_32 = arith.constant 0 : index
    %c0_33 = arith.constant 0 : index
    %117 = vector.load %arg4[%c3, %c0_32, %c0_33] : memref<4x1x32xf32, #tpu.memory_space<vmem>>, vector<1x1x32xf32>
    %118 = vector.shape_cast %117 : vector<1x1x32xf32> to vector<1x32xf32>
    %cst_34 = arith.constant 0.000000e+00 : bf16
    %119 = vector.broadcast %cst_34 : bf16 to vector<1x8x32xbf16>
    %120 = tpu.concatenate %119, %114, %119 in 0 : vector<1x8x32xbf16>, vector<8x8x32xbf16>, vector<1x8x32xbf16> -> vector<10x8x32xbf16>
    %cst_35 = arith.constant 0.000000e+00 : bf16
    %121 = vector.broadcast %cst_35 : bf16 to vector<10x1x32xbf16>
    %122 = tpu.concatenate %121, %120, %121 in 1 : vector<10x1x32xbf16>, vector<10x8x32xbf16>, vector<10x1x32xbf16> -> vector<10x10x32xbf16>
    %123 = vector.extract_strided_slice %122 {offsets = [0, 0, 0], sizes = [8, 8, 32], strides = [1, 1, 1]} : vector<10x10x32xbf16> to vector<8x8x32xbf16>
    %124 = vector.shape_cast %123 : vector<8x8x32xbf16> to vector<64x32xbf16>
    %125 = vector.extract_strided_slice %122 {offsets = [0, 1, 0], sizes = [8, 8, 32], strides = [1, 1, 1]} : vector<10x10x32xbf16> to vector<8x8x32xbf16>
    %126 = vector.shape_cast %125 : vector<8x8x32xbf16> to vector<64x32xbf16>
    %127 = vector.extract_strided_slice %122 {offsets = [0, 2, 0], sizes = [8, 8, 32], strides = [1, 1, 1]} : vector<10x10x32xbf16> to vector<8x8x32xbf16>
    %128 = vector.shape_cast %127 : vector<8x8x32xbf16> to vector<64x32xbf16>
    %129 = vector.extract_strided_slice %122 {offsets = [1, 0, 0], sizes = [8, 8, 32], strides = [1, 1, 1]} : vector<10x10x32xbf16> to vector<8x8x32xbf16>
    %130 = vector.shape_cast %129 : vector<8x8x32xbf16> to vector<64x32xbf16>
    %131 = vector.extract_strided_slice %122 {offsets = [1, 1, 0], sizes = [8, 8, 32], strides = [1, 1, 1]} : vector<10x10x32xbf16> to vector<8x8x32xbf16>
    %132 = vector.shape_cast %131 : vector<8x8x32xbf16> to vector<64x32xbf16>
    %133 = vector.extract_strided_slice %122 {offsets = [1, 2, 0], sizes = [8, 8, 32], strides = [1, 1, 1]} : vector<10x10x32xbf16> to vector<8x8x32xbf16>
    %134 = vector.shape_cast %133 : vector<8x8x32xbf16> to vector<64x32xbf16>
    %135 = vector.extract_strided_slice %122 {offsets = [2, 0, 0], sizes = [8, 8, 32], strides = [1, 1, 1]} : vector<10x10x32xbf16> to vector<8x8x32xbf16>
    %136 = vector.shape_cast %135 : vector<8x8x32xbf16> to vector<64x32xbf16>
    %137 = vector.extract_strided_slice %122 {offsets = [2, 1, 0], sizes = [8, 8, 32], strides = [1, 1, 1]} : vector<10x10x32xbf16> to vector<8x8x32xbf16>
    %138 = vector.shape_cast %137 : vector<8x8x32xbf16> to vector<64x32xbf16>
    %139 = vector.extract_strided_slice %122 {offsets = [2, 2, 0], sizes = [8, 8, 32], strides = [1, 1, 1]} : vector<10x10x32xbf16> to vector<8x8x32xbf16>
    %140 = vector.shape_cast %139 : vector<8x8x32xbf16> to vector<64x32xbf16>
    %141 = tpu.concatenate %124, %126, %128, %130, %132, %134, %136, %138, %140 in 1 : vector<64x32xbf16>, vector<64x32xbf16>, vector<64x32xbf16>, vector<64x32xbf16>, vector<64x32xbf16>, vector<64x32xbf16>, vector<64x32xbf16>, vector<64x32xbf16>, vector<64x32xbf16> -> vector<64x288xbf16>
    %cst_36 = arith.constant dense<0.000000e+00> : vector<64x32xf32>
    %142 = tpu.matmul %141, %116, %cst_36 {dimension_numbers = #tpu.dot_dimension_numbers<[1], [0], [0], [1], [0, 0, 1, 1], [], []>} : vector<64x288xbf16>, vector<288x32xbf16>, vector<64x32xf32> -> vector<64x32xf32>
    %143 = vector.broadcast %118 : vector<1x32xf32> to vector<64x32xf32>
    %144 = arith.addf %142, %143 : vector<64x32xf32>
    %cst_37 = arith.constant 0.000000e+00 : f32
    %145 = vector.broadcast %cst_37 : f32 to vector<64x32xf32>
    %146 = arith.maximumf %144, %145 : vector<64x32xf32>
    %147 = arith.truncf %146 : vector<64x32xf32> to vector<64x32xbf16>
    %148 = vector.shape_cast %147 : vector<64x32xbf16> to vector<8x8x32xbf16>
    %149 = vector.shape_cast %148 : vector<8x8x32xbf16> to vector<4x2x8x32xbf16>
    %150 = vector.extract_strided_slice %149 {offsets = [0, 0, 0, 0], sizes = [4, 1, 8, 32], strides = [1, 1, 1, 1]} : vector<4x2x8x32xbf16> to vector<4x1x8x32xbf16>
    %151 = vector.shape_cast %150 : vector<4x1x8x32xbf16> to vector<4x8x32xbf16>
    %152 = vector.extract_strided_slice %149 {offsets = [0, 1, 0, 0], sizes = [4, 1, 8, 32], strides = [1, 1, 1, 1]} : vector<4x2x8x32xbf16> to vector<4x1x8x32xbf16>
    %153 = vector.shape_cast %152 : vector<4x1x8x32xbf16> to vector<4x8x32xbf16>
    %154 = arith.maximumf %151, %153 : vector<4x8x32xbf16>
    %155 = vector.shape_cast %154 : vector<4x8x32xbf16> to vector<4x4x2x32xbf16>
    %156 = vector.extract_strided_slice %155 {offsets = [0, 0, 0, 0], sizes = [4, 4, 1, 32], strides = [1, 1, 1, 1]} : vector<4x4x2x32xbf16> to vector<4x4x1x32xbf16>
    %157 = vector.shape_cast %156 : vector<4x4x1x32xbf16> to vector<4x4x32xbf16>
    %158 = vector.extract_strided_slice %155 {offsets = [0, 0, 1, 0], sizes = [4, 4, 1, 32], strides = [1, 1, 1, 1]} : vector<4x4x2x32xbf16> to vector<4x4x1x32xbf16>
    %159 = vector.shape_cast %158 : vector<4x4x1x32xbf16> to vector<4x4x32xbf16>
    %160 = arith.maximumf %157, %159 : vector<4x4x32xbf16>
    %161 = vector.shape_cast %160 : vector<4x4x32xbf16> to vector<16x32xbf16>
    %162 = vector.extract_strided_slice %161 {offsets = [0, 0], sizes = [1, 32], strides = [1, 1]} : vector<16x32xbf16> to vector<1x32xbf16>
    %163 = vector.extract_strided_slice %161 {offsets = [1, 0], sizes = [1, 32], strides = [1, 1]} : vector<16x32xbf16> to vector<1x32xbf16>
    %164 = vector.extract_strided_slice %161 {offsets = [2, 0], sizes = [1, 32], strides = [1, 1]} : vector<16x32xbf16> to vector<1x32xbf16>
    %165 = vector.extract_strided_slice %161 {offsets = [3, 0], sizes = [1, 32], strides = [1, 1]} : vector<16x32xbf16> to vector<1x32xbf16>
    %166 = vector.extract_strided_slice %161 {offsets = [4, 0], sizes = [1, 32], strides = [1, 1]} : vector<16x32xbf16> to vector<1x32xbf16>
    %167 = vector.extract_strided_slice %161 {offsets = [5, 0], sizes = [1, 32], strides = [1, 1]} : vector<16x32xbf16> to vector<1x32xbf16>
    %168 = vector.extract_strided_slice %161 {offsets = [6, 0], sizes = [1, 32], strides = [1, 1]} : vector<16x32xbf16> to vector<1x32xbf16>
    %169 = vector.extract_strided_slice %161 {offsets = [7, 0], sizes = [1, 32], strides = [1, 1]} : vector<16x32xbf16> to vector<1x32xbf16>
    %170 = vector.extract_strided_slice %161 {offsets = [8, 0], sizes = [1, 32], strides = [1, 1]} : vector<16x32xbf16> to vector<1x32xbf16>
    %171 = vector.extract_strided_slice %161 {offsets = [9, 0], sizes = [1, 32], strides = [1, 1]} : vector<16x32xbf16> to vector<1x32xbf16>
    %172 = vector.extract_strided_slice %161 {offsets = [10, 0], sizes = [1, 32], strides = [1, 1]} : vector<16x32xbf16> to vector<1x32xbf16>
    %173 = vector.extract_strided_slice %161 {offsets = [11, 0], sizes = [1, 32], strides = [1, 1]} : vector<16x32xbf16> to vector<1x32xbf16>
    %174 = vector.extract_strided_slice %161 {offsets = [12, 0], sizes = [1, 32], strides = [1, 1]} : vector<16x32xbf16> to vector<1x32xbf16>
    %175 = vector.extract_strided_slice %161 {offsets = [13, 0], sizes = [1, 32], strides = [1, 1]} : vector<16x32xbf16> to vector<1x32xbf16>
    %176 = vector.extract_strided_slice %161 {offsets = [14, 0], sizes = [1, 32], strides = [1, 1]} : vector<16x32xbf16> to vector<1x32xbf16>
    %177 = vector.extract_strided_slice %161 {offsets = [15, 0], sizes = [1, 32], strides = [1, 1]} : vector<16x32xbf16> to vector<1x32xbf16>
    %178 = tpu.concatenate %162, %163, %164, %165, %166, %167, %168, %169, %170, %171, %172, %173, %174, %175, %176, %177 in 1 : vector<1x32xbf16>, vector<1x32xbf16>, vector<1x32xbf16>, vector<1x32xbf16>, vector<1x32xbf16>, vector<1x32xbf16>, vector<1x32xbf16>, vector<1x32xbf16>, vector<1x32xbf16>, vector<1x32xbf16>, vector<1x32xbf16>, vector<1x32xbf16>, vector<1x32xbf16>, vector<1x32xbf16>, vector<1x32xbf16>, vector<1x32xbf16> -> vector<1x512xbf16>
    %c0_38 = arith.constant 0 : index
    %c0_39 = arith.constant 0 : index
    %179 = vector.load %arg5[%c0_38, %c0_39] : memref<512x128xbf16, #tpu.memory_space<vmem>>, vector<512x128xbf16>
    %cst_40 = arith.constant dense<0.000000e+00> : vector<1x128xf32>
    %180 = tpu.matmul %178, %179, %cst_40 {dimension_numbers = #tpu.dot_dimension_numbers<[1], [0], [0], [1], [0, 0, 1, 1], [], []>} : vector<1x512xbf16>, vector<512x128xbf16>, vector<1x128xf32> -> vector<1x128xf32>
    %c0_41 = arith.constant 0 : index
    %c0_42 = arith.constant 0 : index
    %181 = vector.load %arg6[%c0_41, %c0_42] : memref<1x128xf32, #tpu.memory_space<vmem>>, vector<1x128xf32>
    %182 = arith.addf %180, %181 : vector<1x128xf32>
    %cst_43 = arith.constant 0.000000e+00 : f32
    %183 = vector.broadcast %cst_43 : f32 to vector<1x128xf32>
    %184 = arith.maximumf %182, %183 : vector<1x128xf32>
    %185 = arith.truncf %184 : vector<1x128xf32> to vector<1x128xbf16>
    %c0_44 = arith.constant 0 : index
    %c0_45 = arith.constant 0 : index
    %186 = vector.load %arg7[%c0_44, %c0_45] : memref<128x64xbf16, #tpu.memory_space<vmem>>, vector<128x64xbf16>
    %cst_46 = arith.constant dense<0.000000e+00> : vector<1x64xf32>
    %187 = tpu.matmul %185, %186, %cst_46 {dimension_numbers = #tpu.dot_dimension_numbers<[1], [0], [0], [1], [0, 0, 1, 1], [], []>} : vector<1x128xbf16>, vector<128x64xbf16>, vector<1x64xf32> -> vector<1x64xf32>
    %c0_47 = arith.constant 0 : index
    %c0_48 = arith.constant 0 : index
    %188 = vector.load %arg8[%c0_47, %c0_48] : memref<1x64xf32, #tpu.memory_space<vmem>>, vector<1x64xf32>
    %189 = arith.addf %187, %188 : vector<1x64xf32>
    %cst_49 = arith.constant 0.000000e+00 : f32
    %190 = vector.broadcast %cst_49 : f32 to vector<1x64xf32>
    %191 = arith.maximumf %189, %190 : vector<1x64xf32>
    %192 = arith.truncf %191 : vector<1x64xf32> to vector<1x64xbf16>
    %c0_50 = arith.constant 0 : index
    %c0_51 = arith.constant 0 : index
    %193 = vector.load %arg9[%c0_50, %c0_51] : memref<64x3xbf16, #tpu.memory_space<vmem>>, vector<64x3xbf16>
    %cst_52 = arith.constant dense<0.000000e+00> : vector<1x3xf32>
    %194 = tpu.matmul %192, %193, %cst_52 {dimension_numbers = #tpu.dot_dimension_numbers<[1], [0], [0], [1], [0, 0, 1, 1], [], []>} : vector<1x64xbf16>, vector<64x3xbf16>, vector<1x3xf32> -> vector<1x3xf32>
    %c0_53 = arith.constant 0 : index
    %c0_54 = arith.constant 0 : index
    %195 = vector.load %arg10[%c0_53, %c0_54] : memref<1x3xf32, #tpu.memory_space<vmem>>, vector<1x3xf32>
    %196 = arith.addf %194, %195 : vector<1x3xf32>
    %c0_55 = arith.constant 0 : index
    %c0_56 = arith.constant 0 : index
    %c0_57 = arith.constant 0 : index
    %197 = vector.load %arg11[%c0_55, %c0_56, %c0_57] : memref<1x1x3xf32, #tpu.memory_space<vmem>>, vector<1x1x3xf32>
    %198 = vector.shape_cast %197 : vector<1x1x3xf32> to vector<1x3xf32>
    %199 = vector.shape_cast %196 : vector<1x3xf32> to vector<1x1x3xf32>
    tpu.vector_store %arg11[%c0_55, %c0_56, %c0_57], %199 {strides = array<i32>} : memref<1x1x3xf32, #tpu.memory_space<vmem>>, vector<1x1x3xf32>,
    return
  }
  func.func @transform_0(%arg0: i32) -> (i32, i32, i32, i32) {
    %c0_i32 = arith.constant 0 : i32
    %c0_i32_0 = arith.constant 0 : i32
    %c0_i32_1 = arith.constant 0 : i32
    %c0_i32_2 = arith.constant 0 : i32
    return %arg0, %c0_i32, %c0_i32_0, %c0_i32_1 : i32, i32, i32, i32
  }
  func.func @transform_1(%arg0: i32) -> (i32, i32) {
    %c0_i32 = arith.constant 0 : i32
    %c0_i32_0 = arith.constant 0 : i32
    %c0_i32_1 = arith.constant 0 : i32
    return %c0_i32, %c0_i32_0 : i32, i32
  }
  func.func @transform_2(%arg0: i32) -> (i32, i32, i32) {
    %c0_i32 = arith.constant 0 : i32
    %c0_i32_0 = arith.constant 0 : i32
    %c0_i32_1 = arith.constant 0 : i32
    %c0_i32_2 = arith.constant 0 : i32
    return %c0_i32, %c0_i32_0, %c0_i32_1 : i32, i32, i32
  }
  func.func @transform_3(%arg0: i32) -> (i32, i32, i32) {
    %c0_i32 = arith.constant 0 : i32
    %c0_i32_0 = arith.constant 0 : i32
    %c0_i32_1 = arith.constant 0 : i32
    %c0_i32_2 = arith.constant 0 : i32
    return %c0_i32, %c0_i32_0, %c0_i32_1 : i32, i32, i32
  }
  func.func @transform_4(%arg0: i32) -> (i32, i32) {
    %c0_i32 = arith.constant 0 : i32
    %c0_i32_0 = arith.constant 0 : i32
    %c0_i32_1 = arith.constant 0 : i32
    return %c0_i32, %c0_i32_0 : i32, i32
  }
  func.func @transform_5(%arg0: i32) -> (i32, i32) {
    %c0_i32 = arith.constant 0 : i32
    %c0_i32_0 = arith.constant 0 : i32
    %c0_i32_1 = arith.constant 0 : i32
    return %c0_i32, %c0_i32_0 : i32, i32
  }
  func.func @transform_6(%arg0: i32) -> (i32, i32) {
    %c0_i32 = arith.constant 0 : i32
    %c0_i32_0 = arith.constant 0 : i32
    %c0_i32_1 = arith.constant 0 : i32
    return %c0_i32, %c0_i32_0 : i32, i32
  }
  func.func @transform_7(%arg0: i32) -> (i32, i32) {
    %c0_i32 = arith.constant 0 : i32
    %c0_i32_0 = arith.constant 0 : i32
    %c0_i32_1 = arith.constant 0 : i32
    return %c0_i32, %c0_i32_0 : i32, i32
  }
  func.func @transform_8(%arg0: i32) -> (i32, i32) {
    %c0_i32 = arith.constant 0 : i32
    %c0_i32_0 = arith.constant 0 : i32
    %c0_i32_1 = arith.constant 0 : i32
    return %c0_i32, %c0_i32_0 : i32, i32
  }
  func.func @transform_9(%arg0: i32) -> (i32, i32) {
    %c0_i32 = arith.constant 0 : i32
    %c0_i32_0 = arith.constant 0 : i32
    %c0_i32_1 = arith.constant 0 : i32
    return %c0_i32, %c0_i32_0 : i32, i32
  }
  func.func @transform_10(%arg0: i32) -> (i32, i32, i32) {
    %c0_i32 = arith.constant 0 : i32
    %c0_i32_0 = arith.constant 0 : i32
    %c0_i32_1 = arith.constant 0 : i32
    return %arg0, %c0_i32, %c0_i32_0 : i32, i32, i32
  }
}

</mosaic_0001>

<llo_original>
// kernel: alzheimer_cnn_forward.1
$region0: #{alzheimer_cnn_forward.1}
  #allocation0 [shape = 'u32[]', space=smem, size = 0x4, offset = 0x4, fixed_abs, tag = 'smem constant byte address 0x4 - core index']
  #allocation1 [shape = 'u32[72,128]{1,0:T(1,128)}', space=vmem, size = 0x9000, scoped, tag = 'internal scratch']
  %s0 = inlined_call_operand.vmem [shape: bf16[2,16,16,8], index: 0, kind: input, shape index: {}]
  %s1 = inlined_call_operand.vmem [shape: bf16[72,32], index: 1, kind: input, shape index: {}]
  %s2 = inlined_call_operand.vmem [shape: bf16[3,288,32], index: 2, kind: input, shape index: {}]
  %s3 = inlined_call_operand.vmem [shape: f32[4,1,32], index: 3, kind: input, shape index: {}]
  %s4 = inlined_call_operand.vmem [shape: bf16[512,128], index: 4, kind: input, shape index: {}]
  %s5 = inlined_call_operand.vmem [shape: f32[1,128], index: 5, kind: input, shape index: {}]
  %s6 = inlined_call_operand.vmem [shape: bf16[128,64], index: 6, kind: input, shape index: {}]
  %s7 = inlined_call_operand.vmem [shape: f32[1,64], index: 7, kind: input, shape index: {}]
  %s8 = inlined_call_operand.vmem [shape: bf16[64,3], index: 8, kind: input, shape index: {}]
  %s9 = inlined_call_operand.vmem [shape: f32[1,3], index: 9, kind: input, shape index: {}]
  %s10 = inlined_call_operand.hbm [shape: f32[2,1,3], index: 10, kind: output, shape index: {}]
  %s11 = sld [smem:[#allocation0]]
  $region73: #{alzheimer_cnn_forward.1} parent=0
    _
  %s13 = ssub.s32 1, %s11
  %s14 = scalar_select 0, %s13, %s11
  $region1: #{alzheimer_cnn_forward.1} parent=0
    #allocation2 [shape = 'u8[1024]{0}', space=vmem, size = 0x400, scoped, tag = 'output window, operand 0']
    #allocation3 [shape = 's32[2]{0}', space=sflag, size = 0x8, scoped, tag = 'scoped memory for alzheimer_cnn_forward.1']
    %15 = vsyncpa [#allocation3], 0
    %s16 = scalar_lea.sflag [#allocation3], 1
    %17 = vsyncpa %s16, 0
    loop: start=0, step=1, limit=4
    $region2: #{alzheimer_cnn_forward.1} parent=1 // loop_pre_header
      _
    $region3: #{alzheimer_cnn_forward.1} parent=1 // loop_header
      %s19 = sphi 0, %s23
      %p20 = scmp.ge.s32.totalorder %s19, 4
      %s29 = sphi 0, %s31
      %s32 = sphi 0, %s29
      %s33 = sphi 0, %s32
      %s49 = sphi 0, %s33
      %s53 = sphi 0, %s53
      %s55 = sphi 0, %s53
      %s56 = sphi 0, %s55
      %s70 = sphi 0, %s56
      %s74 = sphi 0, %s74
      %s76 = sphi 0, %s74
      %s77 = sphi 0, %s76
      %s91 = sphi 0, %s77
      %s95 = sphi 0, %s95
      %s97 = sphi 0, %s95
      %s98 = sphi 0, %s97
      %s112 = sphi 0, %s98
      %s116 = sphi 0, %s116
      %s118 = sphi 0, %s116
      %s119 = sphi 0, %s118
      %s133 = sphi 0, %s119
      %s137 = sphi 0, %s137
      %s139 = sphi 0, %s137
      %s140 = sphi 0, %s139
      %s154 = sphi 0, %s140
      %s158 = sphi 0, %s158
      %s160 = sphi 0, %s158
      %s161 = sphi 0, %s160
      %s175 = sphi 0, %s161
      %s179 = sphi 0, %s179
      %s181 = sphi 0, %s179
      %s182 = sphi 0, %s181
      %s196 = sphi 0, %s182
      %s200 = sphi 0, %s200
      %s202 = sphi 0, %s200
      %s203 = sphi 0, %s202
      %s217 = sphi 0, %s203
      %s221 = sphi 0, %s221
      %s223 = sphi 0, %s221
      %s224 = sphi 0, %s223
      %s238 = sphi 0, %s224
      %s244 = sphi 0, %s246
      %s247 = sphi 0, %s244
      %s248 = sphi 0, %s247
      %s264 = sphi 0, %s248
    $region4: #{alzheimer_cnn_forward.1} parent=1 // loop_header_branch
      %22 = sbr.rel (%p20) target = $region8
    $region5: #{alzheimer_cnn_forward.1} parent=1 // loop_body
      %s24 = ssub.s32 %s19, 1
      %s25 = ssub.s32 %s19, 2
      %s26 = sadd.s32 %s19, 1
      %s27 = ssub.s32 %s19, %s26
      %p28 = scmp.eq.s32.totalorder %s27, 0
      %s30 = sadd.s32 %s29, 1
      %s31 = scalar_select %p28, %s29, %s30
      %p34 = pneg %p28
      %p35 = scmp.eq.s32.totalorder %s19, 1
      %p36 = por %p34, %p35
      %p37 = scmp.ne.s32.totalorder %s29, %s32
      %p38 = scmp.eq.s32.totalorder %s19, 0
      %p39 = por %p37, %p38
      %p40 = scmp.ne.s32.totalorder %s29, %s32
      %p41 = scmp.eq.s32.totalorder %s24, 1
      %p42 = por %p40, %p41
      %p43 = scmp.ne.s32.totalorder %s32, %s33
      %p44 = scmp.eq.s32.totalorder %s24, 0
      %p45 = por %p43, %p44
      %p46 = scmp.ne.s32.totalorder %s32, %s33
      %p47 = scmp.eq.s32.totalorder %s25, 1
      %p48 = por %p46, %p47
      %p50 = scmp.ne.s32.totalorder %s33, %s49
      %p51 = scmp.eq.s32.totalorder %s25, 0
      %p52 = por %p50, %p51
      %s54 = sadd.s32 %s53, 1
      %p57 = scmp.eq.s32.totalorder %s19, 1
      %p58 = scmp.ne.s32.totalorder %s53, %s55
      %p59 = scmp.eq.s32.totalorder %s19, 0
      %p60 = por %p58, %p59
      %p61 = scmp.ne.s32.totalorder %s53, %s55
      %p62 = scmp.eq.s32.totalorder %s24, 1
      %p63 = por %p61, %p62
      %p64 = scmp.ne.s32.totalorder %s55, %s56
      %p65 = scmp.eq.s32.totalorder %s24, 0
      %p66 = por %p64, %p65
      %p67 = scmp.ne.s32.totalorder %s55, %s56
      %p68 = scmp.eq.s32.totalorder %s25, 1
      %p69 = por %p67, %p68
      %p71 = scmp.ne.s32.totalorder %s56, %s70
      %p72 = scmp.eq.s32.totalorder %s25, 0
      %p73 = por %p71, %p72
      %s75 = sadd.s32 %s74, 1
      %p78 = scmp.eq.s32.totalorder %s19, 1
      %p79 = scmp.ne.s32.totalorder %s74, %s76
      %p80 = scmp.eq.s32.totalorder %s19, 0
      %p81 = por %p79, %p80
      %p82 = scmp.ne.s32.totalorder %s74, %s76
      %p83 = scmp.eq.s32.totalorder %s24, 1
      %p84 = por %p82, %p83
      %p85 = scmp.ne.s32.totalorder %s76, %s77
      %p86 = scmp.eq.s32.totalorder %s24, 0
      %p87 = por %p85, %p86
      %p88 = scmp.ne.s32.totalorder %s76, %s77
      %p89 = scmp.eq.s32.totalorder %s25, 1
      %p90 = por %p88, %p89
      %p92 = scmp.ne.s32.totalorder %s77, %s91
      %p93 = scmp.eq.s32.totalorder %s25, 0
      %p94 = por %p92, %p93
      %s96 = sadd.s32 %s95, 1
      %p99 = scmp.eq.s32.totalorder %s19, 1
      %p100 = scmp.ne.s32.totalorder %s95, %s97
      %p101 = scmp.eq.s32.totalorder %s19, 0
      %p102 = por %p100, %p101
      %p103 = scmp.ne.s32.totalorder %s95, %s97
      %p104 = scmp.eq.s32.totalorder %s24, 1
      %p105 = por %p103, %p104
      %p106 = scmp.ne.s32.totalorder %s97, %s98
      %p107 = scmp.eq.s32.totalorder %s24, 0
      %p108 = por %p106, %p107
      %p109 = scmp.ne.s32.totalorder %s97, %s98
      %p110 = scmp.eq.s32.totalorder %s25, 1
      %p111 = por %p109, %p110
      %p113 = scmp.ne.s32.totalorder %s98, %s112
      %p114 = scmp.eq.s32.totalorder %s25, 0
      %p115 = por %p113, %p114
      %s117 = sadd.s32 %s116, 1
      %p120 = scmp.eq.s32.totalorder %s19, 1
      %p121 = scmp.ne.s32.totalorder %s116, %s118
      %p122 = scmp.eq.s32.totalorder %s19, 0
      %p123 = por %p121, %p122
      %p124 = scmp.ne.s32.totalorder %s116, %s118
      %p125 = scmp.eq.s32.totalorder %s24, 1
      %p126 = por %p124, %p125
      %p127 = scmp.ne.s32.totalorder %s118, %s119
      %p128 = scmp.eq.s32.totalorder %s24, 0
      %p129 = por %p127, %p128
      %p130 = scmp.ne.s32.totalorder %s118, %s119
      %p131 = scmp.eq.s32.totalorder %s25, 1
      %p132 = por %p130, %p131
      %p134 = scmp.ne.s32.totalorder %s119, %s133
      %p135 = scmp.eq.s32.totalorder %s25, 0
      %p136 = por %p134, %p135
      %s138 = sadd.s32 %s137, 1
      %p141 = scmp.eq.s32.totalorder %s19, 1
      %p142 = scmp.ne.s32.totalorder %s137, %s139
      %p143 = scmp.eq.s32.totalorder %s19, 0
      %p144 = por %p142, %p143
      %p145 = scmp.ne.s32.totalorder %s137, %s139
      %p146 = scmp.eq.s32.totalorder %s24, 1
      %p147 = por %p145, %p146
      %p148 = scmp.ne.s32.totalorder %s139, %s140
      %p149 = scmp.eq.s32.totalorder %s24, 0
      %p150 = por %p148, %p149
      %p151 = scmp.ne.s32.totalorder %s139, %s140
      %p152 = scmp.eq.s32.totalorder %s25, 1
      %p153 = por %p151, %p152
      %p155 = scmp.ne.s32.totalorder %s140, %s154
      %p156 = scmp.eq.s32.totalorder %s25, 0
      %p157 = por %p155, %p156
      %s159 = sadd.s32 %s158, 1
      %p162 = scmp.eq.s32.totalorder %s19, 1
      %p163 = scmp.ne.s32.totalorder %s158, %s160
      %p164 = scmp.eq.s32.totalorder %s19, 0
      %p165 = por %p163, %p164
      %p166 = scmp.ne.s32.totalorder %s158, %s160
      %p167 = scmp.eq.s32.totalorder %s24, 1
      %p168 = por %p166, %p167
      %p169 = scmp.ne.s32.totalorder %s160, %s161
      %p170 = scmp.eq.s32.totalorder %s24, 0
      %p171 = por %p169, %p170
      %p172 = scmp.ne.s32.totalorder %s160, %s161
      %p173 = scmp.eq.s32.totalorder %s25, 1
      %p174 = por %p172, %p173
      %p176 = scmp.ne.s32.totalorder %s161, %s175
      %p177 = scmp.eq.s32.totalorder %s25, 0
      %p178 = por %p176, %p177
      %s180 = sadd.s32 %s179, 1
      %p183 = scmp.eq.s32.totalorder %s19, 1
      %p184 = scmp.ne.s32.totalorder %s179, %s181
      %p185 = scmp.eq.s32.totalorder %s19, 0
      %p186 = por %p184, %p185
      %p187 = scmp.ne.s32.totalorder %s179, %s181
      %p188 = scmp.eq.s32.totalorder %s24, 1
      %p189 = por %p187, %p188
      %p190 = scmp.ne.s32.totalorder %s181, %s182
      %p191 = scmp.eq.s32.totalorder %s24, 0
      %p192 = por %p190, %p191
      %p193 = scmp.ne.s32.totalorder %s181, %s182
      %p194 = scmp.eq.s32.totalorder %s25, 1
      %p195 = por %p193, %p194
      %p197 = scmp.ne.s32.totalorder %s182, %s196
      %p198 = scmp.eq.s32.totalorder %s25, 0
      %p199 = por %p197, %p198
      %s201 = sadd.s32 %s200, 1
      %p204 = scmp.eq.s32.totalorder %s19, 1
      %p205 = scmp.ne.s32.totalorder %s200, %s202
      %p206 = scmp.eq.s32.totalorder %s19, 0
      %p207 = por %p205, %p206
      %p208 = scmp.ne.s32.totalorder %s200, %s202
      %p209 = scmp.eq.s32.totalorder %s24, 1
      %p210 = por %p208, %p209
      %p211 = scmp.ne.s32.totalorder %s202, %s203
      %p212 = scmp.eq.s32.totalorder %s24, 0
      %p213 = por %p211, %p212
      %p214 = scmp.ne.s32.totalorder %s202, %s203
      %p215 = scmp.eq.s32.totalorder %s25, 1
      %p216 = por %p214, %p215
      %p218 = scmp.ne.s32.totalorder %s203, %s217
      %p219 = scmp.eq.s32.totalorder %s25, 0
      %p220 = por %p218, %p219
      %s222 = sadd.s32 %s221, 1
      %p225 = scmp.eq.s32.totalorder %s19, 1
      %p226 = scmp.ne.s32.totalorder %s221, %s223
      %p227 = scmp.eq.s32.totalorder %s19, 0
      %p228 = por %p226, %p227
      %p229 = scmp.ne.s32.totalorder %s221, %s223
      %p230 = scmp.eq.s32.totalorder %s24, 1
      %p231 = por %p229, %p230
      %p232 = scmp.ne.s32.totalorder %s223, %s224
      %p233 = scmp.eq.s32.totalorder %s24, 0
      %p234 = por %p232, %p233
      %p235 = scmp.ne.s32.totalorder %s223, %s224
      %p236 = scmp.eq.s32.totalorder %s25, 1
      %p237 = por %p235, %p236
      %p239 = scmp.ne.s32.totalorder %s224, %s238
      %p240 = scmp.eq.s32.totalorder %s25, 0
      %p241 = por %p239, %p240
      %s242 = ssub.s32 %s19, %s26
      %p243 = scmp.eq.s32.totalorder %s242, 0
      %s245 = sadd.s32 %s244, 1
      %s246 = scalar_select %p243, %s244, %s245
      %p249 = pneg %p243
      %p250 = scmp.eq.s32.totalorder %s19, 1
      %p251 = por %p249, %p250
      %p252 = scmp.ne.s32.totalorder %s244, %s247
      %p253 = scmp.eq.s32.totalorder %s19, 0
      %p254 = por %p252, %p253
      %p255 = scmp.ne.s32.totalorder %s244, %s247
      %p256 = scmp.eq.s32.totalorder %s24, 1
      %p257 = por %p255, %p256
      %p258 = scmp.ne.s32.totalorder %s247, %s248
      %p259 = scmp.eq.s32.totalorder %s24, 0
      %p260 = por %p258, %p259
      %p261 = scmp.ne.s32.totalorder %s247, %s248
      %p262 = scmp.eq.s32.totalorder %s25, 1
      %p263 = por %p261, %p262
      %p265 = scmp.ne.s32.totalorder %s248, %s264
      %p266 = scmp.eq.s32.totalorder %s25, 0
      %p267 = por %p265, %p266
      %p268 = scmp.le.s32.totalorder 1, %s19
      %p269 = scmp.lt.s32.totalorder %s19, 3
      %p270 = pnand %p268, %p269
      %p271 = pneg %p270
      // Predicated region
      $region9: #{alzheimer_cnn_forward.1} parent=5 // pred_check
        _
      $region10: #{alzheimer_cnn_forward.1} parent=5 // pred_check_branch
        %273 = sbr.rel (%p270) target = $region12
      $region11: #{alzheimer_cnn_forward.1} parent=5 // pred_region
        %s274 = ssub.s32 %s19, 1
        // Predicated region
        $region13: #{alzheimer_cnn_forward.1} parent=11 // pred_check
          %p275 = pneg %p66
        $region14: #{alzheimer_cnn_forward.1} parent=11 // pred_check_branch
          %277 = sbr.rel (%p275) target = $region16
        $region15: #{alzheimer_cnn_forward.1} parent=11 // pred_region
          _
        $region16: #{alzheimer_cnn_forward.1} parent=11 // pred_fallthru
          _
        // Predicated region
        $region17: #{alzheimer_cnn_forward.1} parent=11 // pred_check
          %p278 = pneg %p87
        $region18: #{alzheimer_cnn_forward.1} parent=11 // pred_check_branch
          %280 = sbr.rel (%p278) target = $region20
        $region19: #{alzheimer_cnn_forward.1} parent=11 // pred_region
          _
        $region20: #{alzheimer_cnn_forward.1} parent=11 // pred_fallthru
          _
        // Predicated region
        $region21: #{alzheimer_cnn_forward.1} parent=11 // pred_check
          %p281 = pneg %p108
        $region22: #{alzheimer_cnn_forward.1} parent=11 // pred_check_branch
          %283 = sbr.rel (%p281) target = $region24
        $region23: #{alzheimer_cnn_forward.1} parent=11 // pred_region
          _
        $region24: #{alzheimer_cnn_forward.1} parent=11 // pred_fallthru
          _
        // Predicated region
        $region25: #{alzheimer_cnn_forward.1} parent=11 // pred_check
          %p284 = pneg %p129
        $region26: #{alzheimer_cnn_forward.1} parent=11 // pred_check_branch
          %286 = sbr.rel (%p284) target = $region28
        $region27: #{alzheimer_cnn_forward.1} parent=11 // pred_region
          _
        $region28: #{alzheimer_cnn_forward.1} parent=11 // pred_fallthru
          _
        // Predicated region
        $region29: #{alzheimer_cnn_forward.1} parent=11 // pred_check
          %p287 = pneg %p150
        $region30: #{alzheimer_cnn_forward.1} parent=11 // pred_check_branch
          %289 = sbr.rel (%p287) target = $region32
        $region31: #{alzheimer_cnn_forward.1} parent=11 // pred_region
          _
        $region32: #{alzheimer_cnn_forward.1} parent=11 // pred_fallthru
          _
        // Predicated region
        $region33: #{alzheimer_cnn_forward.1} parent=11 // pred_check
          %p290 = pneg %p171
        $region34: #{alzheimer_cnn_forward.1} parent=11 // pred_check_branch
          %292 = sbr.rel (%p290) target = $region36
        $region35: #{alzheimer_cnn_forward.1} parent=11 // pred_region
          _
        $region36: #{alzheimer_cnn_forward.1} parent=11 // pred_fallthru
          _
        // Predicated region
        $region37: #{alzheimer_cnn_forward.1} parent=11 // pred_check
          %p293 = pneg %p192
        $region38: #{alzheimer_cnn_forward.1} parent=11 // pred_check_branch
          %295 = sbr.rel (%p293) target = $region40
        $region39: #{alzheimer_cnn_forward.1} parent=11 // pred_region
          _
        $region40: #{alzheimer_cnn_forward.1} parent=11 // pred_fallthru
          _
        // Predicated region
        $region41: #{alzheimer_cnn_forward.1} parent=11 // pred_check
          %p296 = pneg %p213
        $region42: #{alzheimer_cnn_forward.1} parent=11 // pred_check_branch
          %298 = sbr.rel (%p296) target = $region44
        $region43: #{alzheimer_cnn_forward.1} parent=11 // pred_region
          _
        $region44: #{alzheimer_cnn_forward.1} parent=11 // pred_fallthru
          _
        // Predicated region
        $region45: #{alzheimer_cnn_forward.1} parent=11 // pred_check
          %p299 = pneg %p234
        $region46: #{alzheimer_cnn_forward.1} parent=11 // pred_check_branch
          %301 = sbr.rel (%p299) target = $region48
        $region47: #{alzheimer_cnn_forward.1} parent=11 // pred_region
          _
        $region48: #{alzheimer_cnn_forward.1} parent=11 // pred_fallthru
          _
      $region12: #{alzheimer_cnn_forward.1} parent=5 // pred_fallthru
        _
      %p302 = scmp.lt.s32.totalorder %s19, 2
      // Predicated region
      $region49: #{alzheimer_cnn_forward.1} parent=5 // pred_check
        %p303 = pneg %p302
      $region50: #{alzheimer_cnn_forward.1} parent=5 // pred_check_branch
        %305 = sbr.rel (%p303) target = $region52
      $region51: #{alzheimer_cnn_forward.1} parent=5 // pred_region
        // Predicated region
        $region53: #{alzheimer_cnn_forward.1} parent=51 // pred_check
          %p306 = pneg %p39
        $region54: #{alzheimer_cnn_forward.1} parent=51 // pred_check_branch
          %308 = sbr.rel (%p306) target = $region56
        $region55: #{alzheimer_cnn_forward.1} parent=51 // pred_region
          %p309 = scmp.lt.s32.totalorder %s19, 1
          %s310 = scalar_select %p309, %s19, 1
          %s311 = smul.addr %s310, 32
          %s312 = smul.addr %s311, 4
          %s313 = scalar_lea.vmem %s0, %s312
        $region56: #{alzheimer_cnn_forward.1} parent=51 // pred_fallthru
          _
      $region52: #{alzheimer_cnn_forward.1} parent=5 // pred_fallthru
        _
      %p314 = scmp.le.s32.totalorder 1, %s19
      %p315 = scmp.lt.s32.totalorder %s19, 3
      %p316 = pnand %p314, %p315
      %p317 = pneg %p316
      // Predicated region
      $region57: #{alzheimer_cnn_forward.1} parent=5 // pred_check
        _
      $region58: #{alzheimer_cnn_forward.1} parent=5 // pred_check_branch
        %319 = sbr.rel (%p316) target = $region60
      $region59: #{alzheimer_cnn_forward.1} parent=5 // pred_region
        %s320 = ssub.s32 %s19, 1
        %p321 = scmp.lt.s32.totalorder %s24, 1
        %s322 = scalar_select %p321, %s24, 1
        %s323 = smul.addr %s322, 32
        %s324 = smul.addr %s323, 4
        %s325 = scalar_lea.vmem %s0, %s324
        %p326 = pneg %p45
        %p327 = pneg %p42
        %p328 = pneg %p66
        %p329 = pneg %p63
        %p330 = pneg %p87
        %p331 = pneg %p84
        %p332 = pneg %p108
        %p333 = pneg %p105
        %p334 = pneg %p129
        %p335 = pneg %p126
        %p336 = pneg %p150
        %p337 = pneg %p147
        %p338 = pneg %p171
        %p339 = pneg %p168
        %p340 = pneg %p192
        %p341 = pneg %p189
        %p342 = pneg %p213
        %p343 = pneg %p210
        %p344 = pneg %p234
        %p345 = pneg %p231
        %p346 = pneg %p260
        %p347 = pneg %p257
        %s348 = sand.u32 %s247, 1
        %s349 = scalar_lea.sflag [#allocation3], %s348
        %s350 = sand.u32 %s247, 1
        %s351 = scalar_lea.vmem [#allocation2], %s350
        %p352 = scmp.lt.s32.totalorder %s24, 1
        %s353 = scalar_select %p352, %s24, 1
        %s354 = smul.addr %s353, 32
        %s355 = smul.addr %s354, 4
        %s356 = scalar_lea.vmem %s0, %s355
        %v358 = vld [vmem:[%s356] sm:$0xf]
        %v359 = vld [vmem:[%s356 + $0x4] sm:$0xf]
        %v360 = vld [vmem:[%s356 + $0x8] sm:$0xf]
        %v361 = vld [vmem:[%s356 + $0xc] sm:$0xf]
        %v362 = vld [vmem:[%s356 + $0x10] sm:$0xf]
        %v363 = vld [vmem:[%s356 + $0x14] sm:$0xf]
        %v364 = vld [vmem:[%s356 + $0x18] sm:$0xf]
        %v365 = vld [vmem:[%s356 + $0x1c] sm:$0xf]
        %v366 = vld [vmem:[%s356 + $0x20] sm:$0xf]
        %v367 = vld [vmem:[%s356 + $0x24] sm:$0xf]
        %v368 = vld [vmem:[%s356 + $0x28] sm:$0xf]
        %v369 = vld [vmem:[%s356 + $0x2c] sm:$0xf]
        %v370 = vld [vmem:[%s356 + $0x30] sm:$0xf]
        %v371 = vld [vmem:[%s356 + $0x34] sm:$0xf]
        %v372 = vld [vmem:[%s356 + $0x38] sm:$0xf]
        %v373 = vld [vmem:[%s356 + $0x3c] sm:$0xf]
        %v374 = vld [vmem:[%s356 + $0x40] sm:$0xf]
        %v375 = vld [vmem:[%s356 + $0x44] sm:$0xf]
        %v376 = vld [vmem:[%s356 + $0x48] sm:$0xf]
        %v377 = vld [vmem:[%s356 + $0x4c] sm:$0xf]
        %v378 = vld [vmem:[%s356 + $0x50] sm:$0xf]
        %v379 = vld [vmem:[%s356 + $0x54] sm:$0xf]
        %v380 = vld [vmem:[%s356 + $0x58] sm:$0xf]
        %v381 = vld [vmem:[%s356 + $0x5c] sm:$0xf]
        %v382 = vld [vmem:[%s356 + $0x60] sm:$0xf]
        %v383 = vld [vmem:[%s356 + $0x64] sm:$0xf]
        %v384 = vld [vmem:[%s356 + $0x68] sm:$0xf]
        %v385 = vld [vmem:[%s356 + $0x6c] sm:$0xf]
        %v386 = vld [vmem:[%s356 + $0x70] sm:$0xf]
        %v387 = vld [vmem:[%s356 + $0x74] sm:$0xf]
        %v388 = vld [vmem:[%s356 + $0x78] sm:$0xf]
        %v389 = vld [vmem:[%s356 + $0x7c] sm:$0xf]
        %v390 = vld [vmem:[%s1] sm:$0xf]
        %v391 = vld [vmem:[%s1 + $0x4] sm:$0xf]
        %v392 = vld [vmem:[%s1 + $0x8] sm:$0xf]
        %v393 = vld [vmem:[%s1 + $0xc] sm:$0xf]
        %v394 = vld [vmem:[%s1 + $0x10] sm:$0xf]
        %v395 = vld [vmem:[%s1 + $0x14] sm:$0xf]
        %v396 = vld [vmem:[%s1 + $0x18] sm:$0xf]
        %v397 = vld [vmem:[%s1 + $0x1c] sm:$0xf]
        %v398 = vld [vmem:[%s1 + $0x20] sm:$0xf]
        %v399 = vld [vmem:[%s3] sm:$0x1]
        %v432 = vunpack.c.l.b16 %v358
        %v433 = vunpack.c.l.b16 %v359
        %v434 = vunpack.c.l.b16 %v360
        %v435 = vunpack.c.l.b16 %v361
        %v436 = vunpack.c.l.b16 %v362
        %v437 = vunpack.c.l.b16 %v363
        %v438 = vunpack.c.l.b16 %v364
        %v439 = vunpack.c.l.b16 %v365
        %v440 = vunpack.c.l.b16 %v366
        %v441 = vunpack.c.l.b16 %v367
        %v442 = vunpack.c.l.b16 %v368
        %v443 = vunpack.c.l.b16 %v369
        %v444 = vunpack.c.l.b16 %v370
        %v445 = vunpack.c.l.b16 %v371
        %v446 = vunpack.c.l.b16 %v372
        %v447 = vunpack.c.l.b16 %v373
        %v448 = vunpack.c.l.b16 %v374
        %v449 = vunpack.c.l.b16 %v375
        %v450 = vunpack.c.l.b16 %v376
        %v451 = vunpack.c.l.b16 %v377
        %v452 = vunpack.c.l.b16 %v378
        %v453 = vunpack.c.l.b16 %v379
        %v454 = vunpack.c.l.b16 %v380
        %v455 = vunpack.c.l.b16 %v381
        %v456 = vunpack.c.l.b16 %v382
        %v457 = vunpack.c.l.b16 %v383
        %v458 = vunpack.c.l.b16 %v384
        %v459 = vunpack.c.l.b16 %v385
        %v460 = vunpack.c.l.b16 %v386
        %v461 = vunpack.c.l.b16 %v387
        %v462 = vunpack.c.l.b16 %v388
        %v463 = vunpack.c.l.b16 %v389
        %v464 = vpack.c.b16 %v433, %v432
        %v465 = vpack.c.b16 %v435, %v434
        %v466 = vpack.c.b16 %v437, %v436
        %v467 = vpack.c.b16 %v439, %v438
        %v468 = vpack.c.b16 %v441, %v440
        %v469 = vpack.c.b16 %v443, %v442
        %v470 = vpack.c.b16 %v445, %v444
        %v471 = vpack.c.b16 %v447, %v446
        %v472 = vpack.c.b16 %v449, %v448
        %v473 = vpack.c.b16 %v451, %v450
        %v474 = vpack.c.b16 %v453, %v452
        %v475 = vpack.c.b16 %v455, %v454
        %v476 = vpack.c.b16 %v457, %v456
        %v477 = vpack.c.b16 %v459, %v458
        %v478 = vpack.c.b16 %v461, %v460
        %v479 = vpack.c.b16 %v463, %v462
        %v481 = vshrl.u32 0, 16
        %v483 = vrot.slane %v481, 7
        %v484 = vshll.u32 0, 16
        %v486 = vor.u32 %v483, %v484
        %v488 = vshrl.u32 %v464, 16
        %v490 = vrot.slane %v488, 7
        %v491 = vshll.u32 %v464, 16
        %v493 = vor.u32 %v490, %v491
        %v495 = vshrl.u32 %v465, 16
        %v497 = vrot.slane %v495, 7
        %v498 = vshll.u32 %v465, 16
        %v500 = vor.u32 %v497, %v498
        %v502 = vshrl.u32 %v466, 16
        %v504 = vrot.slane %v502, 7
        %v505 = vshll.u32 %v466, 16
        %v507 = vor.u32 %v504, %v505
        %v509 = vshrl.u32 %v467, 16
        %v511 = vrot.slane %v509, 7
        %v512 = vshll.u32 %v467, 16
        %v514 = vor.u32 %v511, %v512
        %v516 = vshrl.u32 %v468, 16
        %v518 = vrot.slane %v516, 7
        %v519 = vshll.u32 %v468, 16
        %v521 = vor.u32 %v518, %v519
        %v523 = vshrl.u32 %v469, 16
        %v525 = vrot.slane %v523, 7
        %v526 = vshll.u32 %v469, 16
        %v528 = vor.u32 %v525, %v526
        %v530 = vshrl.u32 %v470, 16
        %v532 = vrot.slane %v530, 7
        %v533 = vshll.u32 %v470, 16
        %v535 = vor.u32 %v532, %v533
        %v537 = vshrl.u32 %v471, 16
        %v539 = vrot.slane %v537, 7
        %v540 = vshll.u32 %v471, 16
        %v542 = vor.u32 %v539, %v540
        %v544 = vshrl.u32 %v472, 16
        %v546 = vrot.slane %v544, 7
        %v547 = vshll.u32 %v472, 16
        %v549 = vor.u32 %v546, %v547
        %v551 = vshrl.u32 %v473, 16
        %v553 = vrot.slane %v551, 7
        %v554 = vshll.u32 %v473, 16
        %v556 = vor.u32 %v553, %v554
        %v558 = vshrl.u32 %v474, 16
        %v560 = vrot.slane %v558, 7
        %v561 = vshll.u32 %v474, 16
        %v563 = vor.u32 %v560, %v561
        %v565 = vshrl.u32 %v475, 16
        %v567 = vrot.slane %v565, 7
        %v568 = vshll.u32 %v475, 16
        %v570 = vor.u32 %v567, %v568
        %v572 = vshrl.u32 %v476, 16
        %v574 = vrot.slane %v572, 7
        %v575 = vshll.u32 %v476, 16
        %v577 = vor.u32 %v574, %v575
        %v579 = vshrl.u32 %v477, 16
        %v581 = vrot.slane %v579, 7
        %v582 = vshll.u32 %v477, 16
        %v584 = vor.u32 %v581, %v582
        %v586 = vshrl.u32 %v478, 16
        %v588 = vrot.slane %v586, 7
        %v589 = vshll.u32 %v478, 16
        %v591 = vor.u32 %v588, %v589
        %v593 = vshrl.u32 %v479, 16
        %v595 = vrot.slane %v593, 7
        %v596 = vshll.u32 %v479, 16
        %v598 = vor.u32 %v595, %v596
        %vm633 = vcmask 1040384
        %vm634 = vsmask.f32 256
        %vm635 = vmand %vm633, %vm634
        %v636 = vsel %vm635, 0, %v486
        %v637 = vsel %vm635, 0, %v493
        %v638 = vsel %vm635, 0, %v500
        %v639 = vsel %vm635, 0, %v507
        %v640 = vsel %vm635, 0, %v514
        %v641 = vsel %vm635, 0, %v521
        %v642 = vsel %vm635, 0, %v528
        %v643 = vsel %vm635, 0, %v535
        %v644 = vsel %vm635, 0, %v542
        %v645 = vsel %vm635, 0, %v549
        %v646 = vsel %vm635, 0, %v556
        %v647 = vsel %vm635, 0, %v563
        %v648 = vsel %vm635, 0, %v570
        %v649 = vsel %vm635, 0, %v577
        %v650 = vsel %vm635, 0, %v584
        %v651 = vsel %vm635, 0, %v591
        %v652 = vsel %vm635, 0, %v598
        %v653 = vsel %vm635, %v483, 0
        %v654 = vsel %vm635, %v490, 0
        %v655 = vsel %vm635, %v497, 0
        %v656 = vsel %vm635, %v504, 0
        %v657 = vsel %vm635, %v511, 0
        %v658 = vsel %vm635, %v518, 0
        %v659 = vsel %vm635, %v525, 0
        %v660 = vsel %vm635, %v532, 0
        %v661 = vsel %vm635, %v539, 0
        %v662 = vsel %vm635, %v546, 0
        %v663 = vsel %vm635, %v553, 0
        %v664 = vsel %vm635, %v560, 0
        %v665 = vsel %vm635, %v567, 0
        %v666 = vsel %vm635, %v574, 0
        %v667 = vsel %vm635, %v581, 0
        %v668 = vsel %vm635, %v588, 0
        %v669 = vsel %vm635, %v595, 0
        %vm670 = vsmask.f32 7424
        %v672 = vshrl.u32 %v636, 16
        %v674 = vshll.u32 %v636, 16
        %v676 = vrot.slane %v674, 1
        %v677 = vor.u32 %v672, %v676
        %v679 = vshll.u32 %v653, 16
        %v681 = vrot.slane %v679, 1
        %v682 = vsel %vm670, %v677, %v681
        %v684 = vshrl.u32 %v637, 16
        %v686 = vshll.u32 %v637, 16
        %v688 = vrot.slane %v686, 1
        %v689 = vor.u32 %v684, %v688
        %v691 = vshll.u32 %v654, 16
        %v693 = vrot.slane %v691, 1
        %v694 = vsel %vm670, %v689, %v693
        %v696 = vshrl.u32 %v638, 16
        %v698 = vshll.u32 %v638, 16
        %v700 = vrot.slane %v698, 1
        %v701 = vor.u32 %v696, %v700
        %v703 = vshll.u32 %v655, 16
        %v705 = vrot.slane %v703, 1
        %v706 = vsel %vm670, %v701, %v705
        %v708 = vshrl.u32 %v639, 16
        %v710 = vshll.u32 %v639, 16
        %v712 = vrot.slane %v710, 1
        %v713 = vor.u32 %v708, %v712
        %v715 = vshll.u32 %v656, 16
        %v717 = vrot.slane %v715, 1
        %v718 = vsel %vm670, %v713, %v717
        %v720 = vshrl.u32 %v640, 16
        %v722 = vshll.u32 %v640, 16
        %v724 = vrot.slane %v722, 1
        %v725 = vor.u32 %v720, %v724
        %v727 = vshll.u32 %v657, 16
        %v729 = vrot.slane %v727, 1
        %v730 = vsel %vm670, %v725, %v729
        %v732 = vshrl.u32 %v641, 16
        %v734 = vshll.u32 %v641, 16
        %v736 = vrot.slane %v734, 1
        %v737 = vor.u32 %v732, %v736
        %v739 = vshll.u32 %v658, 16
        %v741 = vrot.slane %v739, 1
        %v742 = vsel %vm670, %v737, %v741
        %v744 = vshrl.u32 %v642, 16
        %v746 = vshll.u32 %v642, 16
        %v748 = vrot.slane %v746, 1
        %v749 = vor.u32 %v744, %v748
        %v751 = vshll.u32 %v659, 16
        %v753 = vrot.slane %v751, 1
        %v754 = vsel %vm670, %v749, %v753
        %v756 = vshrl.u32 %v643, 16
        %v758 = vshll.u32 %v643, 16
        %v760 = vrot.slane %v758, 1
        %v761 = vor.u32 %v756, %v760
        %v763 = vshll.u32 %v660, 16
        %v765 = vrot.slane %v763, 1
        %v766 = vsel %vm670, %v761, %v765
        %v768 = vshrl.u32 %v644, 16
        %v770 = vshll.u32 %v644, 16
        %v772 = vrot.slane %v770, 1
        %v773 = vor.u32 %v768, %v772
        %v775 = vshll.u32 %v661, 16
        %v777 = vrot.slane %v775, 1
        %v778 = vsel %vm670, %v773, %v777
        %v780 = vshrl.u32 %v645, 16
        %v782 = vshll.u32 %v645, 16
        %v784 = vrot.slane %v782, 1
        %v785 = vor.u32 %v780, %v784
        %v787 = vshll.u32 %v662, 16
        %v789 = vrot.slane %v787, 1
        %v790 = vsel %vm670, %v785, %v789
        %v792 = vshrl.u32 %v646, 16
        %v794 = vshll.u32 %v646, 16
        %v796 = vrot.slane %v794, 1
        %v797 = vor.u32 %v792, %v796
        %v799 = vshll.u32 %v663, 16
        %v801 = vrot.slane %v799, 1
        %v802 = vsel %vm670, %v797, %v801
        %v804 = vshrl.u32 %v647, 16
        %v806 = vshll.u32 %v647, 16
        %v808 = vrot.slane %v806, 1
        %v809 = vor.u32 %v804, %v808
        %v811 = vshll.u32 %v664, 16
        %v813 = vrot.slane %v811, 1
        %v814 = vsel %vm670, %v809, %v813
        %v816 = vshrl.u32 %v648, 16
        %v818 = vshll.u32 %v648, 16
        %v820 = vrot.slane %v818, 1
        %v821 = vor.u32 %v816, %v820
        %v823 = vshll.u32 %v665, 16
        %v825 = vrot.slane %v823, 1
        %v826 = vsel %vm670, %v821, %v825
        %v828 = vshrl.u32 %v649, 16
        %v830 = vshll.u32 %v649, 16
        %v832 = vrot.slane %v830, 1
        %v833 = vor.u32 %v828, %v832
        %v835 = vshll.u32 %v666, 16
        %v837 = vrot.slane %v835, 1
        %v838 = vsel %vm670, %v833, %v837
        %v840 = vshrl.u32 %v650, 16
        %v842 = vshll.u32 %v650, 16
        %v844 = vrot.slane %v842, 1
        %v845 = vor.u32 %v840, %v844
        %v847 = vshll.u32 %v667, 16
        %v849 = vrot.slane %v847, 1
        %v850 = vsel %vm670, %v845, %v849
        %v852 = vshrl.u32 %v651, 16
        %v854 = vshll.u32 %v651, 16
        %v856 = vrot.slane %v854, 1
        %v857 = vor.u32 %v852, %v856
        %v859 = vshll.u32 %v668, 16
        %v861 = vrot.slane %v859, 1
        %v862 = vsel %vm670, %v857, %v861
        %vm895 = vcmask 1046528
        %v896 = vrot.slane %v636, 1
        %v897 = vrot.slane %v653, 1
        %v898 = vsel %vm895, %v896, %v897
        %v899 = vrot.slane %v637, 1
        %v900 = vrot.slane %v654, 1
        %v901 = vsel %vm895, %v899, %v900
        %v902 = vrot.slane %v638, 1
        %v903 = vrot.slane %v655, 1
        %v904 = vsel %vm895, %v902, %v903
        %v905 = vrot.slane %v639, 1
        %v906 = vrot.slane %v656, 1
        %v907 = vsel %vm895, %v905, %v906
        %v908 = vrot.slane %v640, 1
        %v909 = vrot.slane %v657, 1
        %v910 = vsel %vm895, %v908, %v909
        %v911 = vrot.slane %v641, 1
        %v912 = vrot.slane %v658, 1
        %v913 = vsel %vm895, %v911, %v912
        %v914 = vrot.slane %v642, 1
        %v915 = vrot.slane %v659, 1
        %v916 = vsel %vm895, %v914, %v915
        %v917 = vrot.slane %v643, 1
        %v918 = vrot.slane %v660, 1
        %v919 = vsel %vm895, %v917, %v918
        %v920 = vrot.slane %v644, 1
        %v921 = vrot.slane %v661, 1
        %v922 = vsel %vm895, %v920, %v921
        %v923 = vrot.slane %v645, 1
        %v924 = vrot.slane %v662, 1
        %v925 = vsel %vm895, %v923, %v924
        %v926 = vrot.slane %v646, 1
        %v927 = vrot.slane %v663, 1
        %v928 = vsel %vm895, %v926, %v927
        %v929 = vrot.slane %v647, 1
        %v930 = vrot.slane %v664, 1
        %v931 = vsel %vm895, %v929, %v930
        %v932 = vrot.slane %v648, 1
        %v933 = vrot.slane %v665, 1
        %v934 = vsel %vm895, %v932, %v933
        %v935 = vrot.slane %v649, 1
        %v936 = vrot.slane %v666, 1
        %v937 = vsel %vm895, %v935, %v936
        %v938 = vrot.slane %v650, 1
        %v939 = vrot.slane %v667, 1
        %v940 = vsel %vm895, %v938, %v939
        %v941 = vrot.slane %v651, 1
        %v942 = vrot.slane %v668, 1
        %v943 = vsel %vm895, %v941, %v942
        %v945 = vshrl.u32 %v652, 16
        %v947 = vshll.u32 %v652, 16
        %v949 = vrot.slane %v947, 1
        %v950 = vor.u32 %v945, %v949
        %v952 = vshll.u32 %v669, 16
        %v954 = vrot.slane %v952, 1
        %v955 = vsel %vm670, %v950, %v954
        %v958 = vrot.slane %v652, 1
        %v959 = vrot.slane %v669, 1
        %v960 = vsel %vm895, %v958, %v959
        %961 = vrot.lane.b32.xlu0 %v682, 8
        %v962 = vpop.permute.xlu0 %961
        %963 = vrot.lane.b32.xlu0 %v694, 8
        %v964 = vpop.permute.xlu0 %963
        %965 = vrot.lane.b32.xlu0 %v706, 8
        %v966 = vpop.permute.xlu0 %965
        %967 = vrot.lane.b32.xlu0 %v718, 8
        %v968 = vpop.permute.xlu0 %967
        %969 = vrot.lane.b32.xlu0 %v730, 8
        %v970 = vpop.permute.xlu0 %969
        %971 = vrot.lane.b32.xlu0 %v742, 8
        %v972 = vpop.permute.xlu0 %971
        %973 = vrot.lane.b32.xlu0 %v754, 8
        %v974 = vpop.permute.xlu0 %973
        %975 = vrot.lane.b32.xlu0 %v766, 8
        %v976 = vpop.permute.xlu0 %975
        %977 = vrot.lane.b32.xlu0 %v778, 8
        %v978 = vpop.permute.xlu0 %977
        %979 = vrot.lane.b32.xlu0 %v790, 8
        %v980 = vpop.permute.xlu0 %979
        %981 = vrot.lane.b32.xlu0 %v802, 8
        %v982 = vpop.permute.xlu0 %981
        %983 = vrot.lane.b32.xlu0 %v814, 8
        %v984 = vpop.permute.xlu0 %983
        %985 = vrot.lane.b32.xlu0 %v826, 8
        %v986 = vpop.permute.xlu0 %985
        %987 = vrot.lane.b32.xlu0 %v838, 8
        %v988 = vpop.permute.xlu0 %987
        %989 = vrot.lane.b32.xlu0 %v850, 8
        %v990 = vpop.permute.xlu0 %989
        %991 = vrot.lane.b32.xlu0 %v862, 8
        %v992 = vpop.permute.xlu0 %991
        %993 = vrot.lane.b32.xlu0 %v898, 16
        %v994 = vpop.permute.xlu0 %993
        %995 = vrot.lane.b32.xlu0 %v901, 16
        %v996 = vpop.permute.xlu0 %995
        %997 = vrot.lane.b32.xlu0 %v904, 16
        %v998 = vpop.permute.xlu0 %997
        %999 = vrot.lane.b32.xlu0 %v907, 16
        %v1000 = vpop.permute.xlu0 %999
        %1001 = vrot.lane.b32.xlu0 %v910, 16
        %v1002 = vpop.permute.xlu0 %1001
        %1003 = vrot.lane.b32.xlu0 %v913, 16
        %v1004 = vpop.permute.xlu0 %1003
        %1005 = vrot.lane.b32.xlu0 %v916, 16
        %v1006 = vpop.permute.xlu0 %1005
        %1007 = vrot.lane.b32.xlu0 %v919, 16
        %v1008 = vpop.permute.xlu0 %1007
        %1009 = vrot.lane.b32.xlu0 %v922, 16
        %v1010 = vpop.permute.xlu0 %1009
        %1011 = vrot.lane.b32.xlu0 %v925, 16
        %v1012 = vpop.permute.xlu0 %1011
        %1013 = vrot.lane.b32.xlu0 %v928, 16
        %v1014 = vpop.permute.xlu0 %1013
        %1015 = vrot.lane.b32.xlu0 %v931, 16
        %v1016 = vpop.permute.xlu0 %1015
        %1017 = vrot.lane.b32.xlu0 %v934, 16
        %v1018 = vpop.permute.xlu0 %1017
        %1019 = vrot.lane.b32.xlu0 %v937, 16
        %v1020 = vpop.permute.xlu0 %1019
        %1021 = vrot.lane.b32.xlu0 %v940, 16
        %v1022 = vpop.permute.xlu0 %1021
        %1023 = vrot.lane.b32.xlu0 %v943, 16
        %v1024 = vpop.permute.xlu0 %1023
        %1025 = vrot.lane.b32.xlu0 %v637, 24
        %v1026 = vpop.permute.xlu0 %1025
        %1027 = vrot.lane.b32.xlu0 %v638, 24
        %v1028 = vpop.permute.xlu0 %1027
        %1029 = vrot.lane.b32.xlu0 %v639, 24
        %v1030 = vpop.permute.xlu0 %1029
        %1031 = vrot.lane.b32.xlu0 %v640, 24
        %v1032 = vpop.permute.xlu0 %1031
        %1033 = vrot.lane.b32.xlu0 %v641, 24
        %v1034 = vpop.permute.xlu0 %1033
        %1035 = vrot.lane.b32.xlu0 %v642, 24
        %v1036 = vpop.permute.xlu0 %1035
        %1037 = vrot.lane.b32.xlu0 %v643, 24
        %v1038 = vpop.permute.xlu0 %1037
        %1039 = vrot.lane.b32.xlu0 %v644, 24
        %v1040 = vpop.permute.xlu0 %1039
        %1041 = vrot.lane.b32.xlu0 %v645, 24
        %v1042 = vpop.permute.xlu0 %1041
        %1043 = vrot.lane.b32.xlu0 %v646, 24
        %v1044 = vpop.permute.xlu0 %1043
        %1045 = vrot.lane.b32.xlu0 %v647, 24
        %v1046 = vpop.permute.xlu0 %1045
        %1047 = vrot.lane.b32.xlu0 %v648, 24
        %v1048 = vpop.permute.xlu0 %1047
        %1049 = vrot.lane.b32.xlu0 %v649, 24
        %v1050 = vpop.permute.xlu0 %1049
        %1051 = vrot.lane.b32.xlu0 %v650, 24
        %v1052 = vpop.permute.xlu0 %1051
        %1053 = vrot.lane.b32.xlu0 %v651, 24
        %v1054 = vpop.permute.xlu0 %1053
        %1055 = vrot.lane.b32.xlu0 %v652, 24
        %v1056 = vpop.permute.xlu0 %1055
        %1057 = vrot.lane.b32.xlu0 %v694, 32
        %v1058 = vpop.permute.xlu0 %1057
        %1059 = vrot.lane.b32.xlu0 %v706, 32
        %v1060 = vpop.permute.xlu0 %1059
        %1061 = vrot.lane.b32.xlu0 %v718, 32
        %v1062 = vpop.permute.xlu0 %1061
        %1063 = vrot.lane.b32.xlu0 %v730, 32
        %v1064 = vpop.permute.xlu0 %1063
        %1065 = vrot.lane.b32.xlu0 %v742, 32
        %v1066 = vpop.permute.xlu0 %1065
        %1067 = vrot.lane.b32.xlu0 %v754, 32
        %v1068 = vpop.permute.xlu0 %1067
        %1069 = vrot.lane.b32.xlu0 %v766, 32
        %v1070 = vpop.permute.xlu0 %1069
        %1071 = vrot.lane.b32.xlu0 %v778, 32
        %v1072 = vpop.permute.xlu0 %1071
        %1073 = vrot.lane.b32.xlu0 %v790, 32
        %v1074 = vpop.permute.xlu0 %1073
        %1075 = vrot.lane.b32.xlu0 %v802, 32
        %v1076 = vpop.permute.xlu0 %1075
        %1077 = vrot.lane.b32.xlu0 %v814, 32
        %v1078 = vpop.permute.xlu0 %1077
        %1079 = vrot.lane.b32.xlu0 %v826, 32
        %v1080 = vpop.permute.xlu0 %1079
        %1081 = vrot.lane.b32.xlu0 %v838, 32
        %v1082 = vpop.permute.xlu0 %1081
        %1083 = vrot.lane.b32.xlu0 %v850, 32
        %v1084 = vpop.permute.xlu0 %1083
        %1085 = vrot.lane.b32.xlu0 %v862, 32
        %v1086 = vpop.permute.xlu0 %1085
        %1087 = vrot.lane.b32.xlu0 %v955, 32
        %v1088 = vpop.permute.xlu0 %1087
        %1089 = vrot.lane.b32.xlu0 %v901, 40
        %v1090 = vpop.permute.xlu0 %1089
        %1091 = vrot.lane.b32.xlu0 %v904, 40
        %v1092 = vpop.permute.xlu0 %1091
        %1093 = vrot.lane.b32.xlu0 %v907, 40
        %v1094 = vpop.permute.xlu0 %1093
        %1095 = vrot.lane.b32.xlu0 %v910, 40
        %v1096 = vpop.permute.xlu0 %1095
        %1097 = vrot.lane.b32.xlu0 %v913, 40
        %v1098 = vpop.permute.xlu0 %1097
        %1099 = vrot.lane.b32.xlu0 %v916, 40
        %v1100 = vpop.permute.xlu0 %1099
        %1101 = vrot.lane.b32.xlu0 %v919, 40
        %v1102 = vpop.permute.xlu0 %1101
        %1103 = vrot.lane.b32.xlu0 %v922, 40
        %v1104 = vpop.permute.xlu0 %1103
        %1105 = vrot.lane.b32.xlu0 %v925, 40
        %v1106 = vpop.permute.xlu0 %1105
        %1107 = vrot.lane.b32.xlu0 %v928, 40
        %v1108 = vpop.permute.xlu0 %1107
        %1109 = vrot.lane.b32.xlu0 %v931, 40
        %v1110 = vpop.permute.xlu0 %1109
        %1111 = vrot.lane.b32.xlu0 %v934, 40
        %v1112 = vpop.permute.xlu0 %1111
        %1113 = vrot.lane.b32.xlu0 %v937, 40
        %v1114 = vpop.permute.xlu0 %1113
        %1115 = vrot.lane.b32.xlu0 %v940, 40
        %v1116 = vpop.permute.xlu0 %1115
        %1117 = vrot.lane.b32.xlu0 %v943, 40
        %v1118 = vpop.permute.xlu0 %1117
        %1119 = vrot.lane.b32.xlu0 %v960, 40
        %v1120 = vpop.permute.xlu0 %1119
        %1121 = vrot.lane.b32.xlu0 %v638, 48
        %v1122 = vpop.permute.xlu0 %1121
        %1123 = vrot.lane.b32.xlu0 %v639, 48
        %v1124 = vpop.permute.xlu0 %1123
        %1125 = vrot.lane.b32.xlu0 %v640, 48
        %v1126 = vpop.permute.xlu0 %1125
        %1127 = vrot.lane.b32.xlu0 %v641, 48
        %v1128 = vpop.permute.xlu0 %1127
        %1129 = vrot.lane.b32.xlu0 %v642, 48
        %v1130 = vpop.permute.xlu0 %1129
        %1131 = vrot.lane.b32.xlu0 %v643, 48
        %v1132 = vpop.permute.xlu0 %1131
        %1133 = vrot.lane.b32.xlu0 %v644, 48
        %v1134 = vpop.permute.xlu0 %1133
        %1135 = vrot.lane.b32.xlu0 %v645, 48
        %v1136 = vpop.permute.xlu0 %1135
        %1137 = vrot.lane.b32.xlu0 %v646, 48
        %v1138 = vpop.permute.xlu0 %1137
        %1139 = vrot.lane.b32.xlu0 %v647, 48
        %v1140 = vpop.permute.xlu0 %1139
        %1141 = vrot.lane.b32.xlu0 %v648, 48
        %v1142 = vpop.permute.xlu0 %1141
        %1143 = vrot.lane.b32.xlu0 %v649, 48
        %v1144 = vpop.permute.xlu0 %1143
        %1145 = vrot.lane.b32.xlu0 %v650, 48
        %v1146 = vpop.permute.xlu0 %1145
        %1147 = vrot.lane.b32.xlu0 %v651, 48
        %v1148 = vpop.permute.xlu0 %1147
        %1149 = vrot.lane.b32.xlu0 %v652, 48
        %v1150 = vpop.permute.xlu0 %1149
        %1151 = vrot.lane.b32.xlu0 %v636, 48
        %v1152 = vpop.permute.xlu0 %1151
        %1153 = vrot.lane.b32.xlu0 %v706, 56
        %v1154 = vpop.permute.xlu0 %1153
        %1155 = vrot.lane.b32.xlu0 %v718, 56
        %v1156 = vpop.permute.xlu0 %1155
        %1157 = vrot.lane.b32.xlu0 %v730, 56
        %v1158 = vpop.permute.xlu0 %1157
        %1159 = vrot.lane.b32.xlu0 %v742, 56
        %v1160 = vpop.permute.xlu0 %1159
        %1161 = vrot.lane.b32.xlu0 %v754, 56
        %v1162 = vpop.permute.xlu0 %1161
        %1163 = vrot.lane.b32.xlu0 %v766, 56
        %v1164 = vpop.permute.xlu0 %1163
        %1165 = vrot.lane.b32.xlu0 %v778, 56
        %v1166 = vpop.permute.xlu0 %1165
        %1167 = vrot.lane.b32.xlu0 %v790, 56
        %v1168 = vpop.permute.xlu0 %1167
        %1169 = vrot.lane.b32.xlu0 %v802, 56
        %v1170 = vpop.permute.xlu0 %1169
        %1171 = vrot.lane.b32.xlu0 %v814, 56
        %v1172 = vpop.permute.xlu0 %1171
        %1173 = vrot.lane.b32.xlu0 %v826, 56
        %v1174 = vpop.permute.xlu0 %1173
        %1175 = vrot.lane.b32.xlu0 %v838, 56
        %v1176 = vpop.permute.xlu0 %1175
        %1177 = vrot.lane.b32.xlu0 %v850, 56
        %v1178 = vpop.permute.xlu0 %1177
        %1179 = vrot.lane.b32.xlu0 %v862, 56
        %v1180 = vpop.permute.xlu0 %1179
        %1181 = vrot.lane.b32.xlu0 %v955, 56
        %v1182 = vpop.permute.xlu0 %1181
        %1183 = vrot.lane.b32.xlu0 %v682, 56
        %v1184 = vpop.permute.xlu0 %1183
        %1185 = vrot.lane.b32.xlu0 %v904, 64
        %v1186 = vpop.permute.xlu0 %1185
        %1187 = vrot.lane.b32.xlu0 %v907, 64
        %v1188 = vpop.permute.xlu0 %1187
        %1189 = vrot.lane.b32.xlu0 %v910, 64
        %v1190 = vpop.permute.xlu0 %1189
        %1191 = vrot.lane.b32.xlu0 %v913, 64
        %v1192 = vpop.permute.xlu0 %1191
        %1193 = vrot.lane.b32.xlu0 %v916, 64
        %v1194 = vpop.permute.xlu0 %1193
        %1195 = vrot.lane.b32.xlu0 %v919, 64
        %v1196 = vpop.permute.xlu0 %1195
        %1197 = vrot.lane.b32.xlu0 %v922, 64
        %v1198 = vpop.permute.xlu0 %1197
        %1199 = vrot.lane.b32.xlu0 %v925, 64
        %v1200 = vpop.permute.xlu0 %1199
        %1201 = vrot.lane.b32.xlu0 %v928, 64
        %v1202 = vpop.permute.xlu0 %1201
        %1203 = vrot.lane.b32.xlu0 %v931, 64
        %v1204 = vpop.permute.xlu0 %1203
        %1205 = vrot.lane.b32.xlu0 %v934, 64
        %v1206 = vpop.permute.xlu0 %1205
        %1207 = vrot.lane.b32.xlu0 %v937, 64
        %v1208 = vpop.permute.xlu0 %1207
        %1209 = vrot.lane.b32.xlu0 %v940, 64
        %v1210 = vpop.permute.xlu0 %1209
        %1211 = vrot.lane.b32.xlu0 %v943, 64
        %v1212 = vpop.permute.xlu0 %1211
        %1213 = vrot.lane.b32.xlu0 %v960, 64
        %v1214 = vpop.permute.xlu0 %1213
        %1215 = vrot.lane.b32.xlu0 %v898, 64
        %v1216 = vpop.permute.xlu0 %1215
        %vm1217 = vcmask 64512
        %v1219 = vsel %vm1217, %v636, %v962
        %v1221 = vsel %vm1217, %v637, %v964
        %v1223 = vsel %vm1217, %v638, %v966
        %v1225 = vsel %vm1217, %v639, %v968
        %v1227 = vsel %vm1217, %v640, %v970
        %v1229 = vsel %vm1217, %v641, %v972
        %v1231 = vsel %vm1217, %v642, %v974
        %v1233 = vsel %vm1217, %v643, %v976
        %v1235 = vsel %vm1217, %v644, %v978
        %v1237 = vsel %vm1217, %v645, %v980
        %v1239 = vsel %vm1217, %v646, %v982
        %v1241 = vsel %vm1217, %v647, %v984
        %v1243 = vsel %vm1217, %v648, %v986
        %v1245 = vsel %vm1217, %v649, %v988
        %v1247 = vsel %vm1217, %v650, %v990
        %v1249 = vsel %vm1217, %v651, %v992
        %vm1250 = vcmask 130048
        %v1252 = vsel %vm1250, %v1219, %v994
        %v1254 = vsel %vm1250, %v1221, %v996
        %v1256 = vsel %vm1250, %v1223, %v998
        %v1258 = vsel %vm1250, %v1225, %v1000
        %v1260 = vsel %vm1250, %v1227, %v1002
        %v1262 = vsel %vm1250, %v1229, %v1004
        %v1264 = vsel %vm1250, %v1231, %v1006
        %v1266 = vsel %vm1250, %v1233, %v1008
        %v1268 = vsel %vm1250, %v1235, %v1010
        %v1270 = vsel %vm1250, %v1237, %v1012
        %v1272 = vsel %vm1250, %v1239, %v1014
        %v1274 = vsel %vm1250, %v1241, %v1016
        %v1276 = vsel %vm1250, %v1243, %v1018
        %v1278 = vsel %vm1250, %v1245, %v1020
        %v1280 = vsel %vm1250, %v1247, %v1022
        %v1282 = vsel %vm1250, %v1249, %v1024
        %vm1283 = vcmask 195584
        %v1285 = vsel %vm1283, %v1252, %v1026
        %v1287 = vsel %vm1283, %v1254, %v1028
        %v1289 = vsel %vm1283, %v1256, %v1030
        %v1291 = vsel %vm1283, %v1258, %v1032
        %v1293 = vsel %vm1283, %v1260, %v1034
        %v1295 = vsel %vm1283, %v1262, %v1036
        %v1297 = vsel %vm1283, %v1264, %v1038
        %v1299 = vsel %vm1283, %v1266, %v1040
        %v1301 = vsel %vm1283, %v1268, %v1042
        %v1303 = vsel %vm1283, %v1270, %v1044
        %v1305 = vsel %vm1283, %v1272, %v1046
        %v1307 = vsel %vm1283, %v1274, %v1048
        %v1309 = vsel %vm1283, %v1276, %v1050
        %v1311 = vsel %vm1283, %v1278, %v1052
        %v1313 = vsel %vm1283, %v1280, %v1054
        %v1315 = vsel %vm1283, %v1282, %v1056
        %vm1316 = vcmask 261120
        %v1318 = vsel %vm1316, %v1285, %v1058
        %v1320 = vsel %vm1316, %v1287, %v1060
        %v1322 = vsel %vm1316, %v1289, %v1062
        %v1324 = vsel %vm1316, %v1291, %v1064
        %v1326 = vsel %vm1316, %v1293, %v1066
        %v1328 = vsel %vm1316, %v1295, %v1068
        %v1330 = vsel %vm1316, %v1297, %v1070
        %v1332 = vsel %vm1316, %v1299, %v1072
        %v1334 = vsel %vm1316, %v1301, %v1074
        %v1336 = vsel %vm1316, %v1303, %v1076
        %v1338 = vsel %vm1316, %v1305, %v1078
        %v1340 = vsel %vm1316, %v1307, %v1080
        %v1342 = vsel %vm1316, %v1309, %v1082
        %v1344 = vsel %vm1316, %v1311, %v1084
        %v1346 = vsel %vm1316, %v1313, %v1086
        %v1348 = vsel %vm1316, %v1315, %v1088
        %vm1349 = vcmask 326656
        %v1351 = vsel %vm1349, %v1318, %v1090
        %v1353 = vsel %vm1349, %v1320, %v1092
        %v1355 = vsel %vm1349, %v1322, %v1094
        %v1357 = vsel %vm1349, %v1324, %v1096
        %v1359 = vsel %vm1349, %v1326, %v1098
        %v1361 = vsel %vm1349, %v1328, %v1100
        %v1363 = vsel %vm1349, %v1330, %v1102
        %v1365 = vsel %vm1349, %v1332, %v1104
        %v1367 = vsel %vm1349, %v1334, %v1106
        %v1369 = vsel %vm1349, %v1336, %v1108
        %v1371 = vsel %vm1349, %v1338, %v1110
        %v1373 = vsel %vm1349, %v1340, %v1112
        %v1375 = vsel %vm1349, %v1342, %v1114
        %v1377 = vsel %vm1349, %v1344, %v1116
        %v1379 = vsel %vm1349, %v1346, %v1118
        %v1381 = vsel %vm1349, %v1348, %v1120
        %vm1382 = vcmask 392192
        %v1384 = vsel %vm1382, %v1351, %v1122
        %v1386 = vsel %vm1382, %v1353, %v1124
        %v1388 = vsel %vm1382, %v1355, %v1126
        %v1390 = vsel %vm1382, %v1357, %v1128
        %v1392 = vsel %vm1382, %v1359, %v1130
        %v1394 = vsel %vm1382, %v1361, %v1132
        %v1396 = vsel %vm1382, %v1363, %v1134
        %v1398 = vsel %vm1382, %v1365, %v1136
        %v1400 = vsel %vm1382, %v1367, %v1138
        %v1402 = vsel %vm1382, %v1369, %v1140
        %v1404 = vsel %vm1382, %v1371, %v1142
        %v1406 = vsel %vm1382, %v1373, %v1144
        %v1408 = vsel %vm1382, %v1375, %v1146
        %v1410 = vsel %vm1382, %v1377, %v1148
        %v1412 = vsel %vm1382, %v1379, %v1150
        %v1414 = vsel %vm1382, %v1381, %v1152
        %vm1415 = vcmask 457728
        %v1417 = vsel %vm1415, %v1384, %v1154
        %v1419 = vsel %vm1415, %v1386, %v1156
        %v1421 = vsel %vm1415, %v1388, %v1158
        %v1423 = vsel %vm1415, %v1390, %v1160
        %v1425 = vsel %vm1415, %v1392, %v1162
        %v1427 = vsel %vm1415, %v1394, %v1164
        %v1429 = vsel %vm1415, %v1396, %v1166
        %v1431 = vsel %vm1415, %v1398, %v1168
        %v1433 = vsel %vm1415, %v1400, %v1170
        %v1435 = vsel %vm1415, %v1402, %v1172
        %v1437 = vsel %vm1415, %v1404, %v1174
        %v1439 = vsel %vm1415, %v1406, %v1176
        %v1441 = vsel %vm1415, %v1408, %v1178
        %v1443 = vsel %vm1415, %v1410, %v1180
        %v1445 = vsel %vm1415, %v1412, %v1182
        %v1447 = vsel %vm1415, %v1414, %v1184
        %vm1448 = vcmask 523264
        %v1450 = vsel %vm1448, %v1417, %v1186
        %v1452 = vsel %vm1448, %v1419, %v1188
        %v1454 = vsel %vm1448, %v1421, %v1190
        %v1456 = vsel %vm1448, %v1423, %v1192
        %v1458 = vsel %vm1448, %v1425, %v1194
        %v1460 = vsel %vm1448, %v1427, %v1196
        %v1462 = vsel %vm1448, %v1429, %v1198
        %v1464 = vsel %vm1448, %v1431, %v1200
        %v1466 = vsel %vm1448, %v1433, %v1202
        %v1468 = vsel %vm1448, %v1435, %v1204
        %v1470 = vsel %vm1448, %v1437, %v1206
        %v1472 = vsel %vm1448, %v1439, %v1208
        %v1474 = vsel %vm1448, %v1441, %v1210
        %v1476 = vsel %vm1448, %v1443, %v1212
        %v1478 = vsel %vm1448, %v1445, %v1214
        %v1480 = vsel %vm1448, %v1447, %v1216
        %v1482 = vperm.slane %v399, 0
        %v1493 = vunpack.c.l.b16 %v390
        %v1494 = vunpack.c.l.b16 %v391
        %v1495 = vunpack.c.l.b16 %v392
        %v1496 = vunpack.c.l.b16 %v393
        %v1497 = vunpack.c.l.b16 %v394
        %v1498 = vunpack.c.l.b16 %v395
        %v1499 = vunpack.c.l.b16 %v396
        %v1500 = vunpack.c.l.b16 %v397
        %v1501 = vunpack.c.l.b16 %v398
        %v1502 = vpack.c.b16 %v1494, %v1493
        %v1503 = vpack.c.b16 %v1496, %v1495
        %v1504 = vpack.c.b16 %v1498, %v1497
        %v1505 = vpack.c.b16 %v1500, %v1499
        %v1506 = vpack.c.b16 %v1501, %v1501
        %vm1511 = vcmask 588800
        %v1512 = vsel %vm1511, %v1450, 0
        %v1514 = vsel %vm1511, %v1452, 0
        %v1516 = vsel %vm1511, %v1454, 0
        %v1518 = vsel %vm1511, %v1456, 0
        %v1520 = vsel %vm1511, %v1458, 0
        %v1522 = vsel %vm1511, %v1460, 0
        %v1524 = vsel %vm1511, %v1462, 0
        %v1526 = vsel %vm1511, %v1464, 0
        %v1528 = vsel %vm1511, %v1466, 0
        %v1530 = vsel %vm1511, %v1468, 0
        %v1532 = vsel %vm1511, %v1470, 0
        %v1534 = vsel %vm1511, %v1472, 0
        %v1536 = vsel %vm1511, %v1474, 0
        %v1538 = vsel %vm1511, %v1476, 0
        %v1540 = vsel %vm1511, %v1478, 0
        %v1542 = vsel %vm1511, %v1480, 0
        %vm1544 = vcmask 1043456
        %v1546 = vsel %vm1544, %v1506, 0
        %1548 = vmatpush.bf16.msra.mxu0 0
        %1549 = vmatpush.bf16.msra.mxu0 0
        %1550 = vmatpush.bf16.msra.mxu0 0
        %1551 = vmatpush.bf16.msra.mxu0 %v1546
        %1552 = vmatpush.bf16.msra.mxu0 %v1505
        %1553 = vmatpush.bf16.msra.mxu0 %v1504
        %1554 = vmatpush.bf16.msra.mxu0 %v1503
        %1555 = vmatpush.bf16.msra.mxu0 %v1502
        %1556 = vmatmul.bf16.gmra.mxu0 %v1512
        %v1557 = vpop.f32.mrf.mxu0
        %v1558 = vadd.f32 %v1482, %v1557
        %v1559 = vpop.f32.mrf.mxu0
        %v1560 = vadd.f32 %v1482, %v1559
        %1561 = vmatmul.bf16.gmra.mxu0 %v1514
        %v1562 = vpop.f32.mrf.mxu0
        %v1563 = vadd.f32 %v1482, %v1562
        %v1564 = vpop.f32.mrf.mxu0
        %v1565 = vadd.f32 %v1482, %v1564
        %1566 = vmatmul.bf16.gmra.mxu0 %v1516
        %v1567 = vpop.f32.mrf.mxu0
        %v1568 = vadd.f32 %v1482, %v1567
        %v1569 = vpop.f32.mrf.mxu0
        %v1570 = vadd.f32 %v1482, %v1569
        %1571 = vmatmul.bf16.gmra.mxu0 %v1518
        %v1572 = vpop.f32.mrf.mxu0
        %v1573 = vadd.f32 %v1482, %v1572
        %v1574 = vpop.f32.mrf.mxu0
        %v1575 = vadd.f32 %v1482, %v1574
        %1576 = vmatmul.bf16.gmra.mxu0 %v1520
        %v1577 = vpop.f32.mrf.mxu0
        %v1578 = vadd.f32 %v1482, %v1577
        %v1579 = vpop.f32.mrf.mxu0
        %v1580 = vadd.f32 %v1482, %v1579
        %1581 = vmatmul.bf16.gmra.mxu0 %v1522
        %v1582 = vpop.f32.mrf.mxu0
        %v1583 = vadd.f32 %v1482, %v1582
        %v1584 = vpop.f32.mrf.mxu0
        %v1585 = vadd.f32 %v1482, %v1584
        %1586 = vmatmul.bf16.gmra.mxu0 %v1524
        %v1587 = vpop.f32.mrf.mxu0
        %v1588 = vadd.f32 %v1482, %v1587
        %v1589 = vpop.f32.mrf.mxu0
        %v1590 = vadd.f32 %v1482, %v1589
        %1591 = vmatmul.bf16.gmra.mxu0 %v1526
        %v1592 = vpop.f32.mrf.mxu0
        %v1593 = vadd.f32 %v1482, %v1592
        %v1594 = vpop.f32.mrf.mxu0
        %v1595 = vadd.f32 %v1482, %v1594
        %1596 = vmatmul.bf16.gmra.mxu0 %v1528
        %v1597 = vpop.f32.mrf.mxu0
        %v1598 = vadd.f32 %v1482, %v1597
        %v1599 = vpop.f32.mrf.mxu0
        %v1600 = vadd.f32 %v1482, %v1599
        %1601 = vmatmul.bf16.gmra.mxu0 %v1530
        %v1602 = vpop.f32.mrf.mxu0
        %v1603 = vadd.f32 %v1482, %v1602
        %v1604 = vpop.f32.mrf.mxu0
        %v1605 = vadd.f32 %v1482, %v1604
        %1606 = vmatmul.bf16.gmra.mxu0 %v1532
        %v1607 = vpop.f32.mrf.mxu0
        %v1608 = vadd.f32 %v1482, %v1607
        %v1609 = vpop.f32.mrf.mxu0
        %v1610 = vadd.f32 %v1482, %v1609
        %1611 = vmatmul.bf16.gmra.mxu0 %v1534
        %v1612 = vpop.f32.mrf.mxu0
        %v1613 = vadd.f32 %v1482, %v1612
        %v1614 = vpop.f32.mrf.mxu0
        %v1615 = vadd.f32 %v1482, %v1614
        %1616 = vmatmul.bf16.gmra.mxu0 %v1536
        %v1617 = vpop.f32.mrf.mxu0
        %v1618 = vadd.f32 %v1482, %v1617
        %v1619 = vpop.f32.mrf.mxu0
        %v1620 = vadd.f32 %v1482, %v1619
        %1621 = vmatmul.bf16.gmra.mxu0 %v1538
        %v1622 = vpop.f32.mrf.mxu0
        %v1623 = vadd.f32 %v1482, %v1622
        %v1624 = vpop.f32.mrf.mxu0
        %v1625 = vadd.f32 %v1482, %v1624
        %1626 = vmatmul.bf16.gmra.mxu0 %v1540
        %v1627 = vpop.f32.mrf.mxu0
        %v1628 = vadd.f32 %v1482, %v1627
        %v1629 = vpop.f32.mrf.mxu0
        %v1630 = vadd.f32 %v1482, %v1629
        %1631 = vmatmul.bf16.gmra.mxu0 %v1542
        %v1632 = vpop.f32.mrf.mxu0
        %v1633 = vadd.f32 %v1482, %v1632
        %v1634 = vpop.f32.mrf.mxu0
        %v1635 = vadd.f32 %v1482, %v1634
        %1636 = vdwg.mxu0
        %v1637 = vmax.f32 %v1558, 0.0
        %v1638 = vmax.f32 %v1560, 0.0
        %v1639 = vmax.f32 %v1563, 0.0
        %v1640 = vmax.f32 %v1565, 0.0
        %v1641 = vmax.f32 %v1568, 0.0
        %v1642 = vmax.f32 %v1570, 0.0
        %v1643 = vmax.f32 %v1573, 0.0
        %v1644 = vmax.f32 %v1575, 0.0
        %v1645 = vmax.f32 %v1578, 0.0
        %v1646 = vmax.f32 %v1580, 0.0
        %v1647 = vmax.f32 %v1583, 0.0
        %v1648 = vmax.f32 %v1585, 0.0
        %v1649 = vmax.f32 %v1588, 0.0
        %v1650 = vmax.f32 %v1590, 0.0
        %v1651 = vmax.f32 %v1593, 0.0
        %v1652 = vmax.f32 %v1595, 0.0
        %v1653 = vmax.f32 %v1598, 0.0
        %v1654 = vmax.f32 %v1600, 0.0
        %v1655 = vmax.f32 %v1603, 0.0
        %v1656 = vmax.f32 %v1605, 0.0
        %v1657 = vmax.f32 %v1608, 0.0
        %v1658 = vmax.f32 %v1610, 0.0
        %v1659 = vmax.f32 %v1613, 0.0
        %v1660 = vmax.f32 %v1615, 0.0
        %v1661 = vmax.f32 %v1618, 0.0
        %v1662 = vmax.f32 %v1620, 0.0
        %v1663 = vmax.f32 %v1623, 0.0
        %v1664 = vmax.f32 %v1625, 0.0
        %v1665 = vmax.f32 %v1628, 0.0
        %v1666 = vmax.f32 %v1630, 0.0
        %v1667 = vmax.f32 %v1633, 0.0
        %v1668 = vmax.f32 %v1635, 0.0
        %v1669 = vpack.c.bf16 %v1637, %v1637
        %v1670 = vpack.c.bf16 %v1638, %v1638
        %v1671 = vpack.c.bf16 %v1639, %v1639
        %v1672 = vpack.c.bf16 %v1640, %v1640
        %v1673 = vpack.c.bf16 %v1641, %v1641
        %v1674 = vpack.c.bf16 %v1642, %v1642
        %v1675 = vpack.c.bf16 %v1643, %v1643
        %v1676 = vpack.c.bf16 %v1644, %v1644
        %v1677 = vpack.c.bf16 %v1645, %v1645
        %v1678 = vpack.c.bf16 %v1646, %v1646
        %v1679 = vpack.c.bf16 %v1647, %v1647
        %v1680 = vpack.c.bf16 %v1648, %v1648
        %v1681 = vpack.c.bf16 %v1649, %v1649
        %v1682 = vpack.c.bf16 %v1650, %v1650
        %v1683 = vpack.c.bf16 %v1651, %v1651
        %v1684 = vpack.c.bf16 %v1652, %v1652
        %v1685 = vpack.c.bf16 %v1653, %v1653
        %v1686 = vpack.c.bf16 %v1654, %v1654
        %v1687 = vpack.c.bf16 %v1655, %v1655
        %v1688 = vpack.c.bf16 %v1656, %v1656
        %v1689 = vpack.c.bf16 %v1657, %v1657
        %v1690 = vpack.c.bf16 %v1658, %v1658
        %v1691 = vpack.c.bf16 %v1659, %v1659
        %v1692 = vpack.c.bf16 %v1660, %v1660
        %v1693 = vpack.c.bf16 %v1661, %v1661
        %v1694 = vpack.c.bf16 %v1662, %v1662
        %v1695 = vpack.c.bf16 %v1663, %v1663
        %v1696 = vpack.c.bf16 %v1664, %v1664
        %v1697 = vpack.c.bf16 %v1665, %v1665
        %v1698 = vpack.c.bf16 %v1666, %v1666
        %v1699 = vpack.c.bf16 %v1667, %v1667
        %v1700 = vpack.c.bf16 %v1668, %v1668
        %v1701 = vld [vmem:[%s2] sm:$0xf]
        %v1702 = vld [vmem:[%s2 + $0x4] sm:$0xf]
        %v1703 = vld [vmem:[%s2 + $0x8] sm:$0xf]
        %v1704 = vld [vmem:[%s2 + $0xc] sm:$0xf]
        %v1705 = vld [vmem:[%s2 + $0x10] sm:$0xf]
        %v1706 = vld [vmem:[%s2 + $0x14] sm:$0xf]
        %v1707 = vld [vmem:[%s2 + $0x18] sm:$0xf]
        %v1708 = vld [vmem:[%s2 + $0x1c] sm:$0xf]
        %v1709 = vld [vmem:[%s2 + $0x20] sm:$0xf]
        %v1710 = vld [vmem:[%s2 + $0x24] sm:$0xf]
        %v1711 = vld [vmem:[%s2 + $0x28] sm:$0xf]
        %v1712 = vld [vmem:[%s2 + $0x2c] sm:$0xf]
        %v1713 = vld [vmem:[%s2 + $0x30] sm:$0xf]
        %v1714 = vld [vmem:[%s2 + $0x34] sm:$0xf]
        %v1715 = vld [vmem:[%s2 + $0x38] sm:$0xf]
        %v1716 = vld [vmem:[%s2 + $0x3c] sm:$0xf]
        %v1717 = vld [vmem:[%s2 + $0x40] sm:$0xf]
        %v1718 = vld [vmem:[%s2 + $0x44] sm:$0xf]
        %v1719 = vld [vmem:[%s2 + $0x48] sm:$0xf]
        %v1720 = vld [vmem:[%s2 + $0x4c] sm:$0xf]
        %v1721 = vld [vmem:[%s2 + $0x50] sm:$0xf]
        %v1722 = vld [vmem:[%s2 + $0x54] sm:$0xf]
        %v1723 = vld [vmem:[%s2 + $0x58] sm:$0xf]
        %v1724 = vld [vmem:[%s2 + $0x5c] sm:$0xf]
        %v1725 = vld [vmem:[%s2 + $0x60] sm:$0xf]
        %v1726 = vld [vmem:[%s2 + $0x64] sm:$0xf]
        %v1727 = vld [vmem:[%s2 + $0x68] sm:$0xf]
        %v1728 = vld [vmem:[%s2 + $0x6c] sm:$0xf]
        %v1729 = vld [vmem:[%s2 + $0x70] sm:$0xf]
        %v1730 = vld [vmem:[%s2 + $0x74] sm:$0xf]
        %v1731 = vld [vmem:[%s2 + $0x78] sm:$0xf]
        %v1732 = vld [vmem:[%s2 + $0x7c] sm:$0xf]
        %v1733 = vld [vmem:[%s2 + $0x80] sm:$0xf]
        %v1734 = vld [vmem:[%s2 + $0x84] sm:$0xf]
        %v1735 = vld [vmem:[%s2 + $0x88] sm:$0xf]
        %v1736 = vld [vmem:[%s2 + $0x8c] sm:$0xf]
        %s1737 = scalar_lea.vmem %s3, 1
        %v1738 = vld [vmem:[%s1737] sm:$0x1]
        %v1771 = vunpack.c.l.b16 %v1669
        %v1772 = vunpack.c.l.b16 %v1670
        %v1773 = vunpack.c.l.b16 %v1671
        %v1774 = vunpack.c.l.b16 %v1672
        %v1775 = vunpack.c.l.b16 %v1673
        %v1776 = vunpack.c.l.b16 %v1674
        %v1777 = vunpack.c.l.b16 %v1675
        %v1778 = vunpack.c.l.b16 %v1676
        %v1779 = vunpack.c.l.b16 %v1677
        %v1780 = vunpack.c.l.b16 %v1678
        %v1781 = vunpack.c.l.b16 %v1679
        %v1782 = vunpack.c.l.b16 %v1680
        %v1783 = vunpack.c.l.b16 %v1681
        %v1784 = vunpack.c.l.b16 %v1682
        %v1785 = vunpack.c.l.b16 %v1683
        %v1786 = vunpack.c.l.b16 %v1684
        %v1787 = vunpack.c.l.b16 %v1685
        %v1788 = vunpack.c.l.b16 %v1686
        %v1789 = vunpack.c.l.b16 %v1687
        %v1790 = vunpack.c.l.b16 %v1688
        %v1791 = vunpack.c.l.b16 %v1689
        %v1792 = vunpack.c.l.b16 %v1690
        %v1793 = vunpack.c.l.b16 %v1691
        %v1794 = vunpack.c.l.b16 %v1692
        %v1795 = vunpack.c.l.b16 %v1693
        %v1796 = vunpack.c.l.b16 %v1694
        %v1797 = vunpack.c.l.b16 %v1695
        %v1798 = vunpack.c.l.b16 %v1696
        %v1799 = vunpack.c.l.b16 %v1697
        %v1800 = vunpack.c.l.b16 %v1698
        %v1801 = vunpack.c.l.b16 %v1699
        %v1802 = vunpack.c.l.b16 %v1700
        %v1803 = vpack.c.b16 %v1772, %v1771
        %v1804 = vpack.c.b16 %v1774, %v1773
        %v1805 = vpack.c.b16 %v1776, %v1775
        %v1806 = vpack.c.b16 %v1778, %v1777
        %v1807 = vpack.c.b16 %v1780, %v1779
        %v1808 = vpack.c.b16 %v1782, %v1781
        %v1809 = vpack.c.b16 %v1784, %v1783
        %v1810 = vpack.c.b16 %v1786, %v1785
        %v1811 = vpack.c.b16 %v1788, %v1787
        %v1812 = vpack.c.b16 %v1790, %v1789
        %v1813 = vpack.c.b16 %v1792, %v1791
        %v1814 = vpack.c.b16 %v1794, %v1793
        %v1815 = vpack.c.b16 %v1796, %v1795
        %v1816 = vpack.c.b16 %v1798, %v1797
        %v1817 = vpack.c.b16 %v1800, %v1799
        %v1818 = vpack.c.b16 %v1802, %v1801
        %v1820 = vshrl.u32 %v1803, 16
        %v1822 = vrot.slane %v1820, 7
        %v1823 = vshll.u32 %v1803, 16
        %v1825 = vor.u32 %v1822, %v1823
        %v1827 = vshrl.u32 %v1804, 16
        %v1829 = vrot.slane %v1827, 7
        %v1830 = vshll.u32 %v1804, 16
        %v1832 = vor.u32 %v1829, %v1830
        %v1834 = vshrl.u32 %v1805, 16
        %v1836 = vrot.slane %v1834, 7
        %v1837 = vshll.u32 %v1805, 16
        %v1839 = vor.u32 %v1836, %v1837
        %v1841 = vshrl.u32 %v1806, 16
        %v1843 = vrot.slane %v1841, 7
        %v1844 = vshll.u32 %v1806, 16
        %v1846 = vor.u32 %v1843, %v1844
        %v1848 = vshrl.u32 %v1807, 16
        %v1850 = vrot.slane %v1848, 7
        %v1851 = vshll.u32 %v1807, 16
        %v1853 = vor.u32 %v1850, %v1851
        %v1855 = vshrl.u32 %v1808, 16
        %v1857 = vrot.slane %v1855, 7
        %v1858 = vshll.u32 %v1808, 16
        %v1860 = vor.u32 %v1857, %v1858
        %v1862 = vshrl.u32 %v1809, 16
        %v1864 = vrot.slane %v1862, 7
        %v1865 = vshll.u32 %v1809, 16
        %v1867 = vor.u32 %v1864, %v1865
        %v1869 = vshrl.u32 %v1810, 16
        %v1871 = vrot.slane %v1869, 7
        %v1872 = vshll.u32 %v1810, 16
        %v1874 = vor.u32 %v1871, %v1872
        %v1876 = vshrl.u32 %v1811, 16
        %v1878 = vrot.slane %v1876, 7
        %v1879 = vshll.u32 %v1811, 16
        %v1881 = vor.u32 %v1878, %v1879
        %v1883 = vshrl.u32 %v1812, 16
        %v1885 = vrot.slane %v1883, 7
        %v1886 = vshll.u32 %v1812, 16
        %v1888 = vor.u32 %v1885, %v1886
        %v1890 = vshrl.u32 %v1813, 16
        %v1892 = vrot.slane %v1890, 7
        %v1893 = vshll.u32 %v1813, 16
        %v1895 = vor.u32 %v1892, %v1893
        %v1897 = vshrl.u32 %v1814, 16
        %v1899 = vrot.slane %v1897, 7
        %v1900 = vshll.u32 %v1814, 16
        %v1902 = vor.u32 %v1899, %v1900
        %v1904 = vshrl.u32 %v1815, 16
        %v1906 = vrot.slane %v1904, 7
        %v1907 = vshll.u32 %v1815, 16
        %v1909 = vor.u32 %v1906, %v1907
        %v1911 = vshrl.u32 %v1816, 16
        %v1913 = vrot.slane %v1911, 7
        %v1914 = vshll.u32 %v1816, 16
        %v1916 = vor.u32 %v1913, %v1914
        %v1918 = vshrl.u32 %v1817, 16
        %v1920 = vrot.slane %v1918, 7
        %v1921 = vshll.u32 %v1817, 16
        %v1923 = vor.u32 %v1920, %v1921
        %v1925 = vshrl.u32 %v1818, 16
        %v1927 = vrot.slane %v1925, 7
        %v1928 = vshll.u32 %v1818, 16
        %v1930 = vor.u32 %v1927, %v1928
        %v1963 = vsel %vm635, 0, %v1825
        %v1964 = vsel %vm635, 0, %v1832
        %v1965 = vsel %vm635, 0, %v1839
        %v1966 = vsel %vm635, 0, %v1846
        %v1967 = vsel %vm635, 0, %v1853
        %v1968 = vsel %vm635, 0, %v1860
        %v1969 = vsel %vm635, 0, %v1867
        %v1970 = vsel %vm635, 0, %v1874
        %v1971 = vsel %vm635, 0, %v1881
        %v1972 = vsel %vm635, 0, %v1888
        %v1973 = vsel %vm635, 0, %v1895
        %v1974 = vsel %vm635, 0, %v1902
        %v1975 = vsel %vm635, 0, %v1909
        %v1976 = vsel %vm635, 0, %v1916
        %v1977 = vsel %vm635, 0, %v1923
        %v1978 = vsel %vm635, 0, %v1930
        %v1979 = vsel %vm635, %v1822, 0
        %v1980 = vsel %vm635, %v1829, 0
        %v1981 = vsel %vm635, %v1836, 0
        %v1982 = vsel %vm635, %v1843, 0
        %v1983 = vsel %vm635, %v1850, 0
        %v1984 = vsel %vm635, %v1857, 0
        %v1985 = vsel %vm635, %v1864, 0
        %v1986 = vsel %vm635, %v1871, 0
        %v1987 = vsel %vm635, %v1878, 0
        %v1988 = vsel %vm635, %v1885, 0
        %v1989 = vsel %vm635, %v1892, 0
        %v1990 = vsel %vm635, %v1899, 0
        %v1991 = vsel %vm635, %v1906, 0
        %v1992 = vsel %vm635, %v1913, 0
        %v1993 = vsel %vm635, %v1920, 0
        %v1994 = vsel %vm635, %v1927, 0
        %v1996 = vshrl.u32 %v1963, 16
        %v1998 = vshll.u32 %v1963, 16
        %v2000 = vrot.slane %v1998, 1
        %v2001 = vor.u32 %v1996, %v2000
        %v2003 = vshll.u32 %v1979, 16
        %v2005 = vrot.slane %v2003, 1
        %v2006 = vsel %vm670, %v2001, %v2005
        %v2008 = vshrl.u32 %v1964, 16
        %v2010 = vshll.u32 %v1964, 16
        %v2012 = vrot.slane %v2010, 1
        %v2013 = vor.u32 %v2008, %v2012
        %v2015 = vshll.u32 %v1980, 16
        %v2017 = vrot.slane %v2015, 1
        %v2018 = vsel %vm670, %v2013, %v2017
        %v2020 = vshrl.u32 %v1965, 16
        %v2022 = vshll.u32 %v1965, 16
        %v2024 = vrot.slane %v2022, 1
        %v2025 = vor.u32 %v2020, %v2024
        %v2027 = vshll.u32 %v1981, 16
        %v2029 = vrot.slane %v2027, 1
        %v2030 = vsel %vm670, %v2025, %v2029
        %v2032 = vshrl.u32 %v1966, 16
        %v2034 = vshll.u32 %v1966, 16
        %v2036 = vrot.slane %v2034, 1
        %v2037 = vor.u32 %v2032, %v2036
        %v2039 = vshll.u32 %v1982, 16
        %v2041 = vrot.slane %v2039, 1
        %v2042 = vsel %vm670, %v2037, %v2041
        %v2044 = vshrl.u32 %v1967, 16
        %v2046 = vshll.u32 %v1967, 16
        %v2048 = vrot.slane %v2046, 1
        %v2049 = vor.u32 %v2044, %v2048
        %v2051 = vshll.u32 %v1983, 16
        %v2053 = vrot.slane %v2051, 1
        %v2054 = vsel %vm670, %v2049, %v2053
        %v2056 = vshrl.u32 %v1968, 16
        %v2058 = vshll.u32 %v1968, 16
        %v2060 = vrot.slane %v2058, 1
        %v2061 = vor.u32 %v2056, %v2060
        %v2063 = vshll.u32 %v1984, 16
        %v2065 = vrot.slane %v2063, 1
        %v2066 = vsel %vm670, %v2061, %v2065
        %v2068 = vshrl.u32 %v1969, 16
        %v2070 = vshll.u32 %v1969, 16
        %v2072 = vrot.slane %v2070, 1
        %v2073 = vor.u32 %v2068, %v2072
        %v2075 = vshll.u32 %v1985, 16
        %v2077 = vrot.slane %v2075, 1
        %v2078 = vsel %vm670, %v2073, %v2077
        %v2080 = vshrl.u32 %v1970, 16
        %v2082 = vshll.u32 %v1970, 16
        %v2084 = vrot.slane %v2082, 1
        %v2085 = vor.u32 %v2080, %v2084
        %v2087 = vshll.u32 %v1986, 16
        %v2089 = vrot.slane %v2087, 1
        %v2090 = vsel %vm670, %v2085, %v2089
        %v2092 = vshrl.u32 %v1971, 16
        %v2094 = vshll.u32 %v1971, 16
        %v2096 = vrot.slane %v2094, 1
        %v2097 = vor.u32 %v2092, %v2096
        %v2099 = vshll.u32 %v1987, 16
        %v2101 = vrot.slane %v2099, 1
        %v2102 = vsel %vm670, %v2097, %v2101
        %v2104 = vshrl.u32 %v1972, 16
        %v2106 = vshll.u32 %v1972, 16
        %v2108 = vrot.slane %v2106, 1
        %v2109 = vor.u32 %v2104, %v2108
        %v2111 = vshll.u32 %v1988, 16
        %v2113 = vrot.slane %v2111, 1
        %v2114 = vsel %vm670, %v2109, %v2113
        %v2116 = vshrl.u32 %v1973, 16
        %v2118 = vshll.u32 %v1973, 16
        %v2120 = vrot.slane %v2118, 1
        %v2121 = vor.u32 %v2116, %v2120
        %v2123 = vshll.u32 %v1989, 16
        %v2125 = vrot.slane %v2123, 1
        %v2126 = vsel %vm670, %v2121, %v2125
        %v2128 = vshrl.u32 %v1974, 16
        %v2130 = vshll.u32 %v1974, 16
        %v2132 = vrot.slane %v2130, 1
        %v2133 = vor.u32 %v2128, %v2132
        %v2135 = vshll.u32 %v1990, 16
        %v2137 = vrot.slane %v2135, 1
        %v2138 = vsel %vm670, %v2133, %v2137
        %v2140 = vshrl.u32 %v1975, 16
        %v2142 = vshll.u32 %v1975, 16
        %v2144 = vrot.slane %v2142, 1
        %v2145 = vor.u32 %v2140, %v2144
        %v2147 = vshll.u32 %v1991, 16
        %v2149 = vrot.slane %v2147, 1
        %v2150 = vsel %vm670, %v2145, %v2149
        %v2152 = vshrl.u32 %v1976, 16
        %v2154 = vshll.u32 %v1976, 16
        %v2156 = vrot.slane %v2154, 1
        %v2157 = vor.u32 %v2152, %v2156
        %v2159 = vshll.u32 %v1992, 16
        %v2161 = vrot.slane %v2159, 1
        %v2162 = vsel %vm670, %v2157, %v2161
        %v2164 = vshrl.u32 %v1977, 16
        %v2166 = vshll.u32 %v1977, 16
        %v2168 = vrot.slane %v2166, 1
        %v2169 = vor.u32 %v2164, %v2168
        %v2171 = vshll.u32 %v1993, 16
        %v2173 = vrot.slane %v2171, 1
        %v2174 = vsel %vm670, %v2169, %v2173
        %v2205 = vrot.slane %v1963, 1
        %v2206 = vrot.slane %v1979, 1
        %v2207 = vsel %vm895, %v2205, %v2206
        %v2208 = vrot.slane %v1964, 1
        %v2209 = vrot.slane %v1980, 1
        %v2210 = vsel %vm895, %v2208, %v2209
        %v2211 = vrot.slane %v1965, 1
        %v2212 = vrot.slane %v1981, 1
        %v2213 = vsel %vm895, %v2211, %v2212
        %v2214 = vrot.slane %v1966, 1
        %v2215 = vrot.slane %v1982, 1
        %v2216 = vsel %vm895, %v2214, %v2215
        %v2217 = vrot.slane %v1967, 1
        %v2218 = vrot.slane %v1983, 1
        %v2219 = vsel %vm895, %v2217, %v2218
        %v2220 = vrot.slane %v1968, 1
        %v2221 = vrot.slane %v1984, 1
        %v2222 = vsel %vm895, %v2220, %v2221
        %v2223 = vrot.slane %v1969, 1
        %v2224 = vrot.slane %v1985, 1
        %v2225 = vsel %vm895, %v2223, %v2224
        %v2226 = vrot.slane %v1970, 1
        %v2227 = vrot.slane %v1986, 1
        %v2228 = vsel %vm895, %v2226, %v2227
        %v2229 = vrot.slane %v1971, 1
        %v2230 = vrot.slane %v1987, 1
        %v2231 = vsel %vm895, %v2229, %v2230
        %v2232 = vrot.slane %v1972, 1
        %v2233 = vrot.slane %v1988, 1
        %v2234 = vsel %vm895, %v2232, %v2233
        %v2235 = vrot.slane %v1973, 1
        %v2236 = vrot.slane %v1989, 1
        %v2237 = vsel %vm895, %v2235, %v2236
        %v2238 = vrot.slane %v1974, 1
        %v2239 = vrot.slane %v1990, 1
        %v2240 = vsel %vm895, %v2238, %v2239
        %v2241 = vrot.slane %v1975, 1
        %v2242 = vrot.slane %v1991, 1
        %v2243 = vsel %vm895, %v2241, %v2242
        %v2244 = vrot.slane %v1976, 1
        %v2245 = vrot.slane %v1992, 1
        %v2246 = vsel %vm895, %v2244, %v2245
        %v2247 = vrot.slane %v1977, 1
        %v2248 = vrot.slane %v1993, 1
        %v2249 = vsel %vm895, %v2247, %v2248
        %v2251 = vshrl.u32 %v1978, 16
        %v2253 = vshll.u32 %v1978, 16
        %v2255 = vrot.slane %v2253, 1
        %v2256 = vor.u32 %v2251, %v2255
        %v2258 = vshll.u32 %v1994, 16
        %v2260 = vrot.slane %v2258, 1
        %v2261 = vsel %vm670, %v2256, %v2260
        %v2264 = vrot.slane %v1978, 1
        %v2265 = vrot.slane %v1994, 1
        %v2266 = vsel %vm895, %v2264, %v2265
        %2267 = vrot.lane.b32.xlu0 %v682, 32
        %v2268 = vpop.permute.xlu0 %2267
        %2269 = vrot.lane.b32.xlu0 %v2006, 32
        %v2270 = vpop.permute.xlu0 %2269
        %2271 = vrot.lane.b32.xlu0 %v2018, 32
        %v2272 = vpop.permute.xlu0 %2271
        %2273 = vrot.lane.b32.xlu0 %v2030, 32
        %v2274 = vpop.permute.xlu0 %2273
        %2275 = vrot.lane.b32.xlu0 %v2042, 32
        %v2276 = vpop.permute.xlu0 %2275
        %2277 = vrot.lane.b32.xlu0 %v2054, 32
        %v2278 = vpop.permute.xlu0 %2277
        %2279 = vrot.lane.b32.xlu0 %v2066, 32
        %v2280 = vpop.permute.xlu0 %2279
        %2281 = vrot.lane.b32.xlu0 %v2078, 32
        %v2282 = vpop.permute.xlu0 %2281
        %2283 = vrot.lane.b32.xlu0 %v2090, 32
        %v2284 = vpop.permute.xlu0 %2283
        %2285 = vrot.lane.b32.xlu0 %v2102, 32
        %v2286 = vpop.permute.xlu0 %2285
        %2287 = vrot.lane.b32.xlu0 %v2114, 32
        %v2288 = vpop.permute.xlu0 %2287
        %2289 = vrot.lane.b32.xlu0 %v2126, 32
        %v2290 = vpop.permute.xlu0 %2289
        %2291 = vrot.lane.b32.xlu0 %v2138, 32
        %v2292 = vpop.permute.xlu0 %2291
        %2293 = vrot.lane.b32.xlu0 %v2150, 32
        %v2294 = vpop.permute.xlu0 %2293
        %2295 = vrot.lane.b32.xlu0 %v2162, 32
        %v2296 = vpop.permute.xlu0 %2295
        %2297 = vrot.lane.b32.xlu0 %v2174, 32
        %v2298 = vpop.permute.xlu0 %2297
        %2299 = vrot.lane.b32.xlu0 %v2207, 64
        %v2300 = vpop.permute.xlu0 %2299
        %2301 = vrot.lane.b32.xlu0 %v2210, 64
        %v2302 = vpop.permute.xlu0 %2301
        %2303 = vrot.lane.b32.xlu0 %v2213, 64
        %v2304 = vpop.permute.xlu0 %2303
        %2305 = vrot.lane.b32.xlu0 %v2216, 64
        %v2306 = vpop.permute.xlu0 %2305
        %2307 = vrot.lane.b32.xlu0 %v2219, 64
        %v2308 = vpop.permute.xlu0 %2307
        %2309 = vrot.lane.b32.xlu0 %v2222, 64
        %v2310 = vpop.permute.xlu0 %2309
        %2311 = vrot.lane.b32.xlu0 %v2225, 64
        %v2312 = vpop.permute.xlu0 %2311
        %2313 = vrot.lane.b32.xlu0 %v2228, 64
        %v2314 = vpop.permute.xlu0 %2313
        %2315 = vrot.lane.b32.xlu0 %v2231, 64
        %v2316 = vpop.permute.xlu0 %2315
        %2317 = vrot.lane.b32.xlu0 %v2234, 64
        %v2318 = vpop.permute.xlu0 %2317
        %2319 = vrot.lane.b32.xlu0 %v2237, 64
        %v2320 = vpop.permute.xlu0 %2319
        %2321 = vrot.lane.b32.xlu0 %v2240, 64
        %v2322 = vpop.permute.xlu0 %2321
        %2323 = vrot.lane.b32.xlu0 %v2243, 64
        %v2324 = vpop.permute.xlu0 %2323
        %2325 = vrot.lane.b32.xlu0 %v2246, 64
        %v2326 = vpop.permute.xlu0 %2325
        %2327 = vrot.lane.b32.xlu0 %v2249, 64
        %v2328 = vpop.permute.xlu0 %2327
        %2329 = vrot.lane.b32.xlu0 %v1963, 96
        %v2330 = vpop.permute.xlu0 %2329
        %2331 = vrot.lane.b32.xlu0 %v1964, 96
        %v2332 = vpop.permute.xlu0 %2331
        %2333 = vrot.lane.b32.xlu0 %v1965, 96
        %v2334 = vpop.permute.xlu0 %2333
        %2335 = vrot.lane.b32.xlu0 %v1966, 96
        %v2336 = vpop.permute.xlu0 %2335
        %2337 = vrot.lane.b32.xlu0 %v1967, 96
        %v2338 = vpop.permute.xlu0 %2337
        %2339 = vrot.lane.b32.xlu0 %v1968, 96
        %v2340 = vpop.permute.xlu0 %2339
        %2341 = vrot.lane.b32.xlu0 %v1969, 96
        %v2342 = vpop.permute.xlu0 %2341
        %2343 = vrot.lane.b32.xlu0 %v1970, 96
        %v2344 = vpop.permute.xlu0 %2343
        %2345 = vrot.lane.b32.xlu0 %v1971, 96
        %v2346 = vpop.permute.xlu0 %2345
        %2347 = vrot.lane.b32.xlu0 %v1972, 96
        %v2348 = vpop.permute.xlu0 %2347
        %2349 = vrot.lane.b32.xlu0 %v1973, 96
        %v2350 = vpop.permute.xlu0 %2349
        %2351 = vrot.lane.b32.xlu0 %v1974, 96
        %v2352 = vpop.permute.xlu0 %2351
        %2353 = vrot.lane.b32.xlu0 %v1975, 96
        %v2354 = vpop.permute.xlu0 %2353
        %2355 = vrot.lane.b32.xlu0 %v1976, 96
        %v2356 = vpop.permute.xlu0 %2355
        %2357 = vrot.lane.b32.xlu0 %v1977, 96
        %v2358 = vpop.permute.xlu0 %2357
        %2359 = vrot.lane.b32.xlu0 %v1978, 96
        %v2360 = vpop.permute.xlu0 %2359
        %2361 = vrot.lane.b32.xlu0 %v2207, 32
        %v2362 = vpop.permute.xlu0 %2361
        %2363 = vrot.lane.b32.xlu0 %v2210, 32
        %v2364 = vpop.permute.xlu0 %2363
        %2365 = vrot.lane.b32.xlu0 %v2213, 32
        %v2366 = vpop.permute.xlu0 %2365
        %2367 = vrot.lane.b32.xlu0 %v2216, 32
        %v2368 = vpop.permute.xlu0 %2367
        %2369 = vrot.lane.b32.xlu0 %v2219, 32
        %v2370 = vpop.permute.xlu0 %2369
        %2371 = vrot.lane.b32.xlu0 %v2222, 32
        %v2372 = vpop.permute.xlu0 %2371
        %2373 = vrot.lane.b32.xlu0 %v2225, 32
        %v2374 = vpop.permute.xlu0 %2373
        %2375 = vrot.lane.b32.xlu0 %v2228, 32
        %v2376 = vpop.permute.xlu0 %2375
        %2377 = vrot.lane.b32.xlu0 %v2231, 32
        %v2378 = vpop.permute.xlu0 %2377
        %2379 = vrot.lane.b32.xlu0 %v2234, 32
        %v2380 = vpop.permute.xlu0 %2379
        %2381 = vrot.lane.b32.xlu0 %v2237, 32
        %v2382 = vpop.permute.xlu0 %2381
        %2383 = vrot.lane.b32.xlu0 %v2240, 32
        %v2384 = vpop.permute.xlu0 %2383
        %2385 = vrot.lane.b32.xlu0 %v2243, 32
        %v2386 = vpop.permute.xlu0 %2385
        %2387 = vrot.lane.b32.xlu0 %v2246, 32
        %v2388 = vpop.permute.xlu0 %2387
        %2389 = vrot.lane.b32.xlu0 %v2249, 32
        %v2390 = vpop.permute.xlu0 %2389
        %2391 = vrot.lane.b32.xlu0 %v2266, 32
        %v2392 = vpop.permute.xlu0 %2391
        %2393 = vrot.lane.b32.xlu0 %v1964, 64
        %v2394 = vpop.permute.xlu0 %2393
        %2395 = vrot.lane.b32.xlu0 %v1965, 64
        %v2396 = vpop.permute.xlu0 %2395
        %2397 = vrot.lane.b32.xlu0 %v1966, 64
        %v2398 = vpop.permute.xlu0 %2397
        %2399 = vrot.lane.b32.xlu0 %v1967, 64
        %v2400 = vpop.permute.xlu0 %2399
        %2401 = vrot.lane.b32.xlu0 %v1968, 64
        %v2402 = vpop.permute.xlu0 %2401
        %2403 = vrot.lane.b32.xlu0 %v1969, 64
        %v2404 = vpop.permute.xlu0 %2403
        %2405 = vrot.lane.b32.xlu0 %v1970, 64
        %v2406 = vpop.permute.xlu0 %2405
        %2407 = vrot.lane.b32.xlu0 %v1971, 64
        %v2408 = vpop.permute.xlu0 %2407
        %2409 = vrot.lane.b32.xlu0 %v1972, 64
        %v2410 = vpop.permute.xlu0 %2409
        %2411 = vrot.lane.b32.xlu0 %v1973, 64
        %v2412 = vpop.permute.xlu0 %2411
        %2413 = vrot.lane.b32.xlu0 %v1974, 64
        %v2414 = vpop.permute.xlu0 %2413
        %2415 = vrot.lane.b32.xlu0 %v1975, 64
        %v2416 = vpop.permute.xlu0 %2415
        %2417 = vrot.lane.b32.xlu0 %v1976, 64
        %v2418 = vpop.permute.xlu0 %2417
        %2419 = vrot.lane.b32.xlu0 %v1977, 64
        %v2420 = vpop.permute.xlu0 %2419
        %2421 = vrot.lane.b32.xlu0 %v1978, 64
        %v2422 = vpop.permute.xlu0 %2421
        %2423 = vrot.lane.b32.xlu0 %v636, 64
        %v2424 = vpop.permute.xlu0 %2423
        %2425 = vrot.lane.b32.xlu0 %v2018, 96
        %v2426 = vpop.permute.xlu0 %2425
        %2427 = vrot.lane.b32.xlu0 %v2030, 96
        %v2428 = vpop.permute.xlu0 %2427
        %2429 = vrot.lane.b32.xlu0 %v2042, 96
        %v2430 = vpop.permute.xlu0 %2429
        %2431 = vrot.lane.b32.xlu0 %v2054, 96
        %v2432 = vpop.permute.xlu0 %2431
        %2433 = vrot.lane.b32.xlu0 %v2066, 96
        %v2434 = vpop.permute.xlu0 %2433
        %2435 = vrot.lane.b32.xlu0 %v2078, 96
        %v2436 = vpop.permute.xlu0 %2435
        %2437 = vrot.lane.b32.xlu0 %v2090, 96
        %v2438 = vpop.permute.xlu0 %2437
        %2439 = vrot.lane.b32.xlu0 %v2102, 96
        %v2440 = vpop.permute.xlu0 %2439
        %2441 = vrot.lane.b32.xlu0 %v2114, 96
        %v2442 = vpop.permute.xlu0 %2441
        %2443 = vrot.lane.b32.xlu0 %v2126, 96
        %v2444 = vpop.permute.xlu0 %2443
        %2445 = vrot.lane.b32.xlu0 %v2138, 96
        %v2446 = vpop.permute.xlu0 %2445
        %2447 = vrot.lane.b32.xlu0 %v2150, 96
        %v2448 = vpop.permute.xlu0 %2447
        %2449 = vrot.lane.b32.xlu0 %v2162, 96
        %v2450 = vpop.permute.xlu0 %2449
        %2451 = vrot.lane.b32.xlu0 %v2174, 96
        %v2452 = vpop.permute.xlu0 %2451
        %2453 = vrot.lane.b32.xlu0 %v2261, 96
        %v2454 = vpop.permute.xlu0 %2453
        %2455 = vrot.lane.b32.xlu0 %v682, 96
        %v2456 = vpop.permute.xlu0 %2455
        %v2458 = vsel %vm1316, %v636, %v2268
        %v2460 = vsel %vm1316, %v1963, %v2270
        %v2462 = vsel %vm1316, %v1964, %v2272
        %v2464 = vsel %vm1316, %v1965, %v2274
        %v2466 = vsel %vm1316, %v1966, %v2276
        %v2468 = vsel %vm1316, %v1967, %v2278
        %v2470 = vsel %vm1316, %v1968, %v2280
        %v2472 = vsel %vm1316, %v1969, %v2282
        %v2474 = vsel %vm1316, %v1970, %v2284
        %v2476 = vsel %vm1316, %v1971, %v2286
        %v2478 = vsel %vm1316, %v1972, %v2288
        %v2480 = vsel %vm1316, %v1973, %v2290
        %v2482 = vsel %vm1316, %v1974, %v2292
        %v2484 = vsel %vm1316, %v1975, %v2294
        %v2486 = vsel %vm1316, %v1976, %v2296
        %v2488 = vsel %vm1316, %v1977, %v2298
        %v2489 = vsel %vm1448, %v2458, %v1216
        %v2491 = vsel %vm1448, %v2460, %v2300
        %v2493 = vsel %vm1448, %v2462, %v2302
        %v2495 = vsel %vm1448, %v2464, %v2304
        %v2497 = vsel %vm1448, %v2466, %v2306
        %v2499 = vsel %vm1448, %v2468, %v2308
        %v2501 = vsel %vm1448, %v2470, %v2310
        %v2503 = vsel %vm1448, %v2472, %v2312
        %v2505 = vsel %vm1448, %v2474, %v2314
        %v2507 = vsel %vm1448, %v2476, %v2316
        %v2509 = vsel %vm1448, %v2478, %v2318
        %v2511 = vsel %vm1448, %v2480, %v2320
        %v2513 = vsel %vm1448, %v2482, %v2322
        %v2515 = vsel %vm1448, %v2484, %v2324
        %v2517 = vsel %vm1448, %v2486, %v2326
        %v2519 = vsel %vm1448, %v2488, %v2328
        %vm2520 = vcmask 785408
        %v2522 = vsel %vm2520, %v2489, %v2330
        %v2525 = vsel %vm2520, %v2491, %v2332
        %v2528 = vsel %vm2520, %v2493, %v2334
        %v2531 = vsel %vm2520, %v2495, %v2336
        %v2534 = vsel %vm2520, %v2497, %v2338
        %v2537 = vsel %vm2520, %v2499, %v2340
        %v2540 = vsel %vm2520, %v2501, %v2342
        %v2543 = vsel %vm2520, %v2503, %v2344
        %v2546 = vsel %vm2520, %v2505, %v2346
        %v2549 = vsel %vm2520, %v2507, %v2348
        %v2552 = vsel %vm2520, %v2509, %v2350
        %v2555 = vsel %vm2520, %v2511, %v2352
        %v2558 = vsel %vm2520, %v2513, %v2354
        %v2561 = vsel %vm2520, %v2515, %v2356
        %v2564 = vsel %vm2520, %v2517, %v2358
        %v2567 = vsel %vm2520, %v2519, %v2360
        %v2571 = vsel %vm1316, %v2006, %v2362
        %v2574 = vsel %vm1316, %v2018, %v2364
        %v2577 = vsel %vm1316, %v2030, %v2366
        %v2580 = vsel %vm1316, %v2042, %v2368
        %v2583 = vsel %vm1316, %v2054, %v2370
        %v2586 = vsel %vm1316, %v2066, %v2372
        %v2589 = vsel %vm1316, %v2078, %v2374
        %v2592 = vsel %vm1316, %v2090, %v2376
        %v2595 = vsel %vm1316, %v2102, %v2378
        %v2598 = vsel %vm1316, %v2114, %v2380
        %v2601 = vsel %vm1316, %v2126, %v2382
        %v2604 = vsel %vm1316, %v2138, %v2384
        %v2607 = vsel %vm1316, %v2150, %v2386
        %v2610 = vsel %vm1316, %v2162, %v2388
        %v2613 = vsel %vm1316, %v2174, %v2390
        %v2616 = vsel %vm1316, %v2261, %v2392
        %v2618 = vsel %vm1448, %v2571, %v2394
        %v2620 = vsel %vm1448, %v2574, %v2396
        %v2622 = vsel %vm1448, %v2577, %v2398
        %v2624 = vsel %vm1448, %v2580, %v2400
        %v2626 = vsel %vm1448, %v2583, %v2402
        %v2628 = vsel %vm1448, %v2586, %v2404
        %v2630 = vsel %vm1448, %v2589, %v2406
        %v2632 = vsel %vm1448, %v2592, %v2408
        %v2634 = vsel %vm1448, %v2595, %v2410
        %v2636 = vsel %vm1448, %v2598, %v2412
        %v2638 = vsel %vm1448, %v2601, %v2414
        %v2640 = vsel %vm1448, %v2604, %v2416
        %v2642 = vsel %vm1448, %v2607, %v2418
        %v2644 = vsel %vm1448, %v2610, %v2420
        %v2646 = vsel %vm1448, %v2613, %v2422
        %v2648 = vsel %vm1448, %v2616, %v2424
        %v2650 = vsel %vm2520, %v2618, %v2426
        %v2653 = vsel %vm2520, %v2620, %v2428
        %v2656 = vsel %vm2520, %v2622, %v2430
        %v2659 = vsel %vm2520, %v2624, %v2432
        %v2662 = vsel %vm2520, %v2626, %v2434
        %v2665 = vsel %vm2520, %v2628, %v2436
        %v2668 = vsel %vm2520, %v2630, %v2438
        %v2671 = vsel %vm2520, %v2632, %v2440
        %v2674 = vsel %vm2520, %v2634, %v2442
        %v2677 = vsel %vm2520, %v2636, %v2444
        %v2680 = vsel %vm2520, %v2638, %v2446
        %v2683 = vsel %vm2520, %v2640, %v2448
        %v2686 = vsel %vm2520, %v2642, %v2450
        %v2689 = vsel %vm2520, %v2644, %v2452
        %v2692 = vsel %vm2520, %v2646, %v2454
        %v2695 = vsel %vm2520, %v2648, %v2456
        %v2698 = vperm.slane %v1738, 0
        %v2736 = vunpack.c.l.b16 %v1701
        %v2737 = vunpack.c.l.b16 %v1702
        %v2738 = vunpack.c.l.b16 %v1703
        %v2739 = vunpack.c.l.b16 %v1704
        %v2740 = vunpack.c.l.b16 %v1705
        %v2741 = vunpack.c.l.b16 %v1706
        %v2742 = vunpack.c.l.b16 %v1707
        %v2743 = vunpack.c.l.b16 %v1708
        %v2744 = vunpack.c.l.b16 %v1709
        %v2745 = vunpack.c.l.b16 %v1710
        %v2746 = vunpack.c.l.b16 %v1711
        %v2747 = vunpack.c.l.b16 %v1712
        %v2748 = vunpack.c.l.b16 %v1713
        %v2749 = vunpack.c.l.b16 %v1714
        %v2750 = vunpack.c.l.b16 %v1715
        %v2751 = vunpack.c.l.b16 %v1716
        %v2752 = vunpack.c.l.b16 %v1717
        %v2753 = vunpack.c.l.b16 %v1718
        %v2754 = vunpack.c.l.b16 %v1719
        %v2755 = vunpack.c.l.b16 %v1720
        %v2756 = vunpack.c.l.b16 %v1721
        %v2757 = vunpack.c.l.b16 %v1722
        %v2758 = vunpack.c.l.b16 %v1723
        %v2759 = vunpack.c.l.b16 %v1724
        %v2760 = vunpack.c.l.b16 %v1725
        %v2761 = vunpack.c.l.b16 %v1726
        %v2762 = vunpack.c.l.b16 %v1727
        %v2763 = vunpack.c.l.b16 %v1728
        %v2764 = vunpack.c.l.b16 %v1729
        %v2765 = vunpack.c.l.b16 %v1730
        %v2766 = vunpack.c.l.b16 %v1731
        %v2767 = vunpack.c.l.b16 %v1732
        %v2768 = vunpack.c.l.b16 %v1733
        %v2769 = vunpack.c.l.b16 %v1734
        %v2770 = vunpack.c.l.b16 %v1735
        %v2771 = vunpack.c.l.b16 %v1736
        %v2772 = vpack.c.b16 %v2737, %v2736
        %v2773 = vpack.c.b16 %v2739, %v2738
        %v2774 = vpack.c.b16 %v2741, %v2740
        %v2775 = vpack.c.b16 %v2743, %v2742
        %v2776 = vpack.c.b16 %v2745, %v2744
        %v2777 = vpack.c.b16 %v2747, %v2746
        %v2778 = vpack.c.b16 %v2749, %v2748
        %v2779 = vpack.c.b16 %v2751, %v2750
        %v2780 = vpack.c.b16 %v2753, %v2752
        %v2781 = vpack.c.b16 %v2755, %v2754
        %v2782 = vpack.c.b16 %v2757, %v2756
        %v2783 = vpack.c.b16 %v2759, %v2758
        %v2784 = vpack.c.b16 %v2761, %v2760
        %v2785 = vpack.c.b16 %v2763, %v2762
        %v2786 = vpack.c.b16 %v2765, %v2764
        %v2787 = vpack.c.b16 %v2767, %v2766
        %v2788 = vpack.c.b16 %v2769, %v2768
        %v2789 = vpack.c.b16 %v2771, %v2770
        %v2809 = vsel %vm1316, %v2210, 0
        %v2812 = vsel %vm1316, %v2213, 0
        %v2815 = vsel %vm1316, %v2216, 0
        %v2818 = vsel %vm1316, %v2219, 0
        %v2821 = vsel %vm1316, %v2222, 0
        %v2824 = vsel %vm1316, %v2225, 0
        %v2827 = vsel %vm1316, %v2228, 0
        %v2830 = vsel %vm1316, %v2231, 0
        %v2833 = vsel %vm1316, %v2234, 0
        %v2836 = vsel %vm1316, %v2237, 0
        %v2839 = vsel %vm1316, %v2240, 0
        %v2842 = vsel %vm1316, %v2243, 0
        %v2845 = vsel %vm1316, %v2246, 0
        %v2848 = vsel %vm1316, %v2249, 0
        %v2851 = vsel %vm1316, %v2266, 0
        %v2854 = vsel %vm1316, %v898, 0
        %2856 = vmatpush.bf16.msra.mxu0 %v2779
        %2857 = vmatpush.bf16.msra.mxu0 %v2778
        %2858 = vmatpush.bf16.msra.mxu0 %v2777
        %2859 = vmatpush.bf16.msra.mxu0 %v2776
        %2860 = vmatpush.bf16.msra.mxu0 %v2775
        %2861 = vmatpush.bf16.msra.mxu0 %v2774
        %2862 = vmatpush.bf16.msra.mxu0 %v2773
        %2863 = vmatpush.bf16.msra.mxu0 %v2772
        %2864 = vmatmul.bf16.gmra.mxu0 %v2522
        %v2865 = vpop.f32.mrf.mxu0
        %v2866 = vadd.f32 %v2698, %v2865
        %v2867 = vpop.f32.mrf.mxu0
        %v2868 = vadd.f32 %v2698, %v2867
        %2869 = vmatmul.bf16.gmra.mxu0 %v2525
        %v2870 = vpop.f32.mrf.mxu0
        %v2871 = vadd.f32 %v2698, %v2870
        %v2872 = vpop.f32.mrf.mxu0
        %v2873 = vadd.f32 %v2698, %v2872
        %2874 = vmatmul.bf16.gmra.mxu0 %v2528
        %v2875 = vpop.f32.mrf.mxu0
        %v2876 = vadd.f32 %v2698, %v2875
        %v2877 = vpop.f32.mrf.mxu0
        %v2878 = vadd.f32 %v2698, %v2877
        %2879 = vmatmul.bf16.gmra.mxu0 %v2531
        %v2880 = vpop.f32.mrf.mxu0
        %v2881 = vadd.f32 %v2698, %v2880
        %v2882 = vpop.f32.mrf.mxu0
        %v2883 = vadd.f32 %v2698, %v2882
        %2884 = vmatmul.bf16.gmra.mxu0 %v2534
        %v2885 = vpop.f32.mrf.mxu0
        %v2886 = vadd.f32 %v2698, %v2885
        %v2887 = vpop.f32.mrf.mxu0
        %v2888 = vadd.f32 %v2698, %v2887
        %2889 = vmatmul.bf16.gmra.mxu0 %v2537
        %v2890 = vpop.f32.mrf.mxu0
        %v2891 = vadd.f32 %v2698, %v2890
        %v2892 = vpop.f32.mrf.mxu0
        %v2893 = vadd.f32 %v2698, %v2892
        %2894 = vmatmul.bf16.gmra.mxu0 %v2540
        %v2895 = vpop.f32.mrf.mxu0
        %v2896 = vadd.f32 %v2698, %v2895
        %v2897 = vpop.f32.mrf.mxu0
        %v2898 = vadd.f32 %v2698, %v2897
        %2899 = vmatmul.bf16.gmra.mxu0 %v2543
        %v2900 = vpop.f32.mrf.mxu0
        %v2901 = vadd.f32 %v2698, %v2900
        %v2902 = vpop.f32.mrf.mxu0
        %v2903 = vadd.f32 %v2698, %v2902
        %2904 = vmatmul.bf16.gmra.mxu0 %v2546
        %v2905 = vpop.f32.mrf.mxu0
        %v2906 = vadd.f32 %v2698, %v2905
        %v2907 = vpop.f32.mrf.mxu0
        %v2908 = vadd.f32 %v2698, %v2907
        %2909 = vmatmul.bf16.gmra.mxu0 %v2549
        %v2910 = vpop.f32.mrf.mxu0
        %v2911 = vadd.f32 %v2698, %v2910
        %v2912 = vpop.f32.mrf.mxu0
        %v2913 = vadd.f32 %v2698, %v2912
        %2914 = vmatmul.bf16.gmra.mxu0 %v2552
        %v2915 = vpop.f32.mrf.mxu0
        %v2916 = vadd.f32 %v2698, %v2915
        %v2917 = vpop.f32.mrf.mxu0
        %v2918 = vadd.f32 %v2698, %v2917
        %2919 = vmatmul.bf16.gmra.mxu0 %v2555
        %v2920 = vpop.f32.mrf.mxu0
        %v2921 = vadd.f32 %v2698, %v2920
        %v2922 = vpop.f32.mrf.mxu0
        %v2923 = vadd.f32 %v2698, %v2922
        %2924 = vmatmul.bf16.gmra.mxu0 %v2558
        %v2925 = vpop.f32.mrf.mxu0
        %v2926 = vadd.f32 %v2698, %v2925
        %v2927 = vpop.f32.mrf.mxu0
        %v2928 = vadd.f32 %v2698, %v2927
        %2929 = vmatmul.bf16.gmra.mxu0 %v2561
        %v2930 = vpop.f32.mrf.mxu0
        %v2931 = vadd.f32 %v2698, %v2930
        %v2932 = vpop.f32.mrf.mxu0
        %v2933 = vadd.f32 %v2698, %v2932
        %2934 = vmatmul.bf16.gmra.mxu0 %v2564
        %v2935 = vpop.f32.mrf.mxu0
        %v2936 = vadd.f32 %v2698, %v2935
        %v2937 = vpop.f32.mrf.mxu0
        %v2938 = vadd.f32 %v2698, %v2937
        %2939 = vmatmul.bf16.gmra.mxu0 %v2567
        %v2940 = vpop.f32.mrf.mxu0
        %v2941 = vadd.f32 %v2698, %v2940
        %v2942 = vpop.f32.mrf.mxu0
        %v2943 = vadd.f32 %v2698, %v2942
        %2944 = vdwg.mxu0
        %2945 = vmatpush.bf16.msra.mxu0 %v2787
        %2946 = vmatpush.bf16.msra.mxu0 %v2786
        %2947 = vmatpush.bf16.msra.mxu0 %v2785
        %2948 = vmatpush.bf16.msra.mxu0 %v2784
        %2949 = vmatpush.bf16.msra.mxu0 %v2783
        %2950 = vmatpush.bf16.msra.mxu0 %v2782
        %2951 = vmatpush.bf16.msra.mxu0 %v2781
        %2952 = vmatpush.bf16.msra.mxu0 %v2780
        %2953 = vmatmul.bf16.gmra.mxu0 %v2650
        %v2954 = vpop.f32.mrf.mxu0
        %v2955 = vadd.f32 %v2866, %v2954
        %v2956 = vpop.f32.mrf.mxu0
        %v2957 = vadd.f32 %v2868, %v2956
        %2958 = vmatmul.bf16.gmra.mxu0 %v2653
        %v2959 = vpop.f32.mrf.mxu0
        %v2960 = vadd.f32 %v2871, %v2959
        %v2961 = vpop.f32.mrf.mxu0
        %v2962 = vadd.f32 %v2873, %v2961
        %2963 = vmatmul.bf16.gmra.mxu0 %v2656
        %v2964 = vpop.f32.mrf.mxu0
        %v2965 = vadd.f32 %v2876, %v2964
        %v2966 = vpop.f32.mrf.mxu0
        %v2967 = vadd.f32 %v2878, %v2966
        %2968 = vmatmul.bf16.gmra.mxu0 %v2659
        %v2969 = vpop.f32.mrf.mxu0
        %v2970 = vadd.f32 %v2881, %v2969
        %v2971 = vpop.f32.mrf.mxu0
        %v2972 = vadd.f32 %v2883, %v2971
        %2973 = vmatmul.bf16.gmra.mxu0 %v2662
        %v2974 = vpop.f32.mrf.mxu0
        %v2975 = vadd.f32 %v2886, %v2974
        %v2976 = vpop.f32.mrf.mxu0
        %v2977 = vadd.f32 %v2888, %v2976
        %2978 = vmatmul.bf16.gmra.mxu0 %v2665
        %v2979 = vpop.f32.mrf.mxu0
        %v2980 = vadd.f32 %v2891, %v2979
        %v2981 = vpop.f32.mrf.mxu0
        %v2982 = vadd.f32 %v2893, %v2981
        %2983 = vmatmul.bf16.gmra.mxu0 %v2668
        %v2984 = vpop.f32.mrf.mxu0
        %v2985 = vadd.f32 %v2896, %v2984
        %v2986 = vpop.f32.mrf.mxu0
        %v2987 = vadd.f32 %v2898, %v2986
        %2988 = vmatmul.bf16.gmra.mxu0 %v2671
        %v2989 = vpop.f32.mrf.mxu0
        %v2990 = vadd.f32 %v2901, %v2989
        %v2991 = vpop.f32.mrf.mxu0
        %v2992 = vadd.f32 %v2903, %v2991
        %2993 = vmatmul.bf16.gmra.mxu0 %v2674
        %v2994 = vpop.f32.mrf.mxu0
        %v2995 = vadd.f32 %v2906, %v2994
        %v2996 = vpop.f32.mrf.mxu0
        %v2997 = vadd.f32 %v2908, %v2996
        %2998 = vmatmul.bf16.gmra.mxu0 %v2677
        %v2999 = vpop.f32.mrf.mxu0
        %v3000 = vadd.f32 %v2911, %v2999
        %v3001 = vpop.f32.mrf.mxu0
        %v3002 = vadd.f32 %v2913, %v3001
        %3003 = vmatmul.bf16.gmra.mxu0 %v2680
        %v3004 = vpop.f32.mrf.mxu0
        %v3005 = vadd.f32 %v2916, %v3004
        %v3006 = vpop.f32.mrf.mxu0
        %v3007 = vadd.f32 %v2918, %v3006
        %3008 = vmatmul.bf16.gmra.mxu0 %v2683
        %v3009 = vpop.f32.mrf.mxu0
        %v3010 = vadd.f32 %v2921, %v3009
        %v3011 = vpop.f32.mrf.mxu0
        %v3012 = vadd.f32 %v2923, %v3011
        %3013 = vmatmul.bf16.gmra.mxu0 %v2686
        %v3014 = vpop.f32.mrf.mxu0
        %v3015 = vadd.f32 %v2926, %v3014
        %v3016 = vpop.f32.mrf.mxu0
        %v3017 = vadd.f32 %v2928, %v3016
        %3018 = vmatmul.bf16.gmra.mxu0 %v2689
        %v3019 = vpop.f32.mrf.mxu0
        %v3020 = vadd.f32 %v2931, %v3019
        %v3021 = vpop.f32.mrf.mxu0
        %v3022 = vadd.f32 %v2933, %v3021
        %3023 = vmatmul.bf16.gmra.mxu0 %v2692
        %v3024 = vpop.f32.mrf.mxu0
        %v3025 = vadd.f32 %v2936, %v3024
        %v3026 = vpop.f32.mrf.mxu0
        %v3027 = vadd.f32 %v2938, %v3026
        %3028 = vmatmul.bf16.gmra.mxu0 %v2695
        %v3029 = vpop.f32.mrf.mxu0
        %v3030 = vadd.f32 %v2941, %v3029
        %v3031 = vpop.f32.mrf.mxu0
        %v3032 = vadd.f32 %v2943, %v3031
        %3033 = vdwg.mxu0
        %3034 = vmatpush.bf16.msra.mxu0 0
        %3035 = vmatpush.bf16.msra.mxu0 0
        %3036 = vmatpush.bf16.msra.mxu0 0
        %3037 = vmatpush.bf16.msra.mxu0 0
        %3038 = vmatpush.bf16.msra.mxu0 0
        %3039 = vmatpush.bf16.msra.mxu0 0
        %3040 = vmatpush.bf16.msra.mxu0 %v2789
        %3041 = vmatpush.bf16.msra.mxu0 %v2788
        %3042 = vmatmul.bf16.gmra.mxu0 %v2809
        %v3043 = vpop.f32.mrf.mxu0
        %v3044 = vadd.f32 %v2955, %v3043
        %v3045 = vpop.f32.mrf.mxu0
        %v3046 = vadd.f32 %v2957, %v3045
        %3047 = vmatmul.bf16.gmra.mxu0 %v2812
        %v3048 = vpop.f32.mrf.mxu0
        %v3049 = vadd.f32 %v2960, %v3048
        %v3050 = vpop.f32.mrf.mxu0
        %v3051 = vadd.f32 %v2962, %v3050
        %3052 = vmatmul.bf16.gmra.mxu0 %v2815
        %v3053 = vpop.f32.mrf.mxu0
        %v3054 = vadd.f32 %v2965, %v3053
        %v3055 = vpop.f32.mrf.mxu0
        %v3056 = vadd.f32 %v2967, %v3055
        %3057 = vmatmul.bf16.gmra.mxu0 %v2818
        %v3058 = vpop.f32.mrf.mxu0
        %v3059 = vadd.f32 %v2970, %v3058
        %v3060 = vpop.f32.mrf.mxu0
        %v3061 = vadd.f32 %v2972, %v3060
        %3062 = vmatmul.bf16.gmra.mxu0 %v2821
        %v3063 = vpop.f32.mrf.mxu0
        %v3064 = vadd.f32 %v2975, %v3063
        %v3065 = vpop.f32.mrf.mxu0
        %v3066 = vadd.f32 %v2977, %v3065
        %3067 = vmatmul.bf16.gmra.mxu0 %v2824
        %v3068 = vpop.f32.mrf.mxu0
        %v3069 = vadd.f32 %v2980, %v3068
        %v3070 = vpop.f32.mrf.mxu0
        %v3071 = vadd.f32 %v2982, %v3070
        %3072 = vmatmul.bf16.gmra.mxu0 %v2827
        %v3073 = vpop.f32.mrf.mxu0
        %v3074 = vadd.f32 %v2985, %v3073
        %v3075 = vpop.f32.mrf.mxu0
        %v3076 = vadd.f32 %v2987, %v3075
        %3077 = vmatmul.bf16.gmra.mxu0 %v2830
        %v3078 = vpop.f32.mrf.mxu0
        %v3079 = vadd.f32 %v2990, %v3078
        %v3080 = vpop.f32.mrf.mxu0
        %v3081 = vadd.f32 %v2992, %v3080
        %3082 = vmatmul.bf16.gmra.mxu0 %v2833
        %v3083 = vpop.f32.mrf.mxu0
        %v3084 = vadd.f32 %v2995, %v3083
        %v3085 = vpop.f32.mrf.mxu0
        %v3086 = vadd.f32 %v2997, %v3085
        %3087 = vmatmul.bf16.gmra.mxu0 %v2836
        %v3088 = vpop.f32.mrf.mxu0
        %v3089 = vadd.f32 %v3000, %v3088
        %v3090 = vpop.f32.mrf.mxu0
        %v3091 = vadd.f32 %v3002, %v3090
        %3092 = vmatmul.bf16.gmra.mxu0 %v2839
        %v3093 = vpop.f32.mrf.mxu0
        %v3094 = vadd.f32 %v3005, %v3093
        %v3095 = vpop.f32.mrf.mxu0
        %v3096 = vadd.f32 %v3007, %v3095
        %3097 = vmatmul.bf16.gmra.mxu0 %v2842
        %v3098 = vpop.f32.mrf.mxu0
        %v3099 = vadd.f32 %v3010, %v3098
        %v3100 = vpop.f32.mrf.mxu0
        %v3101 = vadd.f32 %v3012, %v3100
        %3102 = vmatmul.bf16.gmra.mxu0 %v2845
        %v3103 = vpop.f32.mrf.mxu0
        %v3104 = vadd.f32 %v3015, %v3103
        %v3105 = vpop.f32.mrf.mxu0
        %v3106 = vadd.f32 %v3017, %v3105
        %3107 = vmatmul.bf16.gmra.mxu0 %v2848
        %v3108 = vpop.f32.mrf.mxu0
        %v3109 = vadd.f32 %v3020, %v3108
        %v3110 = vpop.f32.mrf.mxu0
        %v3111 = vadd.f32 %v3022, %v3110
        %3112 = vmatmul.bf16.gmra.mxu0 %v2851
        %v3113 = vpop.f32.mrf.mxu0
        %v3114 = vadd.f32 %v3025, %v3113
        %v3115 = vpop.f32.mrf.mxu0
        %v3116 = vadd.f32 %v3027, %v3115
        %3117 = vmatmul.bf16.gmra.mxu0 %v2854
        %v3118 = vpop.f32.mrf.mxu0
        %v3119 = vadd.f32 %v3030, %v3118
        %v3120 = vpop.f32.mrf.mxu0
        %v3121 = vadd.f32 %v3032, %v3120
        %3122 = vdwg.mxu0
        %v3123 = vmax.f32 %v3044, 0.0
        %v3124 = vmax.f32 %v3046, 0.0
        %v3125 = vmax.f32 %v3049, 0.0
        %v3126 = vmax.f32 %v3051, 0.0
        %v3127 = vmax.f32 %v3054, 0.0
        %v3128 = vmax.f32 %v3056, 0.0
        %v3129 = vmax.f32 %v3059, 0.0
        %v3130 = vmax.f32 %v3061, 0.0
        %v3131 = vmax.f32 %v3064, 0.0
        %v3132 = vmax.f32 %v3066, 0.0
        %v3133 = vmax.f32 %v3069, 0.0
        %v3134 = vmax.f32 %v3071, 0.0
        %v3135 = vmax.f32 %v3074, 0.0
        %v3136 = vmax.f32 %v3076, 0.0
        %v3137 = vmax.f32 %v3079, 0.0
        %v3138 = vmax.f32 %v3081, 0.0
        %v3139 = vmax.f32 %v3084, 0.0
        %v3140 = vmax.f32 %v3086, 0.0
        %v3141 = vmax.f32 %v3089, 0.0
        %v3142 = vmax.f32 %v3091, 0.0
        %v3143 = vmax.f32 %v3094, 0.0
        %v3144 = vmax.f32 %v3096, 0.0
        %v3145 = vmax.f32 %v3099, 0.0
        %v3146 = vmax.f32 %v3101, 0.0
        %v3147 = vmax.f32 %v3104, 0.0
        %v3148 = vmax.f32 %v3106, 0.0
        %v3149 = vmax.f32 %v3109, 0.0
        %v3150 = vmax.f32 %v3111, 0.0
        %v3151 = vmax.f32 %v3114, 0.0
        %v3152 = vmax.f32 %v3116, 0.0
        %v3153 = vmax.f32 %v3119, 0.0
        %v3154 = vmax.f32 %v3121, 0.0
        %v3155 = vpack.c.bf16 %v3123, %v3123
        %v3156 = vpack.c.bf16 %v3124, %v3124
        %v3157 = vpack.c.bf16 %v3125, %v3125
        %v3158 = vpack.c.bf16 %v3126, %v3126
        %v3159 = vpack.c.bf16 %v3127, %v3127
        %v3160 = vpack.c.bf16 %v3128, %v3128
        %v3161 = vpack.c.bf16 %v3129, %v3129
        %v3162 = vpack.c.bf16 %v3130, %v3130
        %v3163 = vpack.c.bf16 %v3131, %v3131
        %v3164 = vpack.c.bf16 %v3132, %v3132
        %v3165 = vpack.c.bf16 %v3133, %v3133
        %v3166 = vpack.c.bf16 %v3134, %v3134
        %v3167 = vpack.c.bf16 %v3135, %v3135
        %v3168 = vpack.c.bf16 %v3136, %v3136
        %v3169 = vpack.c.bf16 %v3137, %v3137
        %v3170 = vpack.c.bf16 %v3138, %v3138
        %v3171 = vpack.c.bf16 %v3139, %v3139
        %v3172 = vpack.c.bf16 %v3140, %v3140
        %v3173 = vpack.c.bf16 %v3141, %v3141
        %v3174 = vpack.c.bf16 %v3142, %v3142
        %v3175 = vpack.c.bf16 %v3143, %v3143
        %v3176 = vpack.c.bf16 %v3144, %v3144
        %v3177 = vpack.c.bf16 %v3145, %v3145
        %v3178 = vpack.c.bf16 %v3146, %v3146
        %v3179 = vpack.c.bf16 %v3147, %v3147
        %v3180 = vpack.c.bf16 %v3148, %v3148
        %v3181 = vpack.c.bf16 %v3149, %v3149
        %v3182 = vpack.c.bf16 %v3150, %v3150
        %v3183 = vpack.c.bf16 %v3151, %v3151
        %v3184 = vpack.c.bf16 %v3152, %v3152
        %v3185 = vpack.c.bf16 %v3153, %v3153
        %v3186 = vpack.c.bf16 %v3154, %v3154
        %v3187 = vunpack.c.l.bf16 %v3155
        %v3188 = vunpack.c.l.bf16 %v3156
        %v3189 = vunpack.c.l.bf16 %v3159
        %v3190 = vunpack.c.l.bf16 %v3160
        %v3191 = vunpack.c.l.bf16 %v3163
        %v3192 = vunpack.c.l.bf16 %v3164
        %v3193 = vunpack.c.l.bf16 %v3167
        %v3194 = vunpack.c.l.bf16 %v3168
        %v3195 = vunpack.c.l.bf16 %v3171
        %v3196 = vunpack.c.l.bf16 %v3172
        %v3197 = vunpack.c.l.bf16 %v3175
        %v3198 = vunpack.c.l.bf16 %v3176
        %v3199 = vunpack.c.l.bf16 %v3179
        %v3200 = vunpack.c.l.bf16 %v3180
        %v3201 = vunpack.c.l.bf16 %v3183
        %v3202 = vunpack.c.l.bf16 %v3184
        %v3203 = vunpack.c.l.bf16 %v3157
        %v3204 = vunpack.c.l.bf16 %v3158
        %v3205 = vunpack.c.l.bf16 %v3161
        %v3206 = vunpack.c.l.bf16 %v3162
        %v3207 = vunpack.c.l.bf16 %v3165
        %v3208 = vunpack.c.l.bf16 %v3166
        %v3209 = vunpack.c.l.bf16 %v3169
        %v3210 = vunpack.c.l.bf16 %v3170
        %v3211 = vunpack.c.l.bf16 %v3173
        %v3212 = vunpack.c.l.bf16 %v3174
        %v3213 = vunpack.c.l.bf16 %v3177
        %v3214 = vunpack.c.l.bf16 %v3178
        %v3215 = vunpack.c.l.bf16 %v3181
        %v3216 = vunpack.c.l.bf16 %v3182
        %v3217 = vunpack.c.l.bf16 %v3185
        %v3218 = vunpack.c.l.bf16 %v3186
        %v3219 = vmax.f32 %v3187, %v3203
        %v3220 = vmax.f32 %v3188, %v3204
        %v3221 = vmax.f32 %v3189, %v3205
        %v3222 = vmax.f32 %v3190, %v3206
        %v3223 = vmax.f32 %v3191, %v3207
        %v3224 = vmax.f32 %v3192, %v3208
        %v3225 = vmax.f32 %v3193, %v3209
        %v3226 = vmax.f32 %v3194, %v3210
        %v3227 = vmax.f32 %v3195, %v3211
        %v3228 = vmax.f32 %v3196, %v3212
        %v3229 = vmax.f32 %v3197, %v3213
        %v3230 = vmax.f32 %v3198, %v3214
        %v3231 = vmax.f32 %v3199, %v3215
        %v3232 = vmax.f32 %v3200, %v3216
        %v3233 = vmax.f32 %v3201, %v3217
        %v3234 = vmax.f32 %v3202, %v3218
        %v3235 = vpack.c.bf16 %v3219, %v3219
        %v3236 = vpack.c.bf16 %v3220, %v3220
        %v3237 = vpack.c.bf16 %v3221, %v3221
        %v3238 = vpack.c.bf16 %v3222, %v3222
        %v3239 = vpack.c.bf16 %v3223, %v3223
        %v3240 = vpack.c.bf16 %v3224, %v3224
        %v3241 = vpack.c.bf16 %v3225, %v3225
        %v3242 = vpack.c.bf16 %v3226, %v3226
        %v3243 = vpack.c.bf16 %v3227, %v3227
        %v3244 = vpack.c.bf16 %v3228, %v3228
        %v3245 = vpack.c.bf16 %v3229, %v3229
        %v3246 = vpack.c.bf16 %v3230, %v3230
        %v3247 = vpack.c.bf16 %v3231, %v3231
        %v3248 = vpack.c.bf16 %v3232, %v3232
        %v3249 = vpack.c.bf16 %v3233, %v3233
        %v3250 = vpack.c.bf16 %v3234, %v3234
        %v3267 = vrot.slane %v3235, 3
        %v3268 = vrot.slane %v3236, 3
        %v3269 = vrot.slane %v3237, 3
        %v3270 = vrot.slane %v3238, 3
        %v3271 = vrot.slane %v3239, 3
        %v3272 = vrot.slane %v3240, 3
        %v3273 = vrot.slane %v3241, 3
        %v3274 = vrot.slane %v3242, 3
        %v3275 = vrot.slane %v3243, 3
        %v3276 = vrot.slane %v3244, 3
        %v3277 = vrot.slane %v3245, 3
        %v3278 = vrot.slane %v3246, 3
        %v3279 = vrot.slane %v3247, 3
        %v3280 = vrot.slane %v3248, 3
        %v3281 = vrot.slane %v3249, 3
        %v3282 = vrot.slane %v3250, 3
        %vm3283 = vcmask 1040384
        %v3286 = vsel %vm3283, %v3235, %v3267
        %vm3287 = vcmask 1041409
        %v3288 = vsel %vm3287, %v3235, %v3267
        %v3290 = vrot.slane %v3288, 1
        %vm3291 = vcmask 1042434
        %v3292 = vsel %vm3291, %v3235, %v3267
        %v3294 = vrot.slane %v3292, 2
        %vm3295 = vcmask 1043459
        %v3296 = vsel %vm3295, %v3235, %v3267
        %v3298 = vrot.slane %v3296, 3
        %v3301 = vsel %vm3283, %v3236, %v3268
        %v3302 = vsel %vm3287, %v3236, %v3268
        %v3304 = vrot.slane %v3302, 1
        %v3305 = vsel %vm3291, %v3236, %v3268
        %v3307 = vrot.slane %v3305, 2
        %v3308 = vsel %vm3295, %v3236, %v3268
        %v3310 = vrot.slane %v3308, 3
        %v3313 = vsel %vm3283, %v3237, %v3269
        %v3314 = vsel %vm3287, %v3237, %v3269
        %v3316 = vrot.slane %v3314, 1
        %v3317 = vsel %vm3291, %v3237, %v3269
        %v3319 = vrot.slane %v3317, 2
        %v3320 = vsel %vm3295, %v3237, %v3269
        %v3322 = vrot.slane %v3320, 3
        %v3325 = vsel %vm3283, %v3238, %v3270
        %v3326 = vsel %vm3287, %v3238, %v3270
        %v3328 = vrot.slane %v3326, 1
        %v3329 = vsel %vm3291, %v3238, %v3270
        %v3331 = vrot.slane %v3329, 2
        %v3332 = vsel %vm3295, %v3238, %v3270
        %v3334 = vrot.slane %v3332, 3
        %v3337 = vsel %vm3283, %v3239, %v3271
        %v3338 = vsel %vm3287, %v3239, %v3271
        %v3340 = vrot.slane %v3338, 1
        %v3341 = vsel %vm3291, %v3239, %v3271
        %v3343 = vrot.slane %v3341, 2
        %v3344 = vsel %vm3295, %v3239, %v3271
        %v3346 = vrot.slane %v3344, 3
        %v3349 = vsel %vm3283, %v3240, %v3272
        %v3350 = vsel %vm3287, %v3240, %v3272
        %v3352 = vrot.slane %v3350, 1
        %v3353 = vsel %vm3291, %v3240, %v3272
        %v3355 = vrot.slane %v3353, 2
        %v3356 = vsel %vm3295, %v3240, %v3272
        %v3358 = vrot.slane %v3356, 3
        %v3361 = vsel %vm3283, %v3241, %v3273
        %v3362 = vsel %vm3287, %v3241, %v3273
        %v3364 = vrot.slane %v3362, 1
        %v3365 = vsel %vm3291, %v3241, %v3273
        %v3367 = vrot.slane %v3365, 2
        %v3368 = vsel %vm3295, %v3241, %v3273
        %v3370 = vrot.slane %v3368, 3
        %v3373 = vsel %vm3283, %v3242, %v3274
        %v3374 = vsel %vm3287, %v3242, %v3274
        %v3376 = vrot.slane %v3374, 1
        %v3377 = vsel %vm3291, %v3242, %v3274
        %v3379 = vrot.slane %v3377, 2
        %v3380 = vsel %vm3295, %v3242, %v3274
        %v3382 = vrot.slane %v3380, 3
        %v3385 = vsel %vm3283, %v3243, %v3275
        %v3386 = vsel %vm3287, %v3243, %v3275
        %v3388 = vrot.slane %v3386, 1
        %v3389 = vsel %vm3291, %v3243, %v3275
        %v3391 = vrot.slane %v3389, 2
        %v3392 = vsel %vm3295, %v3243, %v3275
        %v3394 = vrot.slane %v3392, 3
        %v3397 = vsel %vm3283, %v3244, %v3276
        %v3398 = vsel %vm3287, %v3244, %v3276
        %v3400 = vrot.slane %v3398, 1
        %v3401 = vsel %vm3291, %v3244, %v3276
        %v3403 = vrot.slane %v3401, 2
        %v3404 = vsel %vm3295, %v3244, %v3276
        %v3406 = vrot.slane %v3404, 3
        %v3409 = vsel %vm3283, %v3245, %v3277
        %v3410 = vsel %vm3287, %v3245, %v3277
        %v3412 = vrot.slane %v3410, 1
        %v3413 = vsel %vm3291, %v3245, %v3277
        %v3415 = vrot.slane %v3413, 2
        %v3416 = vsel %vm3295, %v3245, %v3277
        %v3418 = vrot.slane %v3416, 3
        %v3421 = vsel %vm3283, %v3246, %v3278
        %v3422 = vsel %vm3287, %v3246, %v3278
        %v3424 = vrot.slane %v3422, 1
        %v3425 = vsel %vm3291, %v3246, %v3278
        %v3427 = vrot.slane %v3425, 2
        %v3428 = vsel %vm3295, %v3246, %v3278
        %v3430 = vrot.slane %v3428, 3
        %v3433 = vsel %vm3283, %v3247, %v3279
        %v3434 = vsel %vm3287, %v3247, %v3279
        %v3436 = vrot.slane %v3434, 1
        %v3437 = vsel %vm3291, %v3247, %v3279
        %v3439 = vrot.slane %v3437, 2
        %v3440 = vsel %vm3295, %v3247, %v3279
        %v3442 = vrot.slane %v3440, 3
        %v3445 = vsel %vm3283, %v3248, %v3280
        %v3446 = vsel %vm3287, %v3248, %v3280
        %v3448 = vrot.slane %v3446, 1
        %v3449 = vsel %vm3291, %v3248, %v3280
        %v3451 = vrot.slane %v3449, 2
        %v3452 = vsel %vm3295, %v3248, %v3280
        %v3454 = vrot.slane %v3452, 3
        %v3457 = vsel %vm3283, %v3249, %v3281
        %v3458 = vsel %vm3287, %v3249, %v3281
        %v3460 = vrot.slane %v3458, 1
        %v3461 = vsel %vm3291, %v3249, %v3281
        %v3463 = vrot.slane %v3461, 2
        %v3464 = vsel %vm3295, %v3249, %v3281
        %v3466 = vrot.slane %v3464, 3
        %v3469 = vsel %vm3283, %v3250, %v3282
        %v3470 = vsel %vm3287, %v3250, %v3282
        %v3472 = vrot.slane %v3470, 1
        %v3473 = vsel %vm3291, %v3250, %v3282
        %v3475 = vrot.slane %v3473, 2
        %v3476 = vsel %vm3295, %v3250, %v3282
        %v3478 = vrot.slane %v3476, 3
        %v3543 = vunpack.c.l.bf16 %v3286
        %v3544 = vunpack.c.l.bf16 %v3290
        %v3545 = vunpack.c.l.bf16 %v3294
        %v3546 = vunpack.c.l.bf16 %v3298
        %v3547 = vunpack.c.l.bf16 %v3301
        %v3548 = vunpack.c.l.bf16 %v3304
        %v3549 = vunpack.c.l.bf16 %v3307
        %v3550 = vunpack.c.l.bf16 %v3310
        %v3551 = vunpack.c.l.bf16 %v3313
        %v3552 = vunpack.c.l.bf16 %v3316
        %v3553 = vunpack.c.l.bf16 %v3319
        %v3554 = vunpack.c.l.bf16 %v3322
        %v3555 = vunpack.c.l.bf16 %v3325
        %v3556 = vunpack.c.l.bf16 %v3328
        %v3557 = vunpack.c.l.bf16 %v3331
        %v3558 = vunpack.c.l.bf16 %v3334
        %v3559 = vunpack.c.l.bf16 %v3337
        %v3560 = vunpack.c.l.bf16 %v3340
        %v3561 = vunpack.c.l.bf16 %v3343
        %v3562 = vunpack.c.l.bf16 %v3346
        %v3563 = vunpack.c.l.bf16 %v3349
        %v3564 = vunpack.c.l.bf16 %v3352
        %v3565 = vunpack.c.l.bf16 %v3355
        %v3566 = vunpack.c.l.bf16 %v3358
        %v3567 = vunpack.c.l.bf16 %v3361
        %v3568 = vunpack.c.l.bf16 %v3364
        %v3569 = vunpack.c.l.bf16 %v3367
        %v3570 = vunpack.c.l.bf16 %v3370
        %v3571 = vunpack.c.l.bf16 %v3373
        %v3572 = vunpack.c.l.bf16 %v3376
        %v3573 = vunpack.c.l.bf16 %v3379
        %v3574 = vunpack.c.l.bf16 %v3382
        %v3575 = vunpack.c.l.bf16 %v3385
        %v3576 = vunpack.c.l.bf16 %v3388
        %v3577 = vunpack.c.l.bf16 %v3391
        %v3578 = vunpack.c.l.bf16 %v3394
        %v3579 = vunpack.c.l.bf16 %v3397
        %v3580 = vunpack.c.l.bf16 %v3400
        %v3581 = vunpack.c.l.bf16 %v3403
        %v3582 = vunpack.c.l.bf16 %v3406
        %v3583 = vunpack.c.l.bf16 %v3409
        %v3584 = vunpack.c.l.bf16 %v3412
        %v3585 = vunpack.c.l.bf16 %v3415
        %v3586 = vunpack.c.l.bf16 %v3418
        %v3587 = vunpack.c.l.bf16 %v3421
        %v3588 = vunpack.c.l.bf16 %v3424
        %v3589 = vunpack.c.l.bf16 %v3427
        %v3590 = vunpack.c.l.bf16 %v3430
        %v3591 = vunpack.c.l.bf16 %v3433
        %v3592 = vunpack.c.l.bf16 %v3436
        %v3593 = vunpack.c.l.bf16 %v3439
        %v3594 = vunpack.c.l.bf16 %v3442
        %v3595 = vunpack.c.l.bf16 %v3445
        %v3596 = vunpack.c.l.bf16 %v3448
        %v3597 = vunpack.c.l.bf16 %v3451
        %v3598 = vunpack.c.l.bf16 %v3454
        %v3599 = vunpack.c.l.bf16 %v3457
        %v3600 = vunpack.c.l.bf16 %v3460
        %v3601 = vunpack.c.l.bf16 %v3463
        %v3602 = vunpack.c.l.bf16 %v3466
        %v3603 = vunpack.c.l.bf16 %v3469
        %v3604 = vunpack.c.l.bf16 %v3472
        %v3605 = vunpack.c.l.bf16 %v3475
        %v3606 = vunpack.c.l.bf16 %v3478
        %v3671 = vrot.slane %v3543, 7
        %v3672 = vrot.slane %v3671, 2
        %v3673 = vrot.slane %v3544, 7
        %v3674 = vrot.slane %v3673, 2
        %v3675 = vrot.slane %v3545, 7
        %v3676 = vrot.slane %v3675, 2
        %v3677 = vrot.slane %v3546, 7
        %v3678 = vrot.slane %v3677, 2
        %v3679 = vrot.slane %v3547, 7
        %v3680 = vrot.slane %v3679, 2
        %v3681 = vrot.slane %v3548, 7
        %v3682 = vrot.slane %v3681, 2
        %v3683 = vrot.slane %v3549, 7
        %v3684 = vrot.slane %v3683, 2
        %v3685 = vrot.slane %v3550, 7
        %v3686 = vrot.slane %v3685, 2
        %v3687 = vrot.slane %v3551, 7
        %v3688 = vrot.slane %v3687, 2
        %v3689 = vrot.slane %v3552, 7
        %v3690 = vrot.slane %v3689, 2
        %v3691 = vrot.slane %v3553, 7
        %v3692 = vrot.slane %v3691, 2
        %v3693 = vrot.slane %v3554, 7
        %v3694 = vrot.slane %v3693, 2
        %v3695 = vrot.slane %v3555, 7
        %v3696 = vrot.slane %v3695, 2
        %v3697 = vrot.slane %v3556, 7
        %v3698 = vrot.slane %v3697, 2
        %v3699 = vrot.slane %v3557, 7
        %v3700 = vrot.slane %v3699, 2
        %v3701 = vrot.slane %v3558, 7
        %v3702 = vrot.slane %v3701, 2
        %v3703 = vrot.slane %v3559, 7
        %v3704 = vrot.slane %v3703, 2
        %v3705 = vrot.slane %v3560, 7
        %v3706 = vrot.slane %v3705, 2
        %v3707 = vrot.slane %v3561, 7
        %v3708 = vrot.slane %v3707, 2
        %v3709 = vrot.slane %v3562, 7
        %v3710 = vrot.slane %v3709, 2
        %v3711 = vrot.slane %v3563, 7
        %v3712 = vrot.slane %v3711, 2
        %v3713 = vrot.slane %v3564, 7
        %v3714 = vrot.slane %v3713, 2
        %v3715 = vrot.slane %v3565, 7
        %v3716 = vrot.slane %v3715, 2
        %v3717 = vrot.slane %v3566, 7
        %v3718 = vrot.slane %v3717, 2
        %v3719 = vrot.slane %v3567, 7
        %v3720 = vrot.slane %v3719, 2
        %v3721 = vrot.slane %v3568, 7
        %v3722 = vrot.slane %v3721, 2
        %v3723 = vrot.slane %v3569, 7
        %v3724 = vrot.slane %v3723, 2
        %v3725 = vrot.slane %v3570, 7
        %v3726 = vrot.slane %v3725, 2
        %v3727 = vrot.slane %v3571, 7
        %v3728 = vrot.slane %v3727, 2
        %v3729 = vrot.slane %v3572, 7
        %v3730 = vrot.slane %v3729, 2
        %v3731 = vrot.slane %v3573, 7
        %v3732 = vrot.slane %v3731, 2
        %v3733 = vrot.slane %v3574, 7
        %v3734 = vrot.slane %v3733, 2
        %v3735 = vrot.slane %v3575, 7
        %v3736 = vrot.slane %v3735, 2
        %v3737 = vrot.slane %v3576, 7
        %v3738 = vrot.slane %v3737, 2
        %v3739 = vrot.slane %v3577, 7
        %v3740 = vrot.slane %v3739, 2
        %v3741 = vrot.slane %v3578, 7
        %v3742 = vrot.slane %v3741, 2
        %v3743 = vrot.slane %v3579, 7
        %v3744 = vrot.slane %v3743, 2
        %v3745 = vrot.slane %v3580, 7
        %v3746 = vrot.slane %v3745, 2
        %v3747 = vrot.slane %v3581, 7
        %v3748 = vrot.slane %v3747, 2
        %v3749 = vrot.slane %v3582, 7
        %v3750 = vrot.slane %v3749, 2
        %v3751 = vrot.slane %v3583, 7
        %v3752 = vrot.slane %v3751, 2
        %v3753 = vrot.slane %v3584, 7
        %v3754 = vrot.slane %v3753, 2
        %v3755 = vrot.slane %v3585, 7
        %v3756 = vrot.slane %v3755, 2
        %v3757 = vrot.slane %v3586, 7
        %v3758 = vrot.slane %v3757, 2
        %v3759 = vrot.slane %v3587, 7
        %v3760 = vrot.slane %v3759, 2
        %v3761 = vrot.slane %v3588, 7
        %v3762 = vrot.slane %v3761, 2
        %v3763 = vrot.slane %v3589, 7
        %v3764 = vrot.slane %v3763, 2
        %v3765 = vrot.slane %v3590, 7
        %v3766 = vrot.slane %v3765, 2
        %v3767 = vrot.slane %v3591, 7
        %v3768 = vrot.slane %v3767, 2
        %v3769 = vrot.slane %v3592, 7
        %v3770 = vrot.slane %v3769, 2
        %v3771 = vrot.slane %v3593, 7
        %v3772 = vrot.slane %v3771, 2
        %v3773 = vrot.slane %v3594, 7
        %v3774 = vrot.slane %v3773, 2
        %v3775 = vrot.slane %v3595, 7
        %v3776 = vrot.slane %v3775, 2
        %v3777 = vrot.slane %v3596, 7
        %v3778 = vrot.slane %v3777, 2
        %v3779 = vrot.slane %v3597, 7
        %v3780 = vrot.slane %v3779, 2
        %v3781 = vrot.slane %v3598, 7
        %v3782 = vrot.slane %v3781, 2
        %v3783 = vrot.slane %v3599, 7
        %v3784 = vrot.slane %v3783, 2
        %v3785 = vrot.slane %v3600, 7
        %v3786 = vrot.slane %v3785, 2
        %v3787 = vrot.slane %v3601, 7
        %v3788 = vrot.slane %v3787, 2
        %v3789 = vrot.slane %v3602, 7
        %v3790 = vrot.slane %v3789, 2
        %v3791 = vrot.slane %v3603, 7
        %v3792 = vrot.slane %v3791, 2
        %v3793 = vrot.slane %v3604, 7
        %v3794 = vrot.slane %v3793, 2
        %v3795 = vrot.slane %v3605, 7
        %v3796 = vrot.slane %v3795, 2
        %v3797 = vrot.slane %v3606, 7
        %v3798 = vrot.slane %v3797, 2
        %v3863 = vmax.f32 %v3543, %v3672
        %v3864 = vmax.f32 %v3544, %v3674
        %v3865 = vmax.f32 %v3545, %v3676
        %v3866 = vmax.f32 %v3546, %v3678
        %v3867 = vmax.f32 %v3547, %v3680
        %v3868 = vmax.f32 %v3548, %v3682
        %v3869 = vmax.f32 %v3549, %v3684
        %v3870 = vmax.f32 %v3550, %v3686
        %v3871 = vmax.f32 %v3551, %v3688
        %v3872 = vmax.f32 %v3552, %v3690
        %v3873 = vmax.f32 %v3553, %v3692
        %v3874 = vmax.f32 %v3554, %v3694
        %v3875 = vmax.f32 %v3555, %v3696
        %v3876 = vmax.f32 %v3556, %v3698
        %v3877 = vmax.f32 %v3557, %v3700
        %v3878 = vmax.f32 %v3558, %v3702
        %v3879 = vmax.f32 %v3559, %v3704
        %v3880 = vmax.f32 %v3560, %v3706
        %v3881 = vmax.f32 %v3561, %v3708
        %v3882 = vmax.f32 %v3562, %v3710
        %v3883 = vmax.f32 %v3563, %v3712
        %v3884 = vmax.f32 %v3564, %v3714
        %v3885 = vmax.f32 %v3565, %v3716
        %v3886 = vmax.f32 %v3566, %v3718
        %v3887 = vmax.f32 %v3567, %v3720
        %v3888 = vmax.f32 %v3568, %v3722
        %v3889 = vmax.f32 %v3569, %v3724
        %v3890 = vmax.f32 %v3570, %v3726
        %v3891 = vmax.f32 %v3571, %v3728
        %v3892 = vmax.f32 %v3572, %v3730
        %v3893 = vmax.f32 %v3573, %v3732
        %v3894 = vmax.f32 %v3574, %v3734
        %v3895 = vmax.f32 %v3575, %v3736
        %v3896 = vmax.f32 %v3576, %v3738
        %v3897 = vmax.f32 %v3577, %v3740
        %v3898 = vmax.f32 %v3578, %v3742
        %v3899 = vmax.f32 %v3579, %v3744
        %v3900 = vmax.f32 %v3580, %v3746
        %v3901 = vmax.f32 %v3581, %v3748
        %v3902 = vmax.f32 %v3582, %v3750
        %v3903 = vmax.f32 %v3583, %v3752
        %v3904 = vmax.f32 %v3584, %v3754
        %v3905 = vmax.f32 %v3585, %v3756
        %v3906 = vmax.f32 %v3586, %v3758
        %v3907 = vmax.f32 %v3587, %v3760
        %v3908 = vmax.f32 %v3588, %v3762
        %v3909 = vmax.f32 %v3589, %v3764
        %v3910 = vmax.f32 %v3590, %v3766
        %v3911 = vmax.f32 %v3591, %v3768
        %v3912 = vmax.f32 %v3592, %v3770
        %v3913 = vmax.f32 %v3593, %v3772
        %v3914 = vmax.f32 %v3594, %v3774
        %v3915 = vmax.f32 %v3595, %v3776
        %v3916 = vmax.f32 %v3596, %v3778
        %v3917 = vmax.f32 %v3597, %v3780
        %v3918 = vmax.f32 %v3598, %v3782
        %v3919 = vmax.f32 %v3599, %v3784
        %v3920 = vmax.f32 %v3600, %v3786
        %v3921 = vmax.f32 %v3601, %v3788
        %v3922 = vmax.f32 %v3602, %v3790
        %v3923 = vmax.f32 %v3603, %v3792
        %v3924 = vmax.f32 %v3604, %v3794
        %v3925 = vmax.f32 %v3605, %v3796
        %v3926 = vmax.f32 %v3606, %v3798
        %v3927 = vpack.c.bf16 %v3863, %v3863
        %v3928 = vpack.c.bf16 %v3864, %v3864
        %v3929 = vpack.c.bf16 %v3865, %v3865
        %v3930 = vpack.c.bf16 %v3866, %v3866
        %v3931 = vpack.c.bf16 %v3867, %v3867
        %v3932 = vpack.c.bf16 %v3868, %v3868
        %v3933 = vpack.c.bf16 %v3869, %v3869
        %v3934 = vpack.c.bf16 %v3870, %v3870
        %v3935 = vpack.c.bf16 %v3871, %v3871
        %v3936 = vpack.c.bf16 %v3872, %v3872
        %v3937 = vpack.c.bf16 %v3873, %v3873
        %v3938 = vpack.c.bf16 %v3874, %v3874
        %v3939 = vpack.c.bf16 %v3875, %v3875
        %v3940 = vpack.c.bf16 %v3876, %v3876
        %v3941 = vpack.c.bf16 %v3877, %v3877
        %v3942 = vpack.c.bf16 %v3878, %v3878
        %v3943 = vpack.c.bf16 %v3879, %v3879
        %v3944 = vpack.c.bf16 %v3880, %v3880
        %v3945 = vpack.c.bf16 %v3881, %v3881
        %v3946 = vpack.c.bf16 %v3882, %v3882
        %v3947 = vpack.c.bf16 %v3883, %v3883
        %v3948 = vpack.c.bf16 %v3884, %v3884
        %v3949 = vpack.c.bf16 %v3885, %v3885
        %v3950 = vpack.c.bf16 %v3886, %v3886
        %v3951 = vpack.c.bf16 %v3887, %v3887
        %v3952 = vpack.c.bf16 %v3888, %v3888
        %v3953 = vpack.c.bf16 %v3889, %v3889
        %v3954 = vpack.c.bf16 %v3890, %v3890
        %v3955 = vpack.c.bf16 %v3891, %v3891
        %v3956 = vpack.c.bf16 %v3892, %v3892
        %v3957 = vpack.c.bf16 %v3893, %v3893
        %v3958 = vpack.c.bf16 %v3894, %v3894
        %v3959 = vpack.c.bf16 %v3895, %v3895
        %v3960 = vpack.c.bf16 %v3896, %v3896
        %v3961 = vpack.c.bf16 %v3897, %v3897
        %v3962 = vpack.c.bf16 %v3898, %v3898
        %v3963 = vpack.c.bf16 %v3899, %v3899
        %v3964 = vpack.c.bf16 %v3900, %v3900
        %v3965 = vpack.c.bf16 %v3901, %v3901
        %v3966 = vpack.c.bf16 %v3902, %v3902
        %v3967 = vpack.c.bf16 %v3903, %v3903
        %v3968 = vpack.c.bf16 %v3904, %v3904
        %v3969 = vpack.c.bf16 %v3905, %v3905
        %v3970 = vpack.c.bf16 %v3906, %v3906
        %v3971 = vpack.c.bf16 %v3907, %v3907
        %v3972 = vpack.c.bf16 %v3908, %v3908
        %v3973 = vpack.c.bf16 %v3909, %v3909
        %v3974 = vpack.c.bf16 %v3910, %v3910
        %v3975 = vpack.c.bf16 %v3911, %v3911
        %v3976 = vpack.c.bf16 %v3912, %v3912
        %v3977 = vpack.c.bf16 %v3913, %v3913
        %v3978 = vpack.c.bf16 %v3914, %v3914
        %v3979 = vpack.c.bf16 %v3915, %v3915
        %v3980 = vpack.c.bf16 %v3916, %v3916
        %v3981 = vpack.c.bf16 %v3917, %v3917
        %v3982 = vpack.c.bf16 %v3918, %v3918
        %v3983 = vpack.c.bf16 %v3919, %v3919
        %v3984 = vpack.c.bf16 %v3920, %v3920
        %v3985 = vpack.c.bf16 %v3921, %v3921
        %v3986 = vpack.c.bf16 %v3922, %v3922
        %v3987 = vpack.c.bf16 %v3923, %v3923
        %v3988 = vpack.c.bf16 %v3924, %v3924
        %v3989 = vpack.c.bf16 %v3925, %v3925
        %v3990 = vpack.c.bf16 %v3926, %v3926
        %s3991 = scalar_lea.vmem %s2, 144
        %v3992 = vld [vmem:[%s3991] sm:$0xf]
        %v3993 = vld [vmem:[%s3991 + $0x4] sm:$0xf]
        %v3994 = vld [vmem:[%s3991 + $0x8] sm:$0xf]
        %v3995 = vld [vmem:[%s3991 + $0xc] sm:$0xf]
        %v3996 = vld [vmem:[%s3991 + $0x10] sm:$0xf]
        %v3997 = vld [vmem:[%s3991 + $0x14] sm:$0xf]
        %v3998 = vld [vmem:[%s3991 + $0x18] sm:$0xf]
        %v3999 = vld [vmem:[%s3991 + $0x1c] sm:$0xf]
        %v4000 = vld [vmem:[%s3991 + $0x20] sm:$0xf]
        %v4001 = vld [vmem:[%s3991 + $0x24] sm:$0xf]
        %v4002 = vld [vmem:[%s3991 + $0x28] sm:$0xf]
        %v4003 = vld [vmem:[%s3991 + $0x2c] sm:$0xf]
        %v4004 = vld [vmem:[%s3991 + $0x30] sm:$0xf]
        %v4005 = vld [vmem:[%s3991 + $0x34] sm:$0xf]
        %v4006 = vld [vmem:[%s3991 + $0x38] sm:$0xf]
        %v4007 = vld [vmem:[%s3991 + $0x3c] sm:$0xf]
        %v4008 = vld [vmem:[%s3991 + $0x40] sm:$0xf]
        %v4009 = vld [vmem:[%s3991 + $0x44] sm:$0xf]
        %v4010 = vld [vmem:[%s3991 + $0x48] sm:$0xf]
        %v4011 = vld [vmem:[%s3991 + $0x4c] sm:$0xf]
        %v4012 = vld [vmem:[%s3991 + $0x50] sm:$0xf]
        %v4013 = vld [vmem:[%s3991 + $0x54] sm:$0xf]
        %v4014 = vld [vmem:[%s3991 + $0x58] sm:$0xf]
        %v4015 = vld [vmem:[%s3991 + $0x5c] sm:$0xf]
        %v4016 = vld [vmem:[%s3991 + $0x60] sm:$0xf]
        %v4017 = vld [vmem:[%s3991 + $0x64] sm:$0xf]
        %v4018 = vld [vmem:[%s3991 + $0x68] sm:$0xf]
        %v4019 = vld [vmem:[%s3991 + $0x6c] sm:$0xf]
        %v4020 = vld [vmem:[%s3991 + $0x70] sm:$0xf]
        %v4021 = vld [vmem:[%s3991 + $0x74] sm:$0xf]
        %v4022 = vld [vmem:[%s3991 + $0x78] sm:$0xf]
        %v4023 = vld [vmem:[%s3991 + $0x7c] sm:$0xf]
        %v4024 = vld [vmem:[%s3991 + $0x80] sm:$0xf]
        %v4025 = vld [vmem:[%s3991 + $0x84] sm:$0xf]
        %v4026 = vld [vmem:[%s3991 + $0x88] sm:$0xf]
        %v4027 = vld [vmem:[%s3991 + $0x8c] sm:$0xf]
        %s4028 = scalar_lea.vmem %s3, 2
        %v4029 = vld [vmem:[%s4028] sm:$0x1]
        %v4094 = vunpack.c.l.b16 %v3927
        %v4095 = vunpack.c.l.b16 %v3928
        %v4096 = vunpack.c.l.b16 %v3929
        %v4097 = vunpack.c.l.b16 %v3930
        %v4098 = vunpack.c.l.b16 %v3931
        %v4099 = vunpack.c.l.b16 %v3932
        %v4100 = vunpack.c.l.b16 %v3933
        %v4101 = vunpack.c.l.b16 %v3934
        %v4102 = vunpack.c.l.b16 %v3935
        %v4103 = vunpack.c.l.b16 %v3936
        %v4104 = vunpack.c.l.b16 %v3937
        %v4105 = vunpack.c.l.b16 %v3938
        %v4106 = vunpack.c.l.b16 %v3939
        %v4107 = vunpack.c.l.b16 %v3940
        %v4108 = vunpack.c.l.b16 %v3941
        %v4109 = vunpack.c.l.b16 %v3942
        %v4110 = vunpack.c.l.b16 %v3943
        %v4111 = vunpack.c.l.b16 %v3944
        %v4112 = vunpack.c.l.b16 %v3945
        %v4113 = vunpack.c.l.b16 %v3946
        %v4114 = vunpack.c.l.b16 %v3947
        %v4115 = vunpack.c.l.b16 %v3948
        %v4116 = vunpack.c.l.b16 %v3949
        %v4117 = vunpack.c.l.b16 %v3950
        %v4118 = vunpack.c.l.b16 %v3951
        %v4119 = vunpack.c.l.b16 %v3952
        %v4120 = vunpack.c.l.b16 %v3953
        %v4121 = vunpack.c.l.b16 %v3954
        %v4122 = vunpack.c.l.b16 %v3955
        %v4123 = vunpack.c.l.b16 %v3956
        %v4124 = vunpack.c.l.b16 %v3957
        %v4125 = vunpack.c.l.b16 %v3958
        %v4126 = vunpack.c.l.b16 %v3959
        %v4127 = vunpack.c.l.b16 %v3960
        %v4128 = vunpack.c.l.b16 %v3961
        %v4129 = vunpack.c.l.b16 %v3962
        %v4130 = vunpack.c.l.b16 %v3963
        %v4131 = vunpack.c.l.b16 %v3964
        %v4132 = vunpack.c.l.b16 %v3965
        %v4133 = vunpack.c.l.b16 %v3966
        %v4134 = vunpack.c.l.b16 %v3967
        %v4135 = vunpack.c.l.b16 %v3968
        %v4136 = vunpack.c.l.b16 %v3969
        %v4137 = vunpack.c.l.b16 %v3970
        %v4138 = vunpack.c.l.b16 %v3971
        %v4139 = vunpack.c.l.b16 %v3972
        %v4140 = vunpack.c.l.b16 %v3973
        %v4141 = vunpack.c.l.b16 %v3974
        %v4142 = vunpack.c.l.b16 %v3975
        %v4143 = vunpack.c.l.b16 %v3976
        %v4144 = vunpack.c.l.b16 %v3977
        %v4145 = vunpack.c.l.b16 %v3978
        %v4146 = vunpack.c.l.b16 %v3979
        %v4147 = vunpack.c.l.b16 %v3980
        %v4148 = vunpack.c.l.b16 %v3981
        %v4149 = vunpack.c.l.b16 %v3982
        %v4150 = vunpack.c.l.b16 %v3983
        %v4151 = vunpack.c.l.b16 %v3984
        %v4152 = vunpack.c.l.b16 %v3985
        %v4153 = vunpack.c.l.b16 %v3986
        %v4154 = vunpack.c.l.b16 %v3987
        %v4155 = vunpack.c.l.b16 %v3988
        %v4156 = vunpack.c.l.b16 %v3989
        %v4157 = vunpack.c.l.b16 %v3990
        %v4158 = vpack.c.b16 %v4094, %v4094
        %v4159 = vpack.c.b16 %v4095, %v4095
        %v4160 = vpack.c.b16 %v4096, %v4096
        %v4161 = vpack.c.b16 %v4097, %v4097
        %v4162 = vpack.c.b16 %v4098, %v4098
        %v4163 = vpack.c.b16 %v4099, %v4099
        %v4164 = vpack.c.b16 %v4100, %v4100
        %v4165 = vpack.c.b16 %v4101, %v4101
        %v4166 = vpack.c.b16 %v4102, %v4102
        %v4167 = vpack.c.b16 %v4103, %v4103
        %v4168 = vpack.c.b16 %v4104, %v4104
        %v4169 = vpack.c.b16 %v4105, %v4105
        %v4170 = vpack.c.b16 %v4106, %v4106
        %v4171 = vpack.c.b16 %v4107, %v4107
        %v4172 = vpack.c.b16 %v4108, %v4108
        %v4173 = vpack.c.b16 %v4109, %v4109
        %v4174 = vpack.c.b16 %v4110, %v4110
        %v4175 = vpack.c.b16 %v4111, %v4111
        %v4176 = vpack.c.b16 %v4112, %v4112
        %v4177 = vpack.c.b16 %v4113, %v4113
        %v4178 = vpack.c.b16 %v4114, %v4114
        %v4179 = vpack.c.b16 %v4115, %v4115
        %v4180 = vpack.c.b16 %v4116, %v4116
        %v4181 = vpack.c.b16 %v4117, %v4117
        %v4182 = vpack.c.b16 %v4118, %v4118
        %v4183 = vpack.c.b16 %v4119, %v4119
        %v4184 = vpack.c.b16 %v4120, %v4120
        %v4185 = vpack.c.b16 %v4121, %v4121
        %v4186 = vpack.c.b16 %v4122, %v4122
        %v4187 = vpack.c.b16 %v4123, %v4123
        %v4188 = vpack.c.b16 %v4124, %v4124
        %v4189 = vpack.c.b16 %v4125, %v4125
        %v4190 = vpack.c.b16 %v4126, %v4126
        %v4191 = vpack.c.b16 %v4127, %v4127
        %v4192 = vpack.c.b16 %v4128, %v4128
        %v4193 = vpack.c.b16 %v4129, %v4129
        %v4194 = vpack.c.b16 %v4130, %v4130
        %v4195 = vpack.c.b16 %v4131, %v4131
        %v4196 = vpack.c.b16 %v4132, %v4132
        %v4197 = vpack.c.b16 %v4133, %v4133
        %v4198 = vpack.c.b16 %v4134, %v4134
        %v4199 = vpack.c.b16 %v4135, %v4135
        %v4200 = vpack.c.b16 %v4136, %v4136
        %v4201 = vpack.c.b16 %v4137, %v4137
        %v4202 = vpack.c.b16 %v4138, %v4138
        %v4203 = vpack.c.b16 %v4139, %v4139
        %v4204 = vpack.c.b16 %v4140, %v4140
        %v4205 = vpack.c.b16 %v4141, %v4141
        %v4206 = vpack.c.b16 %v4142, %v4142
        %v4207 = vpack.c.b16 %v4143, %v4143
        %v4208 = vpack.c.b16 %v4144, %v4144
        %v4209 = vpack.c.b16 %v4145, %v4145
        %v4210 = vpack.c.b16 %v4146, %v4146
        %v4211 = vpack.c.b16 %v4147, %v4147
        %v4212 = vpack.c.b16 %v4148, %v4148
        %v4213 = vpack.c.b16 %v4149, %v4149
        %v4214 = vpack.c.b16 %v4150, %v4150
        %v4215 = vpack.c.b16 %v4151, %v4151
        %v4216 = vpack.c.b16 %v4152, %v4152
        %v4217 = vpack.c.b16 %v4153, %v4153
        %v4218 = vpack.c.b16 %v4154, %v4154
        %v4219 = vpack.c.b16 %v4155, %v4155
        %v4220 = vpack.c.b16 %v4156, %v4156
        %v4221 = vpack.c.b16 %v4157, %v4157
        %v4222 = vunpack.c.l.b16 %v4158
        %v4223 = vunpack.c.l.b16 %v4159
        %v4224 = vunpack.c.l.b16 %v4160
        %v4225 = vunpack.c.l.b16 %v4161
        %v4226 = vunpack.c.l.b16 %v4162
        %v4227 = vunpack.c.l.b16 %v4163
        %v4228 = vunpack.c.l.b16 %v4164
        %v4229 = vunpack.c.l.b16 %v4165
        %v4230 = vunpack.c.l.b16 %v4166
        %v4231 = vunpack.c.l.b16 %v4167
        %v4232 = vunpack.c.l.b16 %v4168
        %v4233 = vunpack.c.l.b16 %v4169
        %v4234 = vunpack.c.l.b16 %v4170
        %v4235 = vunpack.c.l.b16 %v4171
        %v4236 = vunpack.c.l.b16 %v4172
        %v4237 = vunpack.c.l.b16 %v4173
        %v4238 = vunpack.c.l.b16 %v4174
        %v4239 = vunpack.c.l.b16 %v4175
        %v4240 = vunpack.c.l.b16 %v4176
        %v4241 = vunpack.c.l.b16 %v4177
        %v4242 = vunpack.c.l.b16 %v4178
        %v4243 = vunpack.c.l.b16 %v4179
        %v4244 = vunpack.c.l.b16 %v4180
        %v4245 = vunpack.c.l.b16 %v4181
        %v4246 = vunpack.c.l.b16 %v4182
        %v4247 = vunpack.c.l.b16 %v4183
        %v4248 = vunpack.c.l.b16 %v4184
        %v4249 = vunpack.c.l.b16 %v4185
        %v4250 = vunpack.c.l.b16 %v4186
        %v4251 = vunpack.c.l.b16 %v4187
        %v4252 = vunpack.c.l.b16 %v4188
        %v4253 = vunpack.c.l.b16 %v4189
        %v4254 = vunpack.c.l.b16 %v4190
        %v4255 = vunpack.c.l.b16 %v4191
        %v4256 = vunpack.c.l.b16 %v4192
        %v4257 = vunpack.c.l.b16 %v4193
        %v4258 = vunpack.c.l.b16 %v4194
        %v4259 = vunpack.c.l.b16 %v4195
        %v4260 = vunpack.c.l.b16 %v4196
        %v4261 = vunpack.c.l.b16 %v4197
        %v4262 = vunpack.c.l.b16 %v4198
        %v4263 = vunpack.c.l.b16 %v4199
        %v4264 = vunpack.c.l.b16 %v4200
        %v4265 = vunpack.c.l.b16 %v4201
        %v4266 = vunpack.c.l.b16 %v4202
        %v4267 = vunpack.c.l.b16 %v4203
        %v4268 = vunpack.c.l.b16 %v4204
        %v4269 = vunpack.c.l.b16 %v4205
        %v4270 = vunpack.c.l.b16 %v4206
        %v4271 = vunpack.c.l.b16 %v4207
        %v4272 = vunpack.c.l.b16 %v4208
        %v4273 = vunpack.c.l.b16 %v4209
        %v4274 = vunpack.c.l.b16 %v4210
        %v4275 = vunpack.c.l.b16 %v4211
        %v4276 = vunpack.c.l.b16 %v4212
        %v4277 = vunpack.c.l.b16 %v4213
        %v4278 = vunpack.c.l.b16 %v4214
        %v4279 = vunpack.c.l.b16 %v4215
        %v4280 = vunpack.c.l.b16 %v4216
        %v4281 = vunpack.c.l.b16 %v4217
        %v4282 = vunpack.c.l.b16 %v4218
        %v4283 = vunpack.c.l.b16 %v4219
        %v4284 = vunpack.c.l.b16 %v4220
        %v4285 = vunpack.c.l.b16 %v4221
        %v4286 = vrot.slane %v4223, 7
        %v4287 = vsel %vm3287, %v4286, %v4222
        %v4288 = vrot.slane %v4224, 6
        %v4289 = vsel %vm3291, %v4288, %v4287
        %v4290 = vrot.slane %v4225, 5
        %v4291 = vsel %vm3295, %v4290, %v4289
        %v4292 = vrot.slane %v4226, 4
        %vm4293 = vcmask 1044484
        %v4294 = vsel %vm4293, %v4292, %v4291
        %v4295 = vrot.slane %v4227, 3
        %vm4296 = vcmask 1045509
        %v4297 = vsel %vm4296, %v4295, %v4294
        %v4298 = vrot.slane %v4228, 2
        %vm4299 = vcmask 1046534
        %v4300 = vsel %vm4299, %v4298, %v4297
        %v4301 = vrot.slane %v4229, 1
        %vm4302 = vcmask 1047559
        %v4303 = vsel %vm4302, %v4301, %v4300
        %v4304 = vrot.slane %v4231, 7
        %v4305 = vsel %vm3287, %v4304, %v4230
        %v4306 = vrot.slane %v4232, 6
        %v4307 = vsel %vm3291, %v4306, %v4305
        %v4308 = vrot.slane %v4233, 5
        %v4309 = vsel %vm3295, %v4308, %v4307
        %v4310 = vrot.slane %v4234, 4
        %v4311 = vsel %vm4293, %v4310, %v4309
        %v4312 = vrot.slane %v4235, 3
        %v4313 = vsel %vm4296, %v4312, %v4311
        %v4314 = vrot.slane %v4236, 2
        %v4315 = vsel %vm4299, %v4314, %v4313
        %v4316 = vrot.slane %v4237, 1
        %v4317 = vsel %vm4302, %v4316, %v4315
        %v4318 = vrot.slane %v4239, 7
        %v4319 = vsel %vm3287, %v4318, %v4238
        %v4320 = vrot.slane %v4240, 6
        %v4321 = vsel %vm3291, %v4320, %v4319
        %v4322 = vrot.slane %v4241, 5
        %v4323 = vsel %vm3295, %v4322, %v4321
        %v4324 = vrot.slane %v4242, 4
        %v4325 = vsel %vm4293, %v4324, %v4323
        %v4326 = vrot.slane %v4243, 3
        %v4327 = vsel %vm4296, %v4326, %v4325
        %v4328 = vrot.slane %v4244, 2
        %v4329 = vsel %vm4299, %v4328, %v4327
        %v4330 = vrot.slane %v4245, 1
        %v4331 = vsel %vm4302, %v4330, %v4329
        %v4332 = vrot.slane %v4247, 7
        %v4333 = vsel %vm3287, %v4332, %v4246
        %v4334 = vrot.slane %v4248, 6
        %v4335 = vsel %vm3291, %v4334, %v4333
        %v4336 = vrot.slane %v4249, 5
        %v4337 = vsel %vm3295, %v4336, %v4335
        %v4338 = vrot.slane %v4250, 4
        %v4339 = vsel %vm4293, %v4338, %v4337
        %v4340 = vrot.slane %v4251, 3
        %v4341 = vsel %vm4296, %v4340, %v4339
        %v4342 = vrot.slane %v4252, 2
        %v4343 = vsel %vm4299, %v4342, %v4341
        %v4344 = vrot.slane %v4253, 1
        %v4345 = vsel %vm4302, %v4344, %v4343
        %v4346 = vrot.slane %v4255, 7
        %v4347 = vsel %vm3287, %v4346, %v4254
        %v4348 = vrot.slane %v4256, 6
        %v4349 = vsel %vm3291, %v4348, %v4347
        %v4350 = vrot.slane %v4257, 5
        %v4351 = vsel %vm3295, %v4350, %v4349
        %v4352 = vrot.slane %v4258, 4
        %v4353 = vsel %vm4293, %v4352, %v4351
        %v4354 = vrot.slane %v4259, 3
        %v4355 = vsel %vm4296, %v4354, %v4353
        %v4356 = vrot.slane %v4260, 2
        %v4357 = vsel %vm4299, %v4356, %v4355
        %v4358 = vrot.slane %v4261, 1
        %v4359 = vsel %vm4302, %v4358, %v4357
        %v4360 = vrot.slane %v4263, 7
        %v4361 = vsel %vm3287, %v4360, %v4262
        %v4362 = vrot.slane %v4264, 6
        %v4363 = vsel %vm3291, %v4362, %v4361
        %v4364 = vrot.slane %v4265, 5
        %v4365 = vsel %vm3295, %v4364, %v4363
        %v4366 = vrot.slane %v4266, 4
        %v4367 = vsel %vm4293, %v4366, %v4365
        %v4368 = vrot.slane %v4267, 3
        %v4369 = vsel %vm4296, %v4368, %v4367
        %v4370 = vrot.slane %v4268, 2
        %v4371 = vsel %vm4299, %v4370, %v4369
        %v4372 = vrot.slane %v4269, 1
        %v4373 = vsel %vm4302, %v4372, %v4371
        %v4374 = vrot.slane %v4271, 7
        %v4375 = vsel %vm3287, %v4374, %v4270
        %v4376 = vrot.slane %v4272, 6
        %v4377 = vsel %vm3291, %v4376, %v4375
        %v4378 = vrot.slane %v4273, 5
        %v4379 = vsel %vm3295, %v4378, %v4377
        %v4380 = vrot.slane %v4274, 4
        %v4381 = vsel %vm4293, %v4380, %v4379
        %v4382 = vrot.slane %v4275, 3
        %v4383 = vsel %vm4296, %v4382, %v4381
        %v4384 = vrot.slane %v4276, 2
        %v4385 = vsel %vm4299, %v4384, %v4383
        %v4386 = vrot.slane %v4277, 1
        %v4387 = vsel %vm4302, %v4386, %v4385
        %v4388 = vrot.slane %v4279, 7
        %v4389 = vsel %vm3287, %v4388, %v4278
        %v4390 = vrot.slane %v4280, 6
        %v4391 = vsel %vm3291, %v4390, %v4389
        %v4392 = vrot.slane %v4281, 5
        %v4393 = vsel %vm3295, %v4392, %v4391
        %v4394 = vrot.slane %v4282, 4
        %v4395 = vsel %vm4293, %v4394, %v4393
        %v4396 = vrot.slane %v4283, 3
        %v4397 = vsel %vm4296, %v4396, %v4395
        %v4398 = vrot.slane %v4284, 2
        %v4399 = vsel %vm4299, %v4398, %v4397
        %v4400 = vrot.slane %v4285, 1
        %v4401 = vsel %vm4302, %v4400, %v4399
        %v4402 = vpack.c.b16 %v4303, %v4303
        %v4403 = vpack.c.b16 %v4317, %v4317
        %v4404 = vpack.c.b16 %v4331, %v4331
        %v4405 = vpack.c.b16 %v4345, %v4345
        %v4406 = vpack.c.b16 %v4359, %v4359
        %v4407 = vpack.c.b16 %v4373, %v4373
        %v4408 = vpack.c.b16 %v4387, %v4387
        %v4409 = vpack.c.b16 %v4401, %v4401
        %v4411 = vshrl.u32 %v4402, 16
        %v4413 = vrot.slane %v4411, 7
        %v4414 = vshll.u32 %v4402, 16
        %v4416 = vor.u32 %v4413, %v4414
        %v4418 = vshrl.u32 %v4403, 16
        %v4420 = vrot.slane %v4418, 7
        %v4421 = vshll.u32 %v4403, 16
        %v4423 = vor.u32 %v4420, %v4421
        %v4425 = vshrl.u32 %v4404, 16
        %v4427 = vrot.slane %v4425, 7
        %v4428 = vshll.u32 %v4404, 16
        %v4430 = vor.u32 %v4427, %v4428
        %v4432 = vshrl.u32 %v4405, 16
        %v4434 = vrot.slane %v4432, 7
        %v4435 = vshll.u32 %v4405, 16
        %v4437 = vor.u32 %v4434, %v4435
        %v4439 = vshrl.u32 %v4406, 16
        %v4441 = vrot.slane %v4439, 7
        %v4442 = vshll.u32 %v4406, 16
        %v4444 = vor.u32 %v4441, %v4442
        %v4446 = vshrl.u32 %v4407, 16
        %v4448 = vrot.slane %v4446, 7
        %v4449 = vshll.u32 %v4407, 16
        %v4451 = vor.u32 %v4448, %v4449
        %v4453 = vshrl.u32 %v4408, 16
        %v4455 = vrot.slane %v4453, 7
        %v4456 = vshll.u32 %v4408, 16
        %v4458 = vor.u32 %v4455, %v4456
        %v4460 = vshrl.u32 %v4409, 16
        %v4462 = vrot.slane %v4460, 7
        %v4463 = vshll.u32 %v4409, 16
        %v4465 = vor.u32 %v4462, %v4463
        %v4474 = vsel %vm635, 0, %v4416
        %v4475 = vsel %vm635, 0, %v4423
        %v4476 = vsel %vm635, 0, %v4430
        %v4477 = vsel %vm635, 0, %v4437
        %v4478 = vsel %vm635, 0, %v4444
        %v4479 = vsel %vm635, 0, %v4451
        %v4480 = vsel %vm635, 0, %v4458
        %v4481 = vsel %vm635, 0, %v4465
        %vm4482 = vcmask 1044480
        %vm4483 = vsmask.f32 4352
        %vm4484 = vmand %vm4482, %vm4483
        %v4485 = vsel %vm4484, %v636, 0
        %v4486 = vsel %vm4484, %v4474, 0
        %v4487 = vsel %vm4484, %v4475, 0
        %v4488 = vsel %vm4484, %v4476, 0
        %v4489 = vsel %vm4484, %v4477, 0
        %v4490 = vsel %vm4484, %v4478, 0
        %v4491 = vsel %vm4484, %v4479, 0
        %v4492 = vsel %vm4484, %v4480, 0
        %v4493 = vsel %vm4484, %v4481, 0
        %v4502 = vunpack.c.l.b16 %v4485
        %v4503 = vunpack.c.h.b16 %v4485
        %v4504 = vunpack.c.l.b16 %v4486
        %v4505 = vunpack.c.h.b16 %v4486
        %v4506 = vunpack.c.l.b16 %v4487
        %v4507 = vunpack.c.h.b16 %v4487
        %v4508 = vunpack.c.l.b16 %v4488
        %v4509 = vunpack.c.h.b16 %v4488
        %v4510 = vunpack.c.l.b16 %v4489
        %v4511 = vunpack.c.h.b16 %v4489
        %v4512 = vunpack.c.l.b16 %v4490
        %v4513 = vunpack.c.h.b16 %v4490
        %v4514 = vunpack.c.l.b16 %v4491
        %v4515 = vunpack.c.h.b16 %v4491
        %v4516 = vunpack.c.l.b16 %v4492
        %v4517 = vunpack.c.h.b16 %v4492
        %v4518 = vpack.c.b16 %v4502, %v4502
        %v4519 = vpack.c.b16 %v4503, %v4503
        %v4520 = vpack.c.b16 %v4504, %v4504
        %v4521 = vpack.c.b16 %v4505, %v4505
        %v4522 = vpack.c.b16 %v4506, %v4506
        %v4523 = vpack.c.b16 %v4507, %v4507
        %v4524 = vpack.c.b16 %v4508, %v4508
        %v4525 = vpack.c.b16 %v4509, %v4509
        %v4526 = vpack.c.b16 %v4510, %v4510
        %v4527 = vpack.c.b16 %v4511, %v4511
        %v4528 = vpack.c.b16 %v4512, %v4512
        %v4529 = vpack.c.b16 %v4513, %v4513
        %v4530 = vpack.c.b16 %v4514, %v4514
        %v4531 = vpack.c.b16 %v4515, %v4515
        %v4532 = vpack.c.b16 %v4516, %v4516
        %v4533 = vpack.c.b16 %v4517, %v4517
        %vm4534 = vsmask.f32 3328
        %vm4535 = vsmask.f32 7440
        %vm4536 = vmor %vm4534, %vm4535
        %v4538 = vshrl.u32 %v4518, 16
        %v4540 = vrot.slane %v4538, 4
        %v4541 = vshll.u32 %v4518, 16
        %v4543 = vrot.slane %v4541, 5
        %v4544 = vor.u32 %v4540, %v4543
        %v4545 = vrot.slane %v4544, 4
        %v4547 = vshll.u32 %v4519, 16
        %v4549 = vrot.slane %v4547, 5
        %v4550 = vsel %vm4536, %v4545, %v4549
        %v4552 = vshrl.u32 %v4520, 16
        %v4554 = vrot.slane %v4552, 4
        %v4555 = vshll.u32 %v4520, 16
        %v4557 = vrot.slane %v4555, 5
        %v4558 = vor.u32 %v4554, %v4557
        %v4559 = vrot.slane %v4558, 4
        %v4561 = vshll.u32 %v4521, 16
        %v4563 = vrot.slane %v4561, 5
        %v4564 = vsel %vm4536, %v4559, %v4563
        %v4566 = vshrl.u32 %v4522, 16
        %v4568 = vrot.slane %v4566, 4
        %v4569 = vshll.u32 %v4522, 16
        %v4571 = vrot.slane %v4569, 5
        %v4572 = vor.u32 %v4568, %v4571
        %v4573 = vrot.slane %v4572, 4
        %v4575 = vshll.u32 %v4523, 16
        %v4577 = vrot.slane %v4575, 5
        %v4578 = vsel %vm4536, %v4573, %v4577
        %v4580 = vshrl.u32 %v4524, 16
        %v4582 = vrot.slane %v4580, 4
        %v4583 = vshll.u32 %v4524, 16
        %v4585 = vrot.slane %v4583, 5
        %v4586 = vor.u32 %v4582, %v4585
        %v4587 = vrot.slane %v4586, 4
        %v4589 = vshll.u32 %v4525, 16
        %v4591 = vrot.slane %v4589, 5
        %v4592 = vsel %vm4536, %v4587, %v4591
        %v4594 = vshrl.u32 %v4526, 16
        %v4596 = vrot.slane %v4594, 4
        %v4597 = vshll.u32 %v4526, 16
        %v4599 = vrot.slane %v4597, 5
        %v4600 = vor.u32 %v4596, %v4599
        %v4601 = vrot.slane %v4600, 4
        %v4603 = vshll.u32 %v4527, 16
        %v4605 = vrot.slane %v4603, 5
        %v4606 = vsel %vm4536, %v4601, %v4605
        %v4608 = vshrl.u32 %v4528, 16
        %v4610 = vrot.slane %v4608, 4
        %v4611 = vshll.u32 %v4528, 16
        %v4613 = vrot.slane %v4611, 5
        %v4614 = vor.u32 %v4610, %v4613
        %v4615 = vrot.slane %v4614, 4
        %v4617 = vshll.u32 %v4529, 16
        %v4619 = vrot.slane %v4617, 5
        %v4620 = vsel %vm4536, %v4615, %v4619
        %v4622 = vshrl.u32 %v4530, 16
        %v4624 = vrot.slane %v4622, 4
        %v4625 = vshll.u32 %v4530, 16
        %v4627 = vrot.slane %v4625, 5
        %v4628 = vor.u32 %v4624, %v4627
        %v4629 = vrot.slane %v4628, 4
        %v4631 = vshll.u32 %v4531, 16
        %v4633 = vrot.slane %v4631, 5
        %v4634 = vsel %vm4536, %v4629, %v4633
        %v4636 = vshrl.u32 %v4532, 16
        %v4638 = vrot.slane %v4636, 4
        %v4639 = vshll.u32 %v4532, 16
        %v4641 = vrot.slane %v4639, 5
        %v4642 = vor.u32 %v4638, %v4641
        %v4643 = vrot.slane %v4642, 4
        %v4645 = vshll.u32 %v4533, 16
        %v4647 = vrot.slane %v4645, 5
        %v4648 = vsel %vm4536, %v4643, %v4647
        %vm4649 = vcmask 1042432
        %vm4650 = vcmask 1046532
        %vm4651 = vmor %vm4649, %vm4650
        %v4652 = vrot.slane %v4518, 5
        %v4653 = vrot.slane %v4652, 4
        %v4654 = vrot.slane %v4519, 5
        %v4655 = vsel %vm4651, %v4653, %v4654
        %v4656 = vrot.slane %v4520, 5
        %v4657 = vrot.slane %v4656, 4
        %v4658 = vrot.slane %v4521, 5
        %v4659 = vsel %vm4651, %v4657, %v4658
        %v4660 = vrot.slane %v4522, 5
        %v4661 = vrot.slane %v4660, 4
        %v4662 = vrot.slane %v4523, 5
        %v4663 = vsel %vm4651, %v4661, %v4662
        %v4664 = vrot.slane %v4524, 5
        %v4665 = vrot.slane %v4664, 4
        %v4666 = vrot.slane %v4525, 5
        %v4667 = vsel %vm4651, %v4665, %v4666
        %v4668 = vrot.slane %v4526, 5
        %v4669 = vrot.slane %v4668, 4
        %v4670 = vrot.slane %v4527, 5
        %v4671 = vsel %vm4651, %v4669, %v4670
        %v4672 = vrot.slane %v4528, 5
        %v4673 = vrot.slane %v4672, 4
        %v4674 = vrot.slane %v4529, 5
        %v4675 = vsel %vm4651, %v4673, %v4674
        %v4676 = vrot.slane %v4530, 5
        %v4677 = vrot.slane %v4676, 4
        %v4678 = vrot.slane %v4531, 5
        %v4679 = vsel %vm4651, %v4677, %v4678
        %v4680 = vrot.slane %v4532, 5
        %v4681 = vrot.slane %v4680, 4
        %v4682 = vrot.slane %v4533, 5
        %v4683 = vsel %vm4651, %v4681, %v4682
        %v4685 = vunpack.c.l.b16 %v4493
        %v4686 = vunpack.c.h.b16 %v4493
        %v4687 = vpack.c.b16 %v4685, %v4685
        %v4688 = vpack.c.b16 %v4686, %v4686
        %v4690 = vshrl.u32 %v4687, 16
        %v4692 = vrot.slane %v4690, 4
        %v4693 = vshll.u32 %v4687, 16
        %v4695 = vrot.slane %v4693, 5
        %v4696 = vor.u32 %v4692, %v4695
        %v4697 = vrot.slane %v4696, 4
        %v4699 = vshll.u32 %v4688, 16
        %v4701 = vrot.slane %v4699, 5
        %v4702 = vsel %vm4536, %v4697, %v4701
        %v4703 = vrot.slane %v4687, 5
        %v4704 = vrot.slane %v4703, 4
        %v4705 = vrot.slane %v4688, 5
        %v4706 = vsel %vm4651, %v4704, %v4705
        %v4707 = vpack.c.b16 %v4504, %v4502
        %v4708 = vpack.c.b16 %v4508, %v4506
        %v4709 = vpack.c.b16 %v4512, %v4510
        %v4710 = vpack.c.b16 %v4516, %v4514
        %v4711 = vunpack.c.l.b16 %v4550
        %v4712 = vunpack.c.l.b16 %v4564
        %v4713 = vunpack.c.l.b16 %v4578
        %v4714 = vunpack.c.l.b16 %v4592
        %v4715 = vunpack.c.l.b16 %v4606
        %v4716 = vunpack.c.l.b16 %v4620
        %v4717 = vunpack.c.l.b16 %v4634
        %v4718 = vunpack.c.l.b16 %v4648
        %v4719 = vpack.c.b16 %v4712, %v4711
        %v4720 = vpack.c.b16 %v4714, %v4713
        %v4721 = vpack.c.b16 %v4716, %v4715
        %v4722 = vpack.c.b16 %v4718, %v4717
        %4723 = vrot.lane.b32.xlu0 %v4719, 32
        %v4724 = vpop.permute.xlu0 %4723
        %4725 = vrot.lane.b32.xlu0 %v4720, 32
        %v4726 = vpop.permute.xlu0 %4725
        %4727 = vrot.lane.b32.xlu0 %v4721, 32
        %v4728 = vpop.permute.xlu0 %4727
        %4729 = vrot.lane.b32.xlu0 %v4722, 32
        %v4730 = vpop.permute.xlu0 %4729
        %v4731 = vunpack.c.l.b16 %v4655
        %v4732 = vunpack.c.l.b16 %v4659
        %v4733 = vunpack.c.l.b16 %v4663
        %v4734 = vunpack.c.l.b16 %v4667
        %v4735 = vunpack.c.l.b16 %v4671
        %v4736 = vunpack.c.l.b16 %v4675
        %v4737 = vunpack.c.l.b16 %v4679
        %v4738 = vunpack.c.l.b16 %v4683
        %v4739 = vpack.c.b16 %v4732, %v4731
        %v4740 = vpack.c.b16 %v4734, %v4733
        %v4741 = vpack.c.b16 %v4736, %v4735
        %v4742 = vpack.c.b16 %v4738, %v4737
        %4743 = vrot.lane.b32.xlu0 %v4739, 64
        %v4744 = vpop.permute.xlu0 %4743
        %4745 = vrot.lane.b32.xlu0 %v4740, 64
        %v4746 = vpop.permute.xlu0 %4745
        %4747 = vrot.lane.b32.xlu0 %v4741, 64
        %v4748 = vpop.permute.xlu0 %4747
        %4749 = vrot.lane.b32.xlu0 %v4742, 64
        %v4750 = vpop.permute.xlu0 %4749
        %v4751 = vpack.c.b16 %v4506, %v4504
        %v4752 = vpack.c.b16 %v4510, %v4508
        %v4753 = vpack.c.b16 %v4514, %v4512
        %v4754 = vpack.c.b16 %v4685, %v4516
        %4755 = vrot.lane.b32.xlu0 %v4751, 96
        %v4756 = vpop.permute.xlu0 %4755
        %4757 = vrot.lane.b32.xlu0 %v4752, 96
        %v4758 = vpop.permute.xlu0 %4757
        %4759 = vrot.lane.b32.xlu0 %v4753, 96
        %v4760 = vpop.permute.xlu0 %4759
        %4761 = vrot.lane.b32.xlu0 %v4754, 96
        %v4762 = vpop.permute.xlu0 %4761
        %v4763 = vunpack.c.l.b16 %v4702
        %v4764 = vpack.c.b16 %v4713, %v4712
        %v4765 = vpack.c.b16 %v4715, %v4714
        %v4766 = vpack.c.b16 %v4717, %v4716
        %v4767 = vpack.c.b16 %v4763, %v4718
        %v4768 = vunpack.c.l.b16 %v4706
        %v4769 = vpack.c.b16 %v4733, %v4732
        %v4770 = vpack.c.b16 %v4735, %v4734
        %v4771 = vpack.c.b16 %v4737, %v4736
        %v4772 = vpack.c.b16 %v4768, %v4738
        %4773 = vrot.lane.b32.xlu0 %v4769, 32
        %v4774 = vpop.permute.xlu0 %4773
        %4775 = vrot.lane.b32.xlu0 %v4770, 32
        %v4776 = vpop.permute.xlu0 %4775
        %4777 = vrot.lane.b32.xlu0 %v4771, 32
        %v4778 = vpop.permute.xlu0 %4777
        %4779 = vrot.lane.b32.xlu0 %v4772, 32
        %v4780 = vpop.permute.xlu0 %4779
        %v4781 = vpack.c.b16 %v4502, %v4685
        %4782 = vrot.lane.b32.xlu0 %v4708, 64
        %v4783 = vpop.permute.xlu0 %4782
        %4784 = vrot.lane.b32.xlu0 %v4709, 64
        %v4785 = vpop.permute.xlu0 %4784
        %4786 = vrot.lane.b32.xlu0 %v4710, 64
        %v4787 = vpop.permute.xlu0 %4786
        %4788 = vrot.lane.b32.xlu0 %v4781, 64
        %v4789 = vpop.permute.xlu0 %4788
        %v4790 = vpack.c.b16 %v4711, %v4763
        %4791 = vrot.lane.b32.xlu0 %v4720, 96
        %v4792 = vpop.permute.xlu0 %4791
        %4793 = vrot.lane.b32.xlu0 %v4721, 96
        %v4794 = vpop.permute.xlu0 %4793
        %4795 = vrot.lane.b32.xlu0 %v4722, 96
        %v4796 = vpop.permute.xlu0 %4795
        %4797 = vrot.lane.b32.xlu0 %v4790, 96
        %v4798 = vpop.permute.xlu0 %4797
        %v4799 = vpack.c.b16 %v4731, %v4768
        %v4802 = vsel %vm1316, %v4707, %v4724
        %v4805 = vsel %vm1316, %v4708, %v4726
        %v4808 = vsel %vm1316, %v4709, %v4728
        %v4811 = vsel %vm1316, %v4710, %v4730
        %v4813 = vsel %vm1448, %v4802, %v4744
        %v4815 = vsel %vm1448, %v4805, %v4746
        %v4817 = vsel %vm1448, %v4808, %v4748
        %v4819 = vsel %vm1448, %v4811, %v4750
        %v4821 = vsel %vm2520, %v4813, %v4756
        %v4824 = vsel %vm2520, %v4815, %v4758
        %v4827 = vsel %vm2520, %v4817, %v4760
        %v4830 = vsel %vm2520, %v4819, %v4762
        %v4834 = vsel %vm1316, %v4764, %v4774
        %v4837 = vsel %vm1316, %v4765, %v4776
        %v4840 = vsel %vm1316, %v4766, %v4778
        %v4843 = vsel %vm1316, %v4767, %v4780
        %v4845 = vsel %vm1448, %v4834, %v4783
        %v4847 = vsel %vm1448, %v4837, %v4785
        %v4849 = vsel %vm1448, %v4840, %v4787
        %v4851 = vsel %vm1448, %v4843, %v4789
        %v4853 = vsel %vm2520, %v4845, %v4792
        %v4856 = vsel %vm2520, %v4847, %v4794
        %v4859 = vsel %vm2520, %v4849, %v4796
        %v4862 = vsel %vm2520, %v4851, %v4798
        %v4865 = vperm.slane %v4029, 0
        %v4903 = vunpack.c.l.b16 %v3992
        %v4904 = vunpack.c.l.b16 %v3993
        %v4905 = vunpack.c.l.b16 %v3994
        %v4906 = vunpack.c.l.b16 %v3995
        %v4907 = vunpack.c.l.b16 %v3996
        %v4908 = vunpack.c.l.b16 %v3997
        %v4909 = vunpack.c.l.b16 %v3998
        %v4910 = vunpack.c.l.b16 %v3999
        %v4911 = vunpack.c.l.b16 %v4000
        %v4912 = vunpack.c.l.b16 %v4001
        %v4913 = vunpack.c.l.b16 %v4002
        %v4914 = vunpack.c.l.b16 %v4003
        %v4915 = vunpack.c.l.b16 %v4004
        %v4916 = vunpack.c.l.b16 %v4005
        %v4917 = vunpack.c.l.b16 %v4006
        %v4918 = vunpack.c.l.b16 %v4007
        %v4919 = vunpack.c.l.b16 %v4008
        %v4920 = vunpack.c.l.b16 %v4009
        %v4921 = vunpack.c.l.b16 %v4010
        %v4922 = vunpack.c.l.b16 %v4011
        %v4923 = vunpack.c.l.b16 %v4012
        %v4924 = vunpack.c.l.b16 %v4013
        %v4925 = vunpack.c.l.b16 %v4014
        %v4926 = vunpack.c.l.b16 %v4015
        %v4927 = vunpack.c.l.b16 %v4016
        %v4928 = vunpack.c.l.b16 %v4017
        %v4929 = vunpack.c.l.b16 %v4018
        %v4930 = vunpack.c.l.b16 %v4019
        %v4931 = vunpack.c.l.b16 %v4020
        %v4932 = vunpack.c.l.b16 %v4021
        %v4933 = vunpack.c.l.b16 %v4022
        %v4934 = vunpack.c.l.b16 %v4023
        %v4935 = vunpack.c.l.b16 %v4024
        %v4936 = vunpack.c.l.b16 %v4025
        %v4937 = vunpack.c.l.b16 %v4026
        %v4938 = vunpack.c.l.b16 %v4027
        %v4939 = vpack.c.b16 %v4904, %v4903
        %v4940 = vpack.c.b16 %v4906, %v4905
        %v4941 = vpack.c.b16 %v4908, %v4907
        %v4942 = vpack.c.b16 %v4910, %v4909
        %v4943 = vpack.c.b16 %v4912, %v4911
        %v4944 = vpack.c.b16 %v4914, %v4913
        %v4945 = vpack.c.b16 %v4916, %v4915
        %v4946 = vpack.c.b16 %v4918, %v4917
        %v4947 = vpack.c.b16 %v4920, %v4919
        %v4948 = vpack.c.b16 %v4922, %v4921
        %v4949 = vpack.c.b16 %v4924, %v4923
        %v4950 = vpack.c.b16 %v4926, %v4925
        %v4951 = vpack.c.b16 %v4928, %v4927
        %v4952 = vpack.c.b16 %v4930, %v4929
        %v4953 = vpack.c.b16 %v4932, %v4931
        %v4954 = vpack.c.b16 %v4934, %v4933
        %v4955 = vpack.c.b16 %v4936, %v4935
        %v4956 = vpack.c.b16 %v4938, %v4937
        %v4976 = vsel %vm1316, %v4740, 0
        %v4979 = vsel %vm1316, %v4741, 0
        %v4982 = vsel %vm1316, %v4742, 0
        %v4985 = vsel %vm1316, %v4799, 0
        %4987 = vmatpush.bf16.msra.mxu0 %v4946
        %4988 = vmatpush.bf16.msra.mxu0 %v4945
        %4989 = vmatpush.bf16.msra.mxu0 %v4944
        %4990 = vmatpush.bf16.msra.mxu0 %v4943
        %4991 = vmatpush.bf16.msra.mxu0 %v4942
        %4992 = vmatpush.bf16.msra.mxu0 %v4941
        %4993 = vmatpush.bf16.msra.mxu0 %v4940
        %4994 = vmatpush.bf16.msra.mxu0 %v4939
        %4995 = vmatmul.bf16.gmra.mxu0 %v4821
        %v4996 = vpop.f32.mrf.mxu0
        %v4997 = vadd.f32 %v4865, %v4996
        %v4998 = vpop.f32.mrf.mxu0
        %v4999 = vadd.f32 %v4865, %v4998
        %5000 = vmatmul.bf16.gmra.mxu0 %v4824
        %v5001 = vpop.f32.mrf.mxu0
        %v5002 = vadd.f32 %v4865, %v5001
        %v5003 = vpop.f32.mrf.mxu0
        %v5004 = vadd.f32 %v4865, %v5003
        %5005 = vmatmul.bf16.gmra.mxu0 %v4827
        %v5006 = vpop.f32.mrf.mxu0
        %v5007 = vadd.f32 %v4865, %v5006
        %v5008 = vpop.f32.mrf.mxu0
        %v5009 = vadd.f32 %v4865, %v5008
        %5010 = vmatmul.bf16.gmra.mxu0 %v4830
        %v5011 = vpop.f32.mrf.mxu0
        %v5012 = vadd.f32 %v4865, %v5011
        %v5013 = vpop.f32.mrf.mxu0
        %v5014 = vadd.f32 %v4865, %v5013
        %5015 = vdwg.mxu0
        %5016 = vmatpush.bf16.msra.mxu0 %v4954
        %5017 = vmatpush.bf16.msra.mxu0 %v4953
        %5018 = vmatpush.bf16.msra.mxu0 %v4952
        %5019 = vmatpush.bf16.msra.mxu0 %v4951
        %5020 = vmatpush.bf16.msra.mxu0 %v4950
        %5021 = vmatpush.bf16.msra.mxu0 %v4949
        %5022 = vmatpush.bf16.msra.mxu0 %v4948
        %5023 = vmatpush.bf16.msra.mxu0 %v4947
        %5024 = vmatmul.bf16.gmra.mxu0 %v4853
        %v5025 = vpop.f32.mrf.mxu0
        %v5026 = vadd.f32 %v4997, %v5025
        %v5027 = vpop.f32.mrf.mxu0
        %v5028 = vadd.f32 %v4999, %v5027
        %5029 = vmatmul.bf16.gmra.mxu0 %v4856
        %v5030 = vpop.f32.mrf.mxu0
        %v5031 = vadd.f32 %v5002, %v5030
        %v5032 = vpop.f32.mrf.mxu0
        %v5033 = vadd.f32 %v5004, %v5032
        %5034 = vmatmul.bf16.gmra.mxu0 %v4859
        %v5035 = vpop.f32.mrf.mxu0
        %v5036 = vadd.f32 %v5007, %v5035
        %v5037 = vpop.f32.mrf.mxu0
        %v5038 = vadd.f32 %v5009, %v5037
        %5039 = vmatmul.bf16.gmra.mxu0 %v4862
        %v5040 = vpop.f32.mrf.mxu0
        %v5041 = vadd.f32 %v5012, %v5040
        %v5042 = vpop.f32.mrf.mxu0
        %v5043 = vadd.f32 %v5014, %v5042
        %5044 = vdwg.mxu0
        %5045 = vmatpush.bf16.msra.mxu0 0
        %5046 = vmatpush.bf16.msra.mxu0 0
        %5047 = vmatpush.bf16.msra.mxu0 0
        %5048 = vmatpush.bf16.msra.mxu0 0
        %5049 = vmatpush.bf16.msra.mxu0 0
        %5050 = vmatpush.bf16.msra.mxu0 0
        %5051 = vmatpush.bf16.msra.mxu0 %v4956
        %5052 = vmatpush.bf16.msra.mxu0 %v4955
        %5053 = vmatmul.bf16.gmra.mxu0 %v4976
        %v5054 = vpop.f32.mrf.mxu0
        %v5055 = vadd.f32 %v5026, %v5054
        %v5056 = vpop.f32.mrf.mxu0
        %v5057 = vadd.f32 %v5028, %v5056
        %5058 = vmatmul.bf16.gmra.mxu0 %v4979
        %v5059 = vpop.f32.mrf.mxu0
        %v5060 = vadd.f32 %v5031, %v5059
        %v5061 = vpop.f32.mrf.mxu0
        %v5062 = vadd.f32 %v5033, %v5061
        %5063 = vmatmul.bf16.gmra.mxu0 %v4982
        %v5064 = vpop.f32.mrf.mxu0
        %v5065 = vadd.f32 %v5036, %v5064
        %v5066 = vpop.f32.mrf.mxu0
        %v5067 = vadd.f32 %v5038, %v5066
        %5068 = vmatmul.bf16.gmra.mxu0 %v4985
        %v5069 = vpop.f32.mrf.mxu0
        %v5070 = vadd.f32 %v5041, %v5069
        %v5071 = vpop.f32.mrf.mxu0
        %v5072 = vadd.f32 %v5043, %v5071
        %5073 = vdwg.mxu0
        %v5074 = vmax.f32 %v5055, 0.0
        %v5075 = vmax.f32 %v5057, 0.0
        %v5076 = vmax.f32 %v5060, 0.0
        %v5077 = vmax.f32 %v5062, 0.0
        %v5078 = vmax.f32 %v5065, 0.0
        %v5079 = vmax.f32 %v5067, 0.0
        %v5080 = vmax.f32 %v5070, 0.0
        %v5081 = vmax.f32 %v5072, 0.0
        %v5082 = vpack.c.bf16 %v5074, %v5074
        %v5083 = vpack.c.bf16 %v5075, %v5075
        %v5084 = vpack.c.bf16 %v5076, %v5076
        %v5085 = vpack.c.bf16 %v5077, %v5077
        %v5086 = vpack.c.bf16 %v5078, %v5078
        %v5087 = vpack.c.bf16 %v5079, %v5079
        %v5088 = vpack.c.bf16 %v5080, %v5080
        %v5089 = vpack.c.bf16 %v5081, %v5081
        %s5090 = scalar_lea.vmem %s2, 288
        %v5091 = vld [vmem:[%s5090] sm:$0xf]
        %v5092 = vld [vmem:[%s5090 + $0x4] sm:$0xf]
        %v5093 = vld [vmem:[%s5090 + $0x8] sm:$0xf]
        %v5094 = vld [vmem:[%s5090 + $0xc] sm:$0xf]
        %v5095 = vld [vmem:[%s5090 + $0x10] sm:$0xf]
        %v5096 = vld [vmem:[%s5090 + $0x14] sm:$0xf]
        %v5097 = vld [vmem:[%s5090 + $0x18] sm:$0xf]
        %v5098 = vld [vmem:[%s5090 + $0x1c] sm:$0xf]
        %v5099 = vld [vmem:[%s5090 + $0x20] sm:$0xf]
        %v5100 = vld [vmem:[%s5090 + $0x24] sm:$0xf]
        %v5101 = vld [vmem:[%s5090 + $0x28] sm:$0xf]
        %v5102 = vld [vmem:[%s5090 + $0x2c] sm:$0xf]
        %v5103 = vld [vmem:[%s5090 + $0x30] sm:$0xf]
        %v5104 = vld [vmem:[%s5090 + $0x34] sm:$0xf]
        %v5105 = vld [vmem:[%s5090 + $0x38] sm:$0xf]
        %v5106 = vld [vmem:[%s5090 + $0x3c] sm:$0xf]
        %v5107 = vld [vmem:[%s5090 + $0x40] sm:$0xf]
        %v5108 = vld [vmem:[%s5090 + $0x44] sm:$0xf]
        %v5109 = vld [vmem:[%s5090 + $0x48] sm:$0xf]
        %v5110 = vld [vmem:[%s5090 + $0x4c] sm:$0xf]
        %v5111 = vld [vmem:[%s5090 + $0x50] sm:$0xf]
        %v5112 = vld [vmem:[%s5090 + $0x54] sm:$0xf]
        %v5113 = vld [vmem:[%s5090 + $0x58] sm:$0xf]
        %v5114 = vld [vmem:[%s5090 + $0x5c] sm:$0xf]
        %v5115 = vld [vmem:[%s5090 + $0x60] sm:$0xf]
        %v5116 = vld [vmem:[%s5090 + $0x64] sm:$0xf]
        %v5117 = vld [vmem:[%s5090 + $0x68] sm:$0xf]
        %v5118 = vld [vmem:[%s5090 + $0x6c] sm:$0xf]
        %v5119 = vld [vmem:[%s5090 + $0x70] sm:$0xf]
        %v5120 = vld [vmem:[%s5090 + $0x74] sm:$0xf]
        %v5121 = vld [vmem:[%s5090 + $0x78] sm:$0xf]
        %v5122 = vld [vmem:[%s5090 + $0x7c] sm:$0xf]
        %v5123 = vld [vmem:[%s5090 + $0x80] sm:$0xf]
        %v5124 = vld [vmem:[%s5090 + $0x84] sm:$0xf]
        %v5125 = vld [vmem:[%s5090 + $0x88] sm:$0xf]
        %v5126 = vld [vmem:[%s5090 + $0x8c] sm:$0xf]
        %s5127 = scalar_lea.vmem %s3, 3
        %v5128 = vld [vmem:[%s5127] sm:$0x1]
        %v5130 = vshrl.u32 %v5082, 16
        %v5132 = vrot.slane %v5130, 7
        %v5133 = vshll.u32 %v5082, 16
        %v5135 = vor.u32 %v5132, %v5133
        %v5137 = vshrl.u32 %v5083, 16
        %v5139 = vrot.slane %v5137, 7
        %v5140 = vshll.u32 %v5083, 16
        %v5142 = vor.u32 %v5139, %v5140
        %v5144 = vshrl.u32 %v5084, 16
        %v5146 = vrot.slane %v5144, 7
        %v5147 = vshll.u32 %v5084, 16
        %v5149 = vor.u32 %v5146, %v5147
        %v5151 = vshrl.u32 %v5085, 16
        %v5153 = vrot.slane %v5151, 7
        %v5154 = vshll.u32 %v5085, 16
        %v5156 = vor.u32 %v5153, %v5154
        %v5158 = vshrl.u32 %v5086, 16
        %v5160 = vrot.slane %v5158, 7
        %v5161 = vshll.u32 %v5086, 16
        %v5163 = vor.u32 %v5160, %v5161
        %v5165 = vshrl.u32 %v5087, 16
        %v5167 = vrot.slane %v5165, 7
        %v5168 = vshll.u32 %v5087, 16
        %v5170 = vor.u32 %v5167, %v5168
        %v5172 = vshrl.u32 %v5088, 16
        %v5174 = vrot.slane %v5172, 7
        %v5175 = vshll.u32 %v5088, 16
        %v5177 = vor.u32 %v5174, %v5175
        %v5179 = vshrl.u32 %v5089, 16
        %v5181 = vrot.slane %v5179, 7
        %v5182 = vshll.u32 %v5089, 16
        %v5184 = vor.u32 %v5181, %v5182
        %v5193 = vsel %vm635, 0, %v5135
        %v5194 = vsel %vm635, 0, %v5142
        %v5195 = vsel %vm635, 0, %v5149
        %v5196 = vsel %vm635, 0, %v5156
        %v5197 = vsel %vm635, 0, %v5163
        %v5198 = vsel %vm635, 0, %v5170
        %v5199 = vsel %vm635, 0, %v5177
        %v5200 = vsel %vm635, 0, %v5184
        %v5201 = vsel %vm4484, %v5193, 0
        %v5202 = vsel %vm4484, %v5194, 0
        %v5203 = vsel %vm4484, %v5195, 0
        %v5204 = vsel %vm4484, %v5196, 0
        %v5205 = vsel %vm4484, %v5197, 0
        %v5206 = vsel %vm4484, %v5198, 0
        %v5207 = vsel %vm4484, %v5199, 0
        %v5208 = vsel %vm4484, %v5200, 0
        %v5216 = vunpack.c.l.b16 %v5201
        %v5217 = vunpack.c.h.b16 %v5201
        %v5218 = vunpack.c.l.b16 %v5202
        %v5219 = vunpack.c.h.b16 %v5202
        %v5220 = vunpack.c.l.b16 %v5203
        %v5221 = vunpack.c.h.b16 %v5203
        %v5222 = vunpack.c.l.b16 %v5204
        %v5223 = vunpack.c.h.b16 %v5204
        %v5224 = vunpack.c.l.b16 %v5205
        %v5225 = vunpack.c.h.b16 %v5205
        %v5226 = vunpack.c.l.b16 %v5206
        %v5227 = vunpack.c.h.b16 %v5206
        %v5228 = vunpack.c.l.b16 %v5207
        %v5229 = vunpack.c.h.b16 %v5207
        %v5230 = vpack.c.b16 %v5216, %v5216
        %v5231 = vpack.c.b16 %v5217, %v5217
        %v5232 = vpack.c.b16 %v5218, %v5218
        %v5233 = vpack.c.b16 %v5219, %v5219
        %v5234 = vpack.c.b16 %v5220, %v5220
        %v5235 = vpack.c.b16 %v5221, %v5221
        %v5236 = vpack.c.b16 %v5222, %v5222
        %v5237 = vpack.c.b16 %v5223, %v5223
        %v5238 = vpack.c.b16 %v5224, %v5224
        %v5239 = vpack.c.b16 %v5225, %v5225
        %v5240 = vpack.c.b16 %v5226, %v5226
        %v5241 = vpack.c.b16 %v5227, %v5227
        %v5242 = vpack.c.b16 %v5228, %v5228
        %v5243 = vpack.c.b16 %v5229, %v5229
        %v5245 = vshrl.u32 %v5230, 16
        %v5247 = vrot.slane %v5245, 4
        %v5248 = vshll.u32 %v5230, 16
        %v5250 = vrot.slane %v5248, 5
        %v5251 = vor.u32 %v5247, %v5250
        %v5252 = vrot.slane %v5251, 4
        %v5254 = vshll.u32 %v5231, 16
        %v5256 = vrot.slane %v5254, 5
        %v5257 = vsel %vm4536, %v5252, %v5256
        %v5259 = vshrl.u32 %v5232, 16
        %v5261 = vrot.slane %v5259, 4
        %v5262 = vshll.u32 %v5232, 16
        %v5264 = vrot.slane %v5262, 5
        %v5265 = vor.u32 %v5261, %v5264
        %v5266 = vrot.slane %v5265, 4
        %v5268 = vshll.u32 %v5233, 16
        %v5270 = vrot.slane %v5268, 5
        %v5271 = vsel %vm4536, %v5266, %v5270
        %v5273 = vshrl.u32 %v5234, 16
        %v5275 = vrot.slane %v5273, 4
        %v5276 = vshll.u32 %v5234, 16
        %v5278 = vrot.slane %v5276, 5
        %v5279 = vor.u32 %v5275, %v5278
        %v5280 = vrot.slane %v5279, 4
        %v5282 = vshll.u32 %v5235, 16
        %v5284 = vrot.slane %v5282, 5
        %v5285 = vsel %vm4536, %v5280, %v5284
        %v5287 = vshrl.u32 %v5236, 16
        %v5289 = vrot.slane %v5287, 4
        %v5290 = vshll.u32 %v5236, 16
        %v5292 = vrot.slane %v5290, 5
        %v5293 = vor.u32 %v5289, %v5292
        %v5294 = vrot.slane %v5293, 4
        %v5296 = vshll.u32 %v5237, 16
        %v5298 = vrot.slane %v5296, 5
        %v5299 = vsel %vm4536, %v5294, %v5298
        %v5301 = vshrl.u32 %v5238, 16
        %v5303 = vrot.slane %v5301, 4
        %v5304 = vshll.u32 %v5238, 16
        %v5306 = vrot.slane %v5304, 5
        %v5307 = vor.u32 %v5303, %v5306
        %v5308 = vrot.slane %v5307, 4
        %v5310 = vshll.u32 %v5239, 16
        %v5312 = vrot.slane %v5310, 5
        %v5313 = vsel %vm4536, %v5308, %v5312
        %v5315 = vshrl.u32 %v5240, 16
        %v5317 = vrot.slane %v5315, 4
        %v5318 = vshll.u32 %v5240, 16
        %v5320 = vrot.slane %v5318, 5
        %v5321 = vor.u32 %v5317, %v5320
        %v5322 = vrot.slane %v5321, 4
        %v5324 = vshll.u32 %v5241, 16
        %v5326 = vrot.slane %v5324, 5
        %v5327 = vsel %vm4536, %v5322, %v5326
        %v5329 = vshrl.u32 %v5242, 16
        %v5331 = vrot.slane %v5329, 4
        %v5332 = vshll.u32 %v5242, 16
        %v5334 = vrot.slane %v5332, 5
        %v5335 = vor.u32 %v5331, %v5334
        %v5336 = vrot.slane %v5335, 4
        %v5338 = vshll.u32 %v5243, 16
        %v5340 = vrot.slane %v5338, 5
        %v5341 = vsel %vm4536, %v5336, %v5340
        %v5342 = vrot.slane %v5230, 5
        %v5343 = vrot.slane %v5342, 4
        %v5344 = vrot.slane %v5231, 5
        %v5345 = vsel %vm4651, %v5343, %v5344
        %v5346 = vrot.slane %v5232, 5
        %v5347 = vrot.slane %v5346, 4
        %v5348 = vrot.slane %v5233, 5
        %v5349 = vsel %vm4651, %v5347, %v5348
        %v5350 = vrot.slane %v5234, 5
        %v5351 = vrot.slane %v5350, 4
        %v5352 = vrot.slane %v5235, 5
        %v5353 = vsel %vm4651, %v5351, %v5352
        %v5354 = vrot.slane %v5236, 5
        %v5355 = vrot.slane %v5354, 4
        %v5356 = vrot.slane %v5237, 5
        %v5357 = vsel %vm4651, %v5355, %v5356
        %v5358 = vrot.slane %v5238, 5
        %v5359 = vrot.slane %v5358, 4
        %v5360 = vrot.slane %v5239, 5
        %v5361 = vsel %vm4651, %v5359, %v5360
        %v5362 = vrot.slane %v5240, 5
        %v5363 = vrot.slane %v5362, 4
        %v5364 = vrot.slane %v5241, 5
        %v5365 = vsel %vm4651, %v5363, %v5364
        %v5366 = vrot.slane %v5242, 5
        %v5367 = vrot.slane %v5366, 4
        %v5368 = vrot.slane %v5243, 5
        %v5369 = vsel %vm4651, %v5367, %v5368
        %v5371 = vunpack.c.l.b16 %v5208
        %v5372 = vunpack.c.h.b16 %v5208
        %v5373 = vpack.c.b16 %v5371, %v5371
        %v5374 = vpack.c.b16 %v5372, %v5372
        %v5376 = vshrl.u32 %v5373, 16
        %v5378 = vrot.slane %v5376, 4
        %v5379 = vshll.u32 %v5373, 16
        %v5381 = vrot.slane %v5379, 5
        %v5382 = vor.u32 %v5378, %v5381
        %v5383 = vrot.slane %v5382, 4
        %v5385 = vshll.u32 %v5374, 16
        %v5387 = vrot.slane %v5385, 5
        %v5388 = vsel %vm4536, %v5383, %v5387
        %v5389 = vrot.slane %v5373, 5
        %v5390 = vrot.slane %v5389, 4
        %v5391 = vrot.slane %v5374, 5
        %v5392 = vsel %vm4651, %v5390, %v5391
        %v5393 = vpack.c.b16 %v5216, %v4502
        %v5394 = vpack.c.b16 %v5220, %v5218
        %v5395 = vpack.c.b16 %v5224, %v5222
        %v5396 = vpack.c.b16 %v5228, %v5226
        %v5397 = vunpack.c.l.b16 %v5257
        %v5398 = vunpack.c.l.b16 %v5271
        %v5399 = vunpack.c.l.b16 %v5285
        %v5400 = vunpack.c.l.b16 %v5299
        %v5401 = vunpack.c.l.b16 %v5313
        %v5402 = vunpack.c.l.b16 %v5327
        %v5403 = vunpack.c.l.b16 %v5341
        %v5404 = vpack.c.b16 %v5397, %v4711
        %v5405 = vpack.c.b16 %v5399, %v5398
        %v5406 = vpack.c.b16 %v5401, %v5400
        %v5407 = vpack.c.b16 %v5403, %v5402
        %5408 = vrot.lane.b32.xlu0 %v5404, 32
        %v5409 = vpop.permute.xlu0 %5408
        %5410 = vrot.lane.b32.xlu0 %v5405, 32
        %v5411 = vpop.permute.xlu0 %5410
        %5412 = vrot.lane.b32.xlu0 %v5406, 32
        %v5413 = vpop.permute.xlu0 %5412
        %5414 = vrot.lane.b32.xlu0 %v5407, 32
        %v5415 = vpop.permute.xlu0 %5414
        %v5416 = vunpack.c.l.b16 %v5345
        %v5417 = vunpack.c.l.b16 %v5349
        %v5418 = vunpack.c.l.b16 %v5353
        %v5419 = vunpack.c.l.b16 %v5357
        %v5420 = vunpack.c.l.b16 %v5361
        %v5421 = vunpack.c.l.b16 %v5365
        %v5422 = vunpack.c.l.b16 %v5369
        %v5423 = vpack.c.b16 %v5416, %v4731
        %v5424 = vpack.c.b16 %v5418, %v5417
        %v5425 = vpack.c.b16 %v5420, %v5419
        %v5426 = vpack.c.b16 %v5422, %v5421
        %5427 = vrot.lane.b32.xlu0 %v5423, 64
        %v5428 = vpop.permute.xlu0 %5427
        %5429 = vrot.lane.b32.xlu0 %v5424, 64
        %v5430 = vpop.permute.xlu0 %5429
        %5431 = vrot.lane.b32.xlu0 %v5425, 64
        %v5432 = vpop.permute.xlu0 %5431
        %5433 = vrot.lane.b32.xlu0 %v5426, 64
        %v5434 = vpop.permute.xlu0 %5433
        %v5435 = vpack.c.b16 %v5218, %v5216
        %v5436 = vpack.c.b16 %v5222, %v5220
        %v5437 = vpack.c.b16 %v5226, %v5224
        %v5438 = vpack.c.b16 %v5371, %v5228
        %5439 = vrot.lane.b32.xlu0 %v5435, 96
        %v5440 = vpop.permute.xlu0 %5439
        %5441 = vrot.lane.b32.xlu0 %v5436, 96
        %v5442 = vpop.permute.xlu0 %5441
        %5443 = vrot.lane.b32.xlu0 %v5437, 96
        %v5444 = vpop.permute.xlu0 %5443
        %5445 = vrot.lane.b32.xlu0 %v5438, 96
        %v5446 = vpop.permute.xlu0 %5445
        %v5447 = vunpack.c.l.b16 %v5388
        %v5448 = vpack.c.b16 %v5398, %v5397
        %v5449 = vpack.c.b16 %v5400, %v5399
        %v5450 = vpack.c.b16 %v5402, %v5401
        %v5451 = vpack.c.b16 %v5447, %v5403
        %v5452 = vunpack.c.l.b16 %v5392
        %v5453 = vpack.c.b16 %v5417, %v5416
        %v5454 = vpack.c.b16 %v5419, %v5418
        %v5455 = vpack.c.b16 %v5421, %v5420
        %v5456 = vpack.c.b16 %v5452, %v5422
        %5457 = vrot.lane.b32.xlu0 %v5453, 32
        %v5458 = vpop.permute.xlu0 %5457
        %5459 = vrot.lane.b32.xlu0 %v5454, 32
        %v5460 = vpop.permute.xlu0 %5459
        %5461 = vrot.lane.b32.xlu0 %v5455, 32
        %v5462 = vpop.permute.xlu0 %5461
        %5463 = vrot.lane.b32.xlu0 %v5456, 32
        %v5464 = vpop.permute.xlu0 %5463
        %v5465 = vpack.c.b16 %v4502, %v5371
        %5466 = vrot.lane.b32.xlu0 %v5394, 64
        %v5467 = vpop.permute.xlu0 %5466
        %5468 = vrot.lane.b32.xlu0 %v5395, 64
        %v5469 = vpop.permute.xlu0 %5468
        %5470 = vrot.lane.b32.xlu0 %v5396, 64
        %v5471 = vpop.permute.xlu0 %5470
        %5472 = vrot.lane.b32.xlu0 %v5465, 64
        %v5473 = vpop.permute.xlu0 %5472
        %v5474 = vpack.c.b16 %v4711, %v5447
        %5475 = vrot.lane.b32.xlu0 %v5405, 96
        %v5476 = vpop.permute.xlu0 %5475
        %5477 = vrot.lane.b32.xlu0 %v5406, 96
        %v5478 = vpop.permute.xlu0 %5477
        %5479 = vrot.lane.b32.xlu0 %v5407, 96
        %v5480 = vpop.permute.xlu0 %5479
        %5481 = vrot.lane.b32.xlu0 %v5474, 96
        %v5482 = vpop.permute.xlu0 %5481
        %v5483 = vpack.c.b16 %v4731, %v5452
        %v5486 = vsel %vm1316, %v5393, %v5409
        %v5489 = vsel %vm1316, %v5394, %v5411
        %v5492 = vsel %vm1316, %v5395, %v5413
        %v5495 = vsel %vm1316, %v5396, %v5415
        %v5497 = vsel %vm1448, %v5486, %v5428
        %v5499 = vsel %vm1448, %v5489, %v5430
        %v5501 = vsel %vm1448, %v5492, %v5432
        %v5503 = vsel %vm1448, %v5495, %v5434
        %v5505 = vsel %vm2520, %v5497, %v5440
        %v5508 = vsel %vm2520, %v5499, %v5442
        %v5511 = vsel %vm2520, %v5501, %v5444
        %v5514 = vsel %vm2520, %v5503, %v5446
        %v5518 = vsel %vm1316, %v5448, %v5458
        %v5521 = vsel %vm1316, %v5449, %v5460
        %v5524 = vsel %vm1316, %v5450, %v5462
        %v5527 = vsel %vm1316, %v5451, %v5464
        %v5529 = vsel %vm1448, %v5518, %v5467
        %v5531 = vsel %vm1448, %v5521, %v5469
        %v5533 = vsel %vm1448, %v5524, %v5471
        %v5535 = vsel %vm1448, %v5527, %v5473
        %v5537 = vsel %vm2520, %v5529, %v5476
        %v5540 = vsel %vm2520, %v5531, %v5478
        %v5543 = vsel %vm2520, %v5533, %v5480
        %v5546 = vsel %vm2520, %v5535, %v5482
        %v5549 = vperm.slane %v5128, 0
        %v5587 = vunpack.c.l.b16 %v5091
        %v5588 = vunpack.c.l.b16 %v5092
        %v5589 = vunpack.c.l.b16 %v5093
        %v5590 = vunpack.c.l.b16 %v5094
        %v5591 = vunpack.c.l.b16 %v5095
        %v5592 = vunpack.c.l.b16 %v5096
        %v5593 = vunpack.c.l.b16 %v5097
        %v5594 = vunpack.c.l.b16 %v5098
        %v5595 = vunpack.c.l.b16 %v5099
        %v5596 = vunpack.c.l.b16 %v5100
        %v5597 = vunpack.c.l.b16 %v5101
        %v5598 = vunpack.c.l.b16 %v5102
        %v5599 = vunpack.c.l.b16 %v5103
        %v5600 = vunpack.c.l.b16 %v5104
        %v5601 = vunpack.c.l.b16 %v5105
        %v5602 = vunpack.c.l.b16 %v5106
        %v5603 = vunpack.c.l.b16 %v5107
        %v5604 = vunpack.c.l.b16 %v5108
        %v5605 = vunpack.c.l.b16 %v5109
        %v5606 = vunpack.c.l.b16 %v5110
        %v5607 = vunpack.c.l.b16 %v5111
        %v5608 = vunpack.c.l.b16 %v5112
        %v5609 = vunpack.c.l.b16 %v5113
        %v5610 = vunpack.c.l.b16 %v5114
        %v5611 = vunpack.c.l.b16 %v5115
        %v5612 = vunpack.c.l.b16 %v5116
        %v5613 = vunpack.c.l.b16 %v5117
        %v5614 = vunpack.c.l.b16 %v5118
        %v5615 = vunpack.c.l.b16 %v5119
        %v5616 = vunpack.c.l.b16 %v5120
        %v5617 = vunpack.c.l.b16 %v5121
        %v5618 = vunpack.c.l.b16 %v5122
        %v5619 = vunpack.c.l.b16 %v5123
        %v5620 = vunpack.c.l.b16 %v5124
        %v5621 = vunpack.c.l.b16 %v5125
        %v5622 = vunpack.c.l.b16 %v5126
        %v5623 = vpack.c.b16 %v5588, %v5587
        %v5624 = vpack.c.b16 %v5590, %v5589
        %v5625 = vpack.c.b16 %v5592, %v5591
        %v5626 = vpack.c.b16 %v5594, %v5593
        %v5627 = vpack.c.b16 %v5596, %v5595
        %v5628 = vpack.c.b16 %v5598, %v5597
        %v5629 = vpack.c.b16 %v5600, %v5599
        %v5630 = vpack.c.b16 %v5602, %v5601
        %v5631 = vpack.c.b16 %v5604, %v5603
        %v5632 = vpack.c.b16 %v5606, %v5605
        %v5633 = vpack.c.b16 %v5608, %v5607
        %v5634 = vpack.c.b16 %v5610, %v5609
        %v5635 = vpack.c.b16 %v5612, %v5611
        %v5636 = vpack.c.b16 %v5614, %v5613
        %v5637 = vpack.c.b16 %v5616, %v5615
        %v5638 = vpack.c.b16 %v5618, %v5617
        %v5639 = vpack.c.b16 %v5620, %v5619
        %v5640 = vpack.c.b16 %v5622, %v5621
        %v5660 = vsel %vm1316, %v5424, 0
        %v5663 = vsel %vm1316, %v5425, 0
        %v5666 = vsel %vm1316, %v5426, 0
        %v5669 = vsel %vm1316, %v5483, 0
        %5671 = vmatpush.bf16.msra.mxu0 %v5630
        %5672 = vmatpush.bf16.msra.mxu0 %v5629
        %5673 = vmatpush.bf16.msra.mxu0 %v5628
        %5674 = vmatpush.bf16.msra.mxu0 %v5627
        %5675 = vmatpush.bf16.msra.mxu0 %v5626
        %5676 = vmatpush.bf16.msra.mxu0 %v5625
        %5677 = vmatpush.bf16.msra.mxu0 %v5624
        %5678 = vmatpush.bf16.msra.mxu0 %v5623
        %5679 = vmatmul.bf16.gmra.mxu0 %v5505
        %v5680 = vpop.f32.mrf.mxu0
        %v5681 = vadd.f32 %v5549, %v5680
        %v5682 = vpop.f32.mrf.mxu0
        %v5683 = vadd.f32 %v5549, %v5682
        %5684 = vmatmul.bf16.gmra.mxu0 %v5508
        %v5685 = vpop.f32.mrf.mxu0
        %v5686 = vadd.f32 %v5549, %v5685
        %v5687 = vpop.f32.mrf.mxu0
        %v5688 = vadd.f32 %v5549, %v5687
        %5689 = vmatmul.bf16.gmra.mxu0 %v5511
        %v5690 = vpop.f32.mrf.mxu0
        %v5691 = vadd.f32 %v5549, %v5690
        %v5692 = vpop.f32.mrf.mxu0
        %v5693 = vadd.f32 %v5549, %v5692
        %5694 = vmatmul.bf16.gmra.mxu0 %v5514
        %v5695 = vpop.f32.mrf.mxu0
        %v5696 = vadd.f32 %v5549, %v5695
        %v5697 = vpop.f32.mrf.mxu0
        %v5698 = vadd.f32 %v5549, %v5697
        %5699 = vdwg.mxu0
        %5700 = vmatpush.bf16.msra.mxu0 %v5638
        %5701 = vmatpush.bf16.msra.mxu0 %v5637
        %5702 = vmatpush.bf16.msra.mxu0 %v5636
        %5703 = vmatpush.bf16.msra.mxu0 %v5635
        %5704 = vmatpush.bf16.msra.mxu0 %v5634
        %5705 = vmatpush.bf16.msra.mxu0 %v5633
        %5706 = vmatpush.bf16.msra.mxu0 %v5632
        %5707 = vmatpush.bf16.msra.mxu0 %v5631
        %5708 = vmatmul.bf16.gmra.mxu0 %v5537
        %v5709 = vpop.f32.mrf.mxu0
        %v5710 = vadd.f32 %v5681, %v5709
        %v5711 = vpop.f32.mrf.mxu0
        %v5712 = vadd.f32 %v5683, %v5711
        %5713 = vmatmul.bf16.gmra.mxu0 %v5540
        %v5714 = vpop.f32.mrf.mxu0
        %v5715 = vadd.f32 %v5686, %v5714
        %v5716 = vpop.f32.mrf.mxu0
        %v5717 = vadd.f32 %v5688, %v5716
        %5718 = vmatmul.bf16.gmra.mxu0 %v5543
        %v5719 = vpop.f32.mrf.mxu0
        %v5720 = vadd.f32 %v5691, %v5719
        %v5721 = vpop.f32.mrf.mxu0
        %v5722 = vadd.f32 %v5693, %v5721
        %5723 = vmatmul.bf16.gmra.mxu0 %v5546
        %v5724 = vpop.f32.mrf.mxu0
        %v5725 = vadd.f32 %v5696, %v5724
        %v5726 = vpop.f32.mrf.mxu0
        %v5727 = vadd.f32 %v5698, %v5726
        %5728 = vdwg.mxu0
        %5729 = vmatpush.bf16.msra.mxu0 0
        %5730 = vmatpush.bf16.msra.mxu0 0
        %5731 = vmatpush.bf16.msra.mxu0 0
        %5732 = vmatpush.bf16.msra.mxu0 0
        %5733 = vmatpush.bf16.msra.mxu0 0
        %5734 = vmatpush.bf16.msra.mxu0 0
        %5735 = vmatpush.bf16.msra.mxu0 %v5640
        %5736 = vmatpush.bf16.msra.mxu0 %v5639
        %5737 = vmatmul.bf16.gmra.mxu0 %v5660
        %v5738 = vpop.f32.mrf.mxu0
        %v5739 = vadd.f32 %v5710, %v5738
        %v5740 = vpop.f32.mrf.mxu0
        %v5741 = vadd.f32 %v5712, %v5740
        %5742 = vmatmul.bf16.gmra.mxu0 %v5663
        %v5743 = vpop.f32.mrf.mxu0
        %v5744 = vadd.f32 %v5715, %v5743
        %v5745 = vpop.f32.mrf.mxu0
        %v5746 = vadd.f32 %v5717, %v5745
        %5747 = vmatmul.bf16.gmra.mxu0 %v5666
        %v5748 = vpop.f32.mrf.mxu0
        %v5749 = vadd.f32 %v5720, %v5748
        %v5750 = vpop.f32.mrf.mxu0
        %v5751 = vadd.f32 %v5722, %v5750
        %5752 = vmatmul.bf16.gmra.mxu0 %v5669
        %v5753 = vpop.f32.mrf.mxu0
        %v5754 = vadd.f32 %v5725, %v5753
        %v5755 = vpop.f32.mrf.mxu0
        %v5756 = vadd.f32 %v5727, %v5755
        %5757 = vdwg.mxu0
        %v5758 = vmax.f32 %v5739, 0.0
        %v5759 = vmax.f32 %v5741, 0.0
        %v5760 = vmax.f32 %v5744, 0.0
        %v5761 = vmax.f32 %v5746, 0.0
        %v5762 = vmax.f32 %v5749, 0.0
        %v5763 = vmax.f32 %v5751, 0.0
        %v5764 = vmax.f32 %v5754, 0.0
        %v5765 = vmax.f32 %v5756, 0.0
        %v5766 = vpack.c.bf16 %v5758, %v5758
        %v5767 = vpack.c.bf16 %v5759, %v5759
        %v5768 = vpack.c.bf16 %v5760, %v5760
        %v5769 = vpack.c.bf16 %v5761, %v5761
        %v5770 = vpack.c.bf16 %v5762, %v5762
        %v5771 = vpack.c.bf16 %v5763, %v5763
        %v5772 = vpack.c.bf16 %v5764, %v5764
        %v5773 = vpack.c.bf16 %v5765, %v5765
        %v5774 = vunpack.c.l.bf16 %v5766
        %v5775 = vunpack.c.l.bf16 %v5768
        %v5776 = vunpack.c.l.bf16 %v5770
        %v5777 = vunpack.c.l.bf16 %v5772
        %v5778 = vunpack.c.l.bf16 %v5767
        %v5779 = vunpack.c.l.bf16 %v5769
        %v5780 = vunpack.c.l.bf16 %v5771
        %v5781 = vunpack.c.l.bf16 %v5773
        %v5782 = vmax.f32 %v5774, %v5778
        %v5783 = vmax.f32 %v5775, %v5779
        %v5784 = vmax.f32 %v5776, %v5780
        %v5785 = vmax.f32 %v5777, %v5781
        %v5786 = vpack.c.bf16 %v5782, %v5782
        %v5787 = vpack.c.bf16 %v5783, %v5783
        %v5788 = vpack.c.bf16 %v5784, %v5784
        %v5789 = vpack.c.bf16 %v5785, %v5785
        %v5794 = vrot.slane %v5786, 3
        %v5795 = vrot.slane %v5787, 3
        %v5796 = vrot.slane %v5788, 3
        %v5797 = vrot.slane %v5789, 3
        %v5800 = vsel %vm3283, %v5786, %v5794
        %v5801 = vsel %vm3287, %v5786, %v5794
        %v5803 = vrot.slane %v5801, 1
        %v5804 = vsel %vm3291, %v5786, %v5794
        %v5806 = vrot.slane %v5804, 2
        %v5807 = vsel %vm3295, %v5786, %v5794
        %v5809 = vrot.slane %v5807, 3
        %v5812 = vsel %vm3283, %v5787, %v5795
        %v5813 = vsel %vm3287, %v5787, %v5795
        %v5815 = vrot.slane %v5813, 1
        %v5816 = vsel %vm3291, %v5787, %v5795
        %v5818 = vrot.slane %v5816, 2
        %v5819 = vsel %vm3295, %v5787, %v5795
        %v5821 = vrot.slane %v5819, 3
        %v5824 = vsel %vm3283, %v5788, %v5796
        %v5825 = vsel %vm3287, %v5788, %v5796
        %v5827 = vrot.slane %v5825, 1
        %v5828 = vsel %vm3291, %v5788, %v5796
        %v5830 = vrot.slane %v5828, 2
        %v5831 = vsel %vm3295, %v5788, %v5796
        %v5833 = vrot.slane %v5831, 3
        %v5836 = vsel %vm3283, %v5789, %v5797
        %v5837 = vsel %vm3287, %v5789, %v5797
        %v5839 = vrot.slane %v5837, 1
        %v5840 = vsel %vm3291, %v5789, %v5797
        %v5842 = vrot.slane %v5840, 2
        %v5843 = vsel %vm3295, %v5789, %v5797
        %v5845 = vrot.slane %v5843, 3
        %v5862 = vunpack.c.l.bf16 %v5800
        %v5863 = vunpack.c.l.bf16 %v5803
        %v5864 = vunpack.c.l.bf16 %v5806
        %v5865 = vunpack.c.l.bf16 %v5809
        %v5866 = vunpack.c.l.bf16 %v5812
        %v5867 = vunpack.c.l.bf16 %v5815
        %v5868 = vunpack.c.l.bf16 %v5818
        %v5869 = vunpack.c.l.bf16 %v5821
        %v5870 = vunpack.c.l.bf16 %v5824
        %v5871 = vunpack.c.l.bf16 %v5827
        %v5872 = vunpack.c.l.bf16 %v5830
        %v5873 = vunpack.c.l.bf16 %v5833
        %v5874 = vunpack.c.l.bf16 %v5836
        %v5875 = vunpack.c.l.bf16 %v5839
        %v5876 = vunpack.c.l.bf16 %v5842
        %v5877 = vunpack.c.l.bf16 %v5845
        %v5894 = vrot.slane %v5862, 7
        %v5895 = vrot.slane %v5894, 2
        %v5896 = vrot.slane %v5863, 7
        %v5897 = vrot.slane %v5896, 2
        %v5898 = vrot.slane %v5864, 7
        %v5899 = vrot.slane %v5898, 2
        %v5900 = vrot.slane %v5865, 7
        %v5901 = vrot.slane %v5900, 2
        %v5902 = vrot.slane %v5866, 7
        %v5903 = vrot.slane %v5902, 2
        %v5904 = vrot.slane %v5867, 7
        %v5905 = vrot.slane %v5904, 2
        %v5906 = vrot.slane %v5868, 7
        %v5907 = vrot.slane %v5906, 2
        %v5908 = vrot.slane %v5869, 7
        %v5909 = vrot.slane %v5908, 2
        %v5910 = vrot.slane %v5870, 7
        %v5911 = vrot.slane %v5910, 2
        %v5912 = vrot.slane %v5871, 7
        %v5913 = vrot.slane %v5912, 2
        %v5914 = vrot.slane %v5872, 7
        %v5915 = vrot.slane %v5914, 2
        %v5916 = vrot.slane %v5873, 7
        %v5917 = vrot.slane %v5916, 2
        %v5918 = vrot.slane %v5874, 7
        %v5919 = vrot.slane %v5918, 2
        %v5920 = vrot.slane %v5875, 7
        %v5921 = vrot.slane %v5920, 2
        %v5922 = vrot.slane %v5876, 7
        %v5923 = vrot.slane %v5922, 2
        %v5924 = vrot.slane %v5877, 7
        %v5925 = vrot.slane %v5924, 2
        %v5942 = vmax.f32 %v5862, %v5895
        %v5943 = vmax.f32 %v5863, %v5897
        %v5944 = vmax.f32 %v5864, %v5899
        %v5945 = vmax.f32 %v5865, %v5901
        %v5946 = vmax.f32 %v5866, %v5903
        %v5947 = vmax.f32 %v5867, %v5905
        %v5948 = vmax.f32 %v5868, %v5907
        %v5949 = vmax.f32 %v5869, %v5909
        %v5950 = vmax.f32 %v5870, %v5911
        %v5951 = vmax.f32 %v5871, %v5913
        %v5952 = vmax.f32 %v5872, %v5915
        %v5953 = vmax.f32 %v5873, %v5917
        %v5954 = vmax.f32 %v5874, %v5919
        %v5955 = vmax.f32 %v5875, %v5921
        %v5956 = vmax.f32 %v5876, %v5923
        %v5957 = vmax.f32 %v5877, %v5925
        %v5958 = vpack.c.bf16 %v5942, %v5942
        %v5959 = vpack.c.bf16 %v5943, %v5943
        %v5960 = vpack.c.bf16 %v5944, %v5944
        %v5961 = vpack.c.bf16 %v5945, %v5945
        %v5962 = vpack.c.bf16 %v5946, %v5946
        %v5963 = vpack.c.bf16 %v5947, %v5947
        %v5964 = vpack.c.bf16 %v5948, %v5948
        %v5965 = vpack.c.bf16 %v5949, %v5949
        %v5966 = vpack.c.bf16 %v5950, %v5950
        %v5967 = vpack.c.bf16 %v5951, %v5951
        %v5968 = vpack.c.bf16 %v5952, %v5952
        %v5969 = vpack.c.bf16 %v5953, %v5953
        %v5970 = vpack.c.bf16 %v5954, %v5954
        %v5971 = vpack.c.bf16 %v5955, %v5955
        %v5972 = vpack.c.bf16 %v5956, %v5956
        %v5973 = vpack.c.bf16 %v5957, %v5957
        %v5975 = vunpack.c.l.b16 %v5959
        %v5976 = vpack.c.b16 %v5975, %v5975
        %5977 = vrot.lane.b32.xlu0 %v5976, 32
        %v5978 = vpop.permute.xlu0 %5977
        %v5980 = vunpack.c.l.b16 %v5960
        %v5981 = vpack.c.b16 %v5980, %v5980
        %5982 = vrot.lane.b32.xlu0 %v5981, 64
        %v5983 = vpop.permute.xlu0 %5982
        %v5985 = vunpack.c.l.b16 %v5961
        %v5986 = vpack.c.b16 %v5985, %v5985
        %5987 = vrot.lane.b32.xlu0 %v5986, 96
        %v5988 = vpop.permute.xlu0 %5987
        %v5990 = vunpack.c.l.b16 %v5963
        %v5991 = vpack.c.b16 %v5990, %v5990
        %5992 = vrot.lane.b32.xlu0 %v5991, 32
        %v5993 = vpop.permute.xlu0 %5992
        %v5995 = vunpack.c.l.b16 %v5964
        %v5996 = vpack.c.b16 %v5995, %v5995
        %5997 = vrot.lane.b32.xlu0 %v5996, 64
        %v5998 = vpop.permute.xlu0 %5997
        %v6000 = vunpack.c.l.b16 %v5965
        %v6001 = vpack.c.b16 %v6000, %v6000
        %6002 = vrot.lane.b32.xlu0 %v6001, 96
        %v6003 = vpop.permute.xlu0 %6002
        %v6005 = vunpack.c.l.b16 %v5967
        %v6006 = vpack.c.b16 %v6005, %v6005
        %6007 = vrot.lane.b32.xlu0 %v6006, 32
        %v6008 = vpop.permute.xlu0 %6007
        %v6010 = vunpack.c.l.b16 %v5968
        %v6011 = vpack.c.b16 %v6010, %v6010
        %6012 = vrot.lane.b32.xlu0 %v6011, 64
        %v6013 = vpop.permute.xlu0 %6012
        %v6015 = vunpack.c.l.b16 %v5969
        %v6016 = vpack.c.b16 %v6015, %v6015
        %6017 = vrot.lane.b32.xlu0 %v6016, 96
        %v6018 = vpop.permute.xlu0 %6017
        %v6020 = vunpack.c.l.b16 %v5971
        %v6021 = vpack.c.b16 %v6020, %v6020
        %6022 = vrot.lane.b32.xlu0 %v6021, 32
        %v6023 = vpop.permute.xlu0 %6022
        %v6025 = vunpack.c.l.b16 %v5972
        %v6026 = vpack.c.b16 %v6025, %v6025
        %6027 = vrot.lane.b32.xlu0 %v6026, 64
        %v6028 = vpop.permute.xlu0 %6027
        %v6030 = vunpack.c.l.b16 %v5973
        %v6031 = vpack.c.b16 %v6030, %v6030
        %6032 = vrot.lane.b32.xlu0 %v6031, 96
        %v6033 = vpop.permute.xlu0 %6032
        %v6036 = vsel %vm1316, %v5958, %v5978
        %v6038 = vsel %vm1448, %v6036, %v5983
        %v6040 = vsel %vm2520, %v6038, %v5988
        %v6044 = vsel %vm1316, %v5962, %v5993
        %v6046 = vsel %vm1448, %v6044, %v5998
        %v6048 = vsel %vm2520, %v6046, %v6003
        %v6052 = vsel %vm1316, %v5966, %v6008
        %v6054 = vsel %vm1448, %v6052, %v6013
        %v6056 = vsel %vm2520, %v6054, %v6018
        %v6060 = vsel %vm1316, %v5970, %v6023
        %v6062 = vsel %vm1448, %v6060, %v6028
        %v6064 = vsel %vm2520, %v6062, %v6033
        %v6066 = vld [vmem:[%s4] sm:$0xf]
        %v6067 = vld [vmem:[%s4 + $0x4] sm:$0xf]
        %v6068 = vld [vmem:[%s4 + $0x8] sm:$0xf]
        %v6069 = vld [vmem:[%s4 + $0xc] sm:$0xf]
        %v6070 = vld [vmem:[%s4 + $0x10] sm:$0xf]
        %v6071 = vld [vmem:[%s4 + $0x14] sm:$0xf]
        %v6072 = vld [vmem:[%s4 + $0x18] sm:$0xf]
        %v6073 = vld [vmem:[%s4 + $0x1c] sm:$0xf]
        %v6074 = vld [vmem:[%s4 + $0x20] sm:$0xf]
        %v6075 = vld [vmem:[%s4 + $0x24] sm:$0xf]
        %v6076 = vld [vmem:[%s4 + $0x28] sm:$0xf]
        %v6077 = vld [vmem:[%s4 + $0x2c] sm:$0xf]
        %v6078 = vld [vmem:[%s4 + $0x30] sm:$0xf]
        %v6079 = vld [vmem:[%s4 + $0x34] sm:$0xf]
        %v6080 = vld [vmem:[%s4 + $0x38] sm:$0xf]
        %v6081 = vld [vmem:[%s4 + $0x3c] sm:$0xf]
        %v6082 = vld [vmem:[%s4 + $0x40] sm:$0xf]
        %v6083 = vld [vmem:[%s4 + $0x44] sm:$0xf]
        %v6084 = vld [vmem:[%s4 + $0x48] sm:$0xf]
        %v6085 = vld [vmem:[%s4 + $0x4c] sm:$0xf]
        %v6086 = vld [vmem:[%s4 + $0x50] sm:$0xf]
        %v6087 = vld [vmem:[%s4 + $0x54] sm:$0xf]
        %v6088 = vld [vmem:[%s4 + $0x58] sm:$0xf]
        %v6089 = vld [vmem:[%s4 + $0x5c] sm:$0xf]
        %v6090 = vld [vmem:[%s4 + $0x60] sm:$0xf]
        %v6091 = vld [vmem:[%s4 + $0x64] sm:$0xf]
        %v6092 = vld [vmem:[%s4 + $0x68] sm:$0xf]
        %v6093 = vld [vmem:[%s4 + $0x6c] sm:$0xf]
        %v6094 = vld [vmem:[%s4 + $0x70] sm:$0xf]
        %v6095 = vld [vmem:[%s4 + $0x74] sm:$0xf]
        %v6096 = vld [vmem:[%s4 + $0x78] sm:$0xf]
        %v6097 = vld [vmem:[%s4 + $0x7c] sm:$0xf]
        %v6098 = vld [vmem:[%s4 + $0x80] sm:$0xf]
        %v6099 = vld [vmem:[%s4 + $0x84] sm:$0xf]
        %v6100 = vld [vmem:[%s4 + $0x88] sm:$0xf]
        %v6101 = vld [vmem:[%s4 + $0x8c] sm:$0xf]
        %v6102 = vld [vmem:[%s4 + $0x90] sm:$0xf]
        %v6103 = vld [vmem:[%s4 + $0x94] sm:$0xf]
        %v6104 = vld [vmem:[%s4 + $0x98] sm:$0xf]
        %v6105 = vld [vmem:[%s4 + $0x9c] sm:$0xf]
        %v6106 = vld [vmem:[%s4 + $0xa0] sm:$0xf]
        %v6107 = vld [vmem:[%s4 + $0xa4] sm:$0xf]
        %v6108 = vld [vmem:[%s4 + $0xa8] sm:$0xf]
        %v6109 = vld [vmem:[%s4 + $0xac] sm:$0xf]
        %v6110 = vld [vmem:[%s4 + $0xb0] sm:$0xf]
        %v6111 = vld [vmem:[%s4 + $0xb4] sm:$0xf]
        %v6112 = vld [vmem:[%s4 + $0xb8] sm:$0xf]
        %v6113 = vld [vmem:[%s4 + $0xbc] sm:$0xf]
        %v6114 = vld [vmem:[%s4 + $0xc0] sm:$0xf]
        %v6115 = vld [vmem:[%s4 + $0xc4] sm:$0xf]
        %v6116 = vld [vmem:[%s4 + $0xc8] sm:$0xf]
        %v6117 = vld [vmem:[%s4 + $0xcc] sm:$0xf]
        %v6118 = vld [vmem:[%s4 + $0xd0] sm:$0xf]
        %v6119 = vld [vmem:[%s4 + $0xd4] sm:$0xf]
        %v6120 = vld [vmem:[%s4 + $0xd8] sm:$0xf]
        %v6121 = vld [vmem:[%s4 + $0xdc] sm:$0xf]
        %v6122 = vld [vmem:[%s4 + $0xe0] sm:$0xf]
        %v6123 = vld [vmem:[%s4 + $0xe4] sm:$0xf]
        %v6124 = vld [vmem:[%s4 + $0xe8] sm:$0xf]
        %v6125 = vld [vmem:[%s4 + $0xec] sm:$0xf]
        %v6126 = vld [vmem:[%s4 + $0xf0] sm:$0xf]
        %v6127 = vld [vmem:[%s4 + $0xf4] sm:$0xf]
        %v6128 = vld [vmem:[%s4 + $0xf8] sm:$0xf]
        %v6129 = vld [vmem:[%s4 + $0xfc] sm:$0xf]
        %v6130 = vld [vmem:[%s5] sm:$0x1]
        %v6195 = vunpack.c.l.b16 %v6066
        %v6196 = vunpack.c.l.b16 %v6067
        %v6197 = vunpack.c.l.b16 %v6068
        %v6198 = vunpack.c.l.b16 %v6069
        %v6199 = vunpack.c.l.b16 %v6070
        %v6200 = vunpack.c.l.b16 %v6071
        %v6201 = vunpack.c.l.b16 %v6072
        %v6202 = vunpack.c.l.b16 %v6073
        %v6203 = vunpack.c.l.b16 %v6074
        %v6204 = vunpack.c.l.b16 %v6075
        %v6205 = vunpack.c.l.b16 %v6076
        %v6206 = vunpack.c.l.b16 %v6077
        %v6207 = vunpack.c.l.b16 %v6078
        %v6208 = vunpack.c.l.b16 %v6079
        %v6209 = vunpack.c.l.b16 %v6080
        %v6210 = vunpack.c.l.b16 %v6081
        %v6211 = vunpack.c.l.b16 %v6082
        %v6212 = vunpack.c.l.b16 %v6083
        %v6213 = vunpack.c.l.b16 %v6084
        %v6214 = vunpack.c.l.b16 %v6085
        %v6215 = vunpack.c.l.b16 %v6086
        %v6216 = vunpack.c.l.b16 %v6087
        %v6217 = vunpack.c.l.b16 %v6088
        %v6218 = vunpack.c.l.b16 %v6089
        %v6219 = vunpack.c.l.b16 %v6090
        %v6220 = vunpack.c.l.b16 %v6091
        %v6221 = vunpack.c.l.b16 %v6092
        %v6222 = vunpack.c.l.b16 %v6093
        %v6223 = vunpack.c.l.b16 %v6094
        %v6224 = vunpack.c.l.b16 %v6095
        %v6225 = vunpack.c.l.b16 %v6096
        %v6226 = vunpack.c.l.b16 %v6097
        %v6227 = vunpack.c.l.b16 %v6098
        %v6228 = vunpack.c.l.b16 %v6099
        %v6229 = vunpack.c.l.b16 %v6100
        %v6230 = vunpack.c.l.b16 %v6101
        %v6231 = vunpack.c.l.b16 %v6102
        %v6232 = vunpack.c.l.b16 %v6103
        %v6233 = vunpack.c.l.b16 %v6104
        %v6234 = vunpack.c.l.b16 %v6105
        %v6235 = vunpack.c.l.b16 %v6106
        %v6236 = vunpack.c.l.b16 %v6107
        %v6237 = vunpack.c.l.b16 %v6108
        %v6238 = vunpack.c.l.b16 %v6109
        %v6239 = vunpack.c.l.b16 %v6110
        %v6240 = vunpack.c.l.b16 %v6111
        %v6241 = vunpack.c.l.b16 %v6112
        %v6242 = vunpack.c.l.b16 %v6113
        %v6243 = vunpack.c.l.b16 %v6114
        %v6244 = vunpack.c.l.b16 %v6115
        %v6245 = vunpack.c.l.b16 %v6116
        %v6246 = vunpack.c.l.b16 %v6117
        %v6247 = vunpack.c.l.b16 %v6118
        %v6248 = vunpack.c.l.b16 %v6119
        %v6249 = vunpack.c.l.b16 %v6120
        %v6250 = vunpack.c.l.b16 %v6121
        %v6251 = vunpack.c.l.b16 %v6122
        %v6252 = vunpack.c.l.b16 %v6123
        %v6253 = vunpack.c.l.b16 %v6124
        %v6254 = vunpack.c.l.b16 %v6125
        %v6255 = vunpack.c.l.b16 %v6126
        %v6256 = vunpack.c.l.b16 %v6127
        %v6257 = vunpack.c.l.b16 %v6128
        %v6258 = vunpack.c.l.b16 %v6129
        %v6259 = vpack.c.b16 %v6196, %v6195
        %v6260 = vpack.c.b16 %v6198, %v6197
        %v6261 = vpack.c.b16 %v6200, %v6199
        %v6262 = vpack.c.b16 %v6202, %v6201
        %v6263 = vpack.c.b16 %v6204, %v6203
        %v6264 = vpack.c.b16 %v6206, %v6205
        %v6265 = vpack.c.b16 %v6208, %v6207
        %v6266 = vpack.c.b16 %v6210, %v6209
        %v6267 = vpack.c.b16 %v6212, %v6211
        %v6268 = vpack.c.b16 %v6214, %v6213
        %v6269 = vpack.c.b16 %v6216, %v6215
        %v6270 = vpack.c.b16 %v6218, %v6217
        %v6271 = vpack.c.b16 %v6220, %v6219
        %v6272 = vpack.c.b16 %v6222, %v6221
        %v6273 = vpack.c.b16 %v6224, %v6223
        %v6274 = vpack.c.b16 %v6226, %v6225
        %v6275 = vpack.c.b16 %v6228, %v6227
        %v6276 = vpack.c.b16 %v6230, %v6229
        %v6277 = vpack.c.b16 %v6232, %v6231
        %v6278 = vpack.c.b16 %v6234, %v6233
        %v6279 = vpack.c.b16 %v6236, %v6235
        %v6280 = vpack.c.b16 %v6238, %v6237
        %v6281 = vpack.c.b16 %v6240, %v6239
        %v6282 = vpack.c.b16 %v6242, %v6241
        %v6283 = vpack.c.b16 %v6244, %v6243
        %v6284 = vpack.c.b16 %v6246, %v6245
        %v6285 = vpack.c.b16 %v6248, %v6247
        %v6286 = vpack.c.b16 %v6250, %v6249
        %v6287 = vpack.c.b16 %v6252, %v6251
        %v6288 = vpack.c.b16 %v6254, %v6253
        %v6289 = vpack.c.b16 %v6256, %v6255
        %v6290 = vpack.c.b16 %v6258, %v6257
        %6323 = vmatpush.bf16.msra.mxu0 %v6266
        %6324 = vmatpush.bf16.msra.mxu0 %v6265
        %6325 = vmatpush.bf16.msra.mxu0 %v6264
        %6326 = vmatpush.bf16.msra.mxu0 %v6263
        %6327 = vmatpush.bf16.msra.mxu0 %v6262
        %6328 = vmatpush.bf16.msra.mxu0 %v6261
        %6329 = vmatpush.bf16.msra.mxu0 %v6260
        %6330 = vmatpush.bf16.msra.mxu0 %v6259
        %6331 = vmatmul.bf16.gmra.mxu0 %v6040
        %v6332 = vpop.f32.mrf.mxu0
        %v6333 = vadd.f32 %v6130, %v6332
        %v6334 = vpop.f32.mrf.mxu0
        %6335 = vdwg.mxu0
        %6336 = vmatpush.bf16.msra.mxu0 %v6274
        %6337 = vmatpush.bf16.msra.mxu0 %v6273
        %6338 = vmatpush.bf16.msra.mxu0 %v6272
        %6339 = vmatpush.bf16.msra.mxu0 %v6271
        %6340 = vmatpush.bf16.msra.mxu0 %v6270
        %6341 = vmatpush.bf16.msra.mxu0 %v6269
        %6342 = vmatpush.bf16.msra.mxu0 %v6268
        %6343 = vmatpush.bf16.msra.mxu0 %v6267
        %6344 = vmatmul.bf16.gmra.mxu0 %v6048
        %v6345 = vpop.f32.mrf.mxu0
        %v6346 = vadd.f32 %v6333, %v6345
        %v6347 = vpop.f32.mrf.mxu0
        %6348 = vdwg.mxu0
        %6349 = vmatpush.bf16.msra.mxu0 %v6282
        %6350 = vmatpush.bf16.msra.mxu0 %v6281
        %6351 = vmatpush.bf16.msra.mxu0 %v6280
        %6352 = vmatpush.bf16.msra.mxu0 %v6279
        %6353 = vmatpush.bf16.msra.mxu0 %v6278
        %6354 = vmatpush.bf16.msra.mxu0 %v6277
        %6355 = vmatpush.bf16.msra.mxu0 %v6276
        %6356 = vmatpush.bf16.msra.mxu0 %v6275
        %6357 = vmatmul.bf16.gmra.mxu0 %v6056
        %v6358 = vpop.f32.mrf.mxu0
        %v6359 = vadd.f32 %v6346, %v6358
        %v6360 = vpop.f32.mrf.mxu0
        %6361 = vdwg.mxu0
        %6362 = vmatpush.bf16.msra.mxu0 %v6290
        %6363 = vmatpush.bf16.msra.mxu0 %v6289
        %6364 = vmatpush.bf16.msra.mxu0 %v6288
        %6365 = vmatpush.bf16.msra.mxu0 %v6287
        %6366 = vmatpush.bf16.msra.mxu0 %v6286
        %6367 = vmatpush.bf16.msra.mxu0 %v6285
        %6368 = vmatpush.bf16.msra.mxu0 %v6284
        %6369 = vmatpush.bf16.msra.mxu0 %v6283
        %6370 = vmatmul.bf16.gmra.mxu0 %v6064
        %v6371 = vpop.f32.mrf.mxu0
        %v6372 = vadd.f32 %v6359, %v6371
        %v6373 = vpop.f32.mrf.mxu0
        %6374 = vdwg.mxu0
        %v6375 = vmax.f32 %v6372, 0.0
        %v6376 = vpack.c.bf16 %v6375, %v6375
        %v6377 = vld [vmem:[%s6] sm:$0xf]
        %v6378 = vld [vmem:[%s6 + $0x4] sm:$0xf]
        %v6379 = vld [vmem:[%s6 + $0x8] sm:$0xf]
        %v6380 = vld [vmem:[%s6 + $0xc] sm:$0xf]
        %v6381 = vld [vmem:[%s6 + $0x10] sm:$0xf]
        %v6382 = vld [vmem:[%s6 + $0x14] sm:$0xf]
        %v6383 = vld [vmem:[%s6 + $0x18] sm:$0xf]
        %v6384 = vld [vmem:[%s6 + $0x1c] sm:$0xf]
        %v6385 = vld [vmem:[%s6 + $0x20] sm:$0xf]
        %v6386 = vld [vmem:[%s6 + $0x24] sm:$0xf]
        %v6387 = vld [vmem:[%s6 + $0x28] sm:$0xf]
        %v6388 = vld [vmem:[%s6 + $0x2c] sm:$0xf]
        %v6389 = vld [vmem:[%s6 + $0x30] sm:$0xf]
        %v6390 = vld [vmem:[%s6 + $0x34] sm:$0xf]
        %v6391 = vld [vmem:[%s6 + $0x38] sm:$0xf]
        %v6392 = vld [vmem:[%s6 + $0x3c] sm:$0xf]
        %v6393 = vld [vmem:[%s7] sm:$0x1]
        %v6410 = vunpack.c.l.b16 %v6377
        %v6411 = vunpack.c.l.b16 %v6378
        %v6412 = vunpack.c.l.b16 %v6379
        %v6413 = vunpack.c.l.b16 %v6380
        %v6414 = vunpack.c.l.b16 %v6381
        %v6415 = vunpack.c.l.b16 %v6382
        %v6416 = vunpack.c.l.b16 %v6383
        %v6417 = vunpack.c.l.b16 %v6384
        %v6418 = vunpack.c.l.b16 %v6385
        %v6419 = vunpack.c.l.b16 %v6386
        %v6420 = vunpack.c.l.b16 %v6387
        %v6421 = vunpack.c.l.b16 %v6388
        %v6422 = vunpack.c.l.b16 %v6389
        %v6423 = vunpack.c.l.b16 %v6390
        %v6424 = vunpack.c.l.b16 %v6391
        %v6425 = vunpack.c.l.b16 %v6392
        %v6426 = vpack.c.b16 %v6411, %v6410
        %v6427 = vpack.c.b16 %v6413, %v6412
        %v6428 = vpack.c.b16 %v6415, %v6414
        %v6429 = vpack.c.b16 %v6417, %v6416
        %v6430 = vpack.c.b16 %v6419, %v6418
        %v6431 = vpack.c.b16 %v6421, %v6420
        %v6432 = vpack.c.b16 %v6423, %v6422
        %v6433 = vpack.c.b16 %v6425, %v6424
        %6442 = vmatpush.bf16.msra.mxu0 %v6433
        %6443 = vmatpush.bf16.msra.mxu0 %v6432
        %6444 = vmatpush.bf16.msra.mxu0 %v6431
        %6445 = vmatpush.bf16.msra.mxu0 %v6430
        %6446 = vmatpush.bf16.msra.mxu0 %v6429
        %6447 = vmatpush.bf16.msra.mxu0 %v6428
        %6448 = vmatpush.bf16.msra.mxu0 %v6427
        %6449 = vmatpush.bf16.msra.mxu0 %v6426
        %6450 = vmatmul.bf16.gmra.mxu0 %v6376
        %v6451 = vpop.f32.mrf.mxu0
        %v6452 = vadd.f32 %v6393, %v6451
        %v6453 = vpop.f32.mrf.mxu0
        %6454 = vdwg.mxu0
        %v6455 = vmax.f32 %v6452, 0.0
        %v6456 = vpack.c.bf16 %v6455, %v6455
        %v6457 = vld [vmem:[%s8] sm:$0xf]
        %v6458 = vld [vmem:[%s8 + $0x4] sm:$0xf]
        %v6459 = vld [vmem:[%s8 + $0x8] sm:$0xf]
        %v6460 = vld [vmem:[%s8 + $0xc] sm:$0xf]
        %v6461 = vld [vmem:[%s8 + $0x10] sm:$0xf]
        %v6462 = vld [vmem:[%s8 + $0x14] sm:$0xf]
        %v6463 = vld [vmem:[%s8 + $0x18] sm:$0xf]
        %v6464 = vld [vmem:[%s8 + $0x1c] sm:$0xf]
        %v6465 = vld [vmem:[%s9] sm:$0x1]
        %v6474 = vunpack.c.l.b16 %v6457
        %v6475 = vunpack.c.l.b16 %v6458
        %v6476 = vunpack.c.l.b16 %v6459
        %v6477 = vunpack.c.l.b16 %v6460
        %v6478 = vunpack.c.l.b16 %v6461
        %v6479 = vunpack.c.l.b16 %v6462
        %v6480 = vunpack.c.l.b16 %v6463
        %v6481 = vunpack.c.l.b16 %v6464
        %v6482 = vpack.c.b16 %v6475, %v6474
        %v6483 = vpack.c.b16 %v6477, %v6476
        %v6484 = vpack.c.b16 %v6479, %v6478
        %v6485 = vpack.c.b16 %v6481, %v6480
        %v6491 = vsel %vm1448, %v6456, 0
        %6493 = vmatpush.bf16.msra.mxu0 0
        %6494 = vmatpush.bf16.msra.mxu0 0
        %6495 = vmatpush.bf16.msra.mxu0 0
        %6496 = vmatpush.bf16.msra.mxu0 0
        %6497 = vmatpush.bf16.msra.mxu0 %v6485
        %6498 = vmatpush.bf16.msra.mxu0 %v6484
        %6499 = vmatpush.bf16.msra.mxu0 %v6483
        %6500 = vmatpush.bf16.msra.mxu0 %v6482
        %6501 = vmatmul.bf16.gmra.mxu0 %v6491
        %v6502 = vpop.f32.mrf.mxu0
        %v6503 = vadd.f32 %v6465, %v6502
        %v6504 = vpop.f32.mrf.mxu0
        %6505 = vdwg.mxu0
        %vm6506 = vcmask 16384
        %6507 = vst.msk [vmem:[%s351] sm:$0x1] %vm6506, %v6503
        %s6508 = sand.u32 %s247, 1
        %s6509 = scalar_lea.sflag [#allocation3], %s6508
        %s6510 = sand.u32 %s247, 1
        %s6511 = scalar_lea.vmem [#allocation2], %s6510
        // Predicated region
        $region61: #{alzheimer_cnn_forward.1} parent=59 // pred_check
          %p6512 = pneg %p257
        $region62: #{alzheimer_cnn_forward.1} parent=59 // pred_check_branch
          %6514 = sbr.rel (%p6512) target = $region64
        $region63: #{alzheimer_cnn_forward.1} parent=59 // pred_region
          %6516 = vsyncadd %s6509, 0
          %s6517 = scalar_lea.hbm %s10, %s24
          %s6519 = sshll.u32 %s6511, 4
          %s6520 = int_to_ptr.vmem [resolvable:$true] %s6519
          %s6521 = sshll.u32 %s6517, 4
          %s6522 = int_to_ptr.hbm [resolvable:$true] %s6521
          %6524 = dma.vmem_to_hbm [thread:$0]  %s6520, 16, %s6522, %s6509
        $region64: #{alzheimer_cnn_forward.1} parent=59 // pred_fallthru
          _
      $region60: #{alzheimer_cnn_forward.1} parent=5 // pred_fallthru
        _
      %p6525 = scmp.le.s32.totalorder 2, %s19
      // Predicated region
      $region65: #{alzheimer_cnn_forward.1} parent=5 // pred_check
        %p6526 = pneg %p6525
      $region66: #{alzheimer_cnn_forward.1} parent=5 // pred_check_branch
        %6528 = sbr.rel (%p6526) target = $region68
      $region67: #{alzheimer_cnn_forward.1} parent=5 // pred_region
        %s6529 = ssub.s32 %s19, 2
        // Predicated region
        $region69: #{alzheimer_cnn_forward.1} parent=67 // pred_check
          %p6530 = pneg %p263
        $region70: #{alzheimer_cnn_forward.1} parent=67 // pred_check_branch
          %6532 = sbr.rel (%p6530) target = $region72
        $region71: #{alzheimer_cnn_forward.1} parent=67 // pred_region
          %s6533 = sand.u32 %s248, 1
          %s6534 = scalar_lea.sflag [#allocation3], %s6533
          %s6535 = sand.u32 %s248, 1
          %s6536 = scalar_lea.vmem [#allocation2], %s6535
          %6538 = dma.done %s6534, 16
        $region72: #{alzheimer_cnn_forward.1} parent=67 // pred_fallthru
          _
      $region68: #{alzheimer_cnn_forward.1} parent=5 // pred_fallthru
        _
    $region6: #{alzheimer_cnn_forward.1} parent=1 // loop_footer
      %s23 = sadd.s32 1, %s19
    $region7: #{alzheimer_cnn_forward.1} parent=1 // loop_footer_branch
      %18 = sbr.rel target = $region3
    $region8: #{alzheimer_cnn_forward.1} parent=1 // loop_exit
      _
    %6539 = vsyncpa [#allocation3], 1
    %s6540 = scalar_lea.sflag [#allocation3], 1
    %6541 = vsyncpa %s6540, 1

</llo_original>
